<compile_context>
chip_gen: v7x
topology: tpu7x:2x2x1
jax: 0.10.0
libtpu: 0.0.40
codegen_flags: <defaults>
</compile_context>

<pallas_src>
import functools

import jax
import jax.numpy as jnp
from jax.experimental import pallas as pl
from jax.experimental.pallas import tpu as pltpu


# ----------------------------------------------------------------------------
# In-kernel building blocks (traced inside the single fused kernel)
# ----------------------------------------------------------------------------
def _conv_bn_relu(x, pad_ref, w_ref, scale_ref, shift_ref, *, K, pad):
    """Conv1d(bias=False, stride=1) + BatchNorm(eval) + ReLU via im2col matmul.

    x:         (L_in, C_in) f32 value (time on sublanes, channels on lanes)
    pad_ref:   VMEM scratch (R, C_in), R >= L_in + 2*pad (zero-padding buffer)
    w_ref:     (K*C_in, C_out) im2col weight, w[k*C_in + c, o] = w_torch[o, c, k]
    scale_ref: (1, C_out)   gamma / sqrt(running_var + eps)
    shift_ref: (1, C_out)   beta - running_mean * scale
    returns    (L_out, C_out) f32 value
    """
    L_in, C_in = x.shape
    L_out = L_in + 2 * pad - K + 1
    assert pad_ref.shape[0] >= L_in + 2 * pad and pad_ref.shape[1] == C_in
    pad_ref[...] = jnp.zeros(pad_ref.shape, jnp.float32)
    pad_ref[pl.ds(pad, L_in), :] = x
    # im2col: one (L_out, K*C_in) slab -> a single deep-K MXU matmul.
    xcol = jnp.concatenate(
        [pad_ref[pl.ds(k, L_out), :] for k in range(K)], axis=1)
    y = jnp.dot(xcol, w_ref[...], preferred_element_type=jnp.float32)
    y = y * scale_ref[...] + shift_ref[...]          # BatchNorm (eval mode)
    return jnp.maximum(y, 0.0)                       # ReLU


def _maxpool(y, pool_ref, *, Kp, pad):
    """MaxPool1d(kernel=stride=Kp, padding=pad), torch semantics (-inf pad).

    y:        (L, C) f32 value
    pool_ref: VMEM scratch (R, C) with R >= max(pad + L, Kp * L_out)
    returns   (L_out, C) f32 value
    """
    L, C = y.shape
    L_out = (L + 2 * pad - Kp) // Kp + 1
    assert pool_ref.shape[0] >= max(pad + L, Kp * L_out)
    assert pool_ref.shape[1] == C
    pool_ref[...] = jnp.full(pool_ref.shape, -jnp.inf, jnp.float32)
    pool_ref[pl.ds(pad, L), :] = y
    out = pool_ref[pl.ds(0, L_out, stride=Kp), :]
    for w in range(1, Kp):
        out = jnp.maximum(out, pool_ref[pl.ds(w, L_out, stride=Kp), :])
    return out


# ----------------------------------------------------------------------------
# The fused kernel: one grid step == one batch element
# ----------------------------------------------------------------------------
def _eeg_m_fused_kernel(x_ref, w1_ref, s1_ref, b1_ref,
                        w2_ref, s2_ref, b2_ref,
                        w3_ref, s3_ref, b3_ref,
                        wh_ref, bh_ref,
                        feat_ref, logits_ref,
                        pad1_ref, pool1_ref, pad2_ref, pool2_ref,
                        pad3_ref, pool3_ref, *, K1, pad1):
    # Block 1: Conv(C_in->32, K1, pad=K1//2) + BN + ReLU + MaxPool(2,2,p=1)
    y1 = _conv_bn_relu(x_ref[0], pad1_ref, w1_ref, s1_ref, b1_ref,
                       K=K1, pad=pad1)
    p1 = _maxpool(y1, pool1_ref, Kp=2, pad=1)
    # Dropout: identity in eval mode.

    # Block 2: Conv(32->64, 8, p=4) + BN + ReLU + MaxPool(3,3,p=1)
    y2 = _conv_bn_relu(p1, pad2_ref, w2_ref, s2_ref, b2_ref, K=8, pad=4)
    p2 = _maxpool(y2, pool2_ref, Kp=3, pad=1)

    # Block 3: Conv(64->red, 8, p=4) + BN + ReLU + MaxPool(3,3,p=1)
    y3 = _conv_bn_relu(p2, pad3_ref, w3_ref, s3_ref, b3_ref, K=8, pad=4)
    p3 = _maxpool(y3, pool3_ref, Kp=3, pad=1)        # (T=22, red) time-major

    feat_ref[0] = p3                                 # lane-dense (T, 128) store

    # Logits head: single matmul against the time-blocked weight, then sum the
    # per-timestep (1, ncls) diagonal blocks (weight pre-permuted at init).
    T = feat_ref.shape[1]
    ncls = logits_ref.shape[2]
    ph = jnp.dot(p3, wh_ref[...], preferred_element_type=jnp.float32)  # (T, T*ncls)
    acc = bh_ref[...]                                # (1, ncls)
    for t in range(T):
        acc = acc + ph[t:t + 1, t * ncls:(t + 1) * ncls]
    logits_ref[0] = acc


# ----------------------------------------------------------------------------
# Forward pass (== EEG_M.forward, non-self-supervised branch)
# ----------------------------------------------------------------------------
def eeg_m_forward(params, x_ncl, cfg):
    N, C_in, L0 = x_ncl.shape
    assert C_in == cfg["input_channels"]
    assert cfg["stride"] == 1  # TODO(synk): stride > 1 not supported by the im2col path
    K1 = cfg["kernel_size"]
    pad1 = K1 // 2
    red = cfg["reduced_cnn_size"]
    ncls = cfg["num_classes"]

    # Static length chain (must end at model_output_dim == 22, as in EEG_M).
    L1 = L0 + 2 * pad1 - K1 + 1
    P1 = (L1 + 2 * 1 - 2) // 2 + 1
    L2 = P1 + 2 * 4 - 8 + 1
    P2 = (L2 + 2 * 1 - 3) // 3 + 1
    L3 = P2 + 2 * 4 - 8 + 1
    P3 = (L3 + 2 * 1 - 3) // 3 + 1
    assert P3 == 22, P3  # model_output_dim hard-coded to 22 in EEG_M

    def r8(v):
        return ((v + 7) // 8) * 8

    # PyTorch NCL -> time-major NLC (channels on the 128-lane axis).
    x_nlc = jnp.transpose(x_ncl, (0, 2, 1)).astype(jnp.float32)

    def _const_spec(arr):
        zeros = (0,) * arr.ndim
        return pl.BlockSpec(arr.shape, lambda n: zeros)

    weight_args = (params["w1"], params["scale1"], params["shift1"],
                   params["w2"], params["scale2"], params["shift2"],
                   params["w3"], params["scale3"], params["shift3"],
                   params["w_head"], params["b_head"])

    in_specs = [pl.BlockSpec((1, L0, C_in), lambda n: (n, 0, 0))]
    in_specs += [_const_spec(a) for a in weight_args]

    scratch_shapes = [
        pltpu.VMEM((r8(L0 + 2 * pad1), C_in), jnp.float32),        # conv1 zero-pad
        pltpu.VMEM((r8(max(1 + L1, 2 * P1)), 32), jnp.float32),    # pool1 (-inf pad)
        pltpu.VMEM((r8(P1 + 8), 32), jnp.float32),                 # conv2 zero-pad
        pltpu.VMEM((r8(max(1 + L2, 3 * P2)), 64), jnp.float32),    # pool2
        pltpu.VMEM((r8(P2 + 8), 64), jnp.float32),                 # conv3 zero-pad
        pltpu.VMEM((r8(max(1 + L3, 3 * P3)), red), jnp.float32),   # pool3
    ]

    kernel = functools.partial(_eeg_m_fused_kernel, K1=K1, pad1=pad1)
    feat_t, logits_raw = pl.pallas_call(
        kernel,
        out_shape=(jax.ShapeDtypeStruct((N, P3, red), jnp.float32),
                   jax.ShapeDtypeStruct((N, 1, ncls), jnp.float32)),
        grid=(N,),
        in_specs=in_specs,
        out_specs=(pl.BlockSpec((1, P3, red), lambda n: (n, 0, 0)),
                   pl.BlockSpec((1, 1, ncls), lambda n: (n, 0, 0))),
        scratch_shapes=scratch_shapes,
        compiler_params=pltpu.CompilerParams(
            dimension_semantics=("parallel",)),
    )(x_nlc, *weight_args)

    # full_features in torch layout (N, C, L); flatten matches .view(B, -1).
    full_features = jnp.transpose(feat_t, (0, 2, 1))
    vec_features = full_features.reshape(N, -1)
    logits = logits_raw.reshape(N, ncls)
    return logits, vec_features


# ----------------------------------------------------------------------------
# Parameter init (deterministic, synthetic, already in kernel-friendly layout)
# ----------------------------------------------------------------------------
def _bn_affine(key, c, eps=1e-5):
    k1, k2, k3, k4 = jax.random.split(key, 4)
    gamma = 1.0 + 0.1 * jax.random.normal(k1, (c,), jnp.float32)
    beta = 0.1 * jax.random.normal(k2, (c,), jnp.float32)
    r_mean = 0.1 * jax.random.normal(k3, (c,), jnp.float32)
    r_var = 0.5 + jnp.abs(jax.random.normal(k4, (c,), jnp.float32))
    scale = gamma / jnp.sqrt(r_var + eps)
    shift = beta - r_mean * scale
    return scale.reshape(1, c), shift.reshape(1, c)


def init_params(key, cfg):
    ks = jax.random.split(key, 8)
    cin, k1sz, red, ncls = (cfg["input_channels"], cfg["kernel_size"],
                            cfg["reduced_cnn_size"], cfg["num_classes"])
    t_out = 22  # model_output_dim hard-coded in EEG_M
    # Conv weights in im2col layout (K*C_in, C_out):
    #   w_col[k*C_in + c, o] == torch_conv.weight[o, c, k]
    w1 = 0.05 * jax.random.normal(ks[0], (k1sz * cin, 32), jnp.float32)
    w2 = 0.05 * jax.random.normal(ks[1], (8 * 32, 64), jnp.float32)
    w3 = 0.05 * jax.random.normal(ks[2], (8 * 64, red), jnp.float32)
    s1, b1 = _bn_affine(ks[3], 32)
    s2, b2 = _bn_affine(ks[4], 64)
    s3, b3 = _bn_affine(ks[5], red)
    # Logits weight pre-permuted for time-major features:
    #   w_head[c, t*ncls + o] == torch_linear.weight[o, c*t_out + t]
    w_head = 0.05 * jax.random.normal(ks[6], (red, t_out * ncls), jnp.float32)
    b_head = 0.05 * jax.random.normal(ks[7], (1, ncls), jnp.float32)
    return dict(w1=w1, scale1=s1, shift1=b1,
                w2=w2, scale2=s2, shift2=b2,
                w3=w3, scale3=s3, shift3=b3,
                w_head=w_head, b_head=b_head)


# ----------------------------------------------------------------------------
if __name__ == "__main__":
    # Config chosen so the feature length after the extractor is exactly 22,
    # matching the hard-coded model_output_dim = 22 in EEG_M.__init__.
    cfg = dict(input_channels=1, kernel_size=8, stride=1, dropout=0.35,
               reduced_cnn_size=128, num_classes=5)
    batch, seq_len = 2, 376   # 376 -> conv/pool chain -> 22 time steps

    key = jax.random.PRNGKey(0)
    k_par, k_in = jax.random.split(key)
    params = init_params(k_par, cfg)
    x_in = jax.random.normal(k_in, (batch, cfg["input_channels"], seq_len),
                             jnp.float32)

    fwd = jax.jit(lambda p, x: eeg_m_forward(p, x, cfg))
    logits, vec = fwd(params, x_in)
    jax.block_until_ready((logits, vec))

    assert logits.shape == (batch, cfg["num_classes"]), logits.shape
    assert vec.shape == (batch, 22 * cfg["reduced_cnn_size"]), vec.shape
    assert bool(jnp.all(jnp.isfinite(logits))) and bool(
        jnp.all(jnp.isfinite(vec)))
    print("KERNEL_OK")
</pallas_src>

<mosaic_0001>
module attributes {stable_mosaic.version = 11 : i64} {
  func.func @_eeg_m_fused_kernel(%arg0: i32, %arg1: memref<1x376x1xf32, #tpu.memory_space<vmem>>, %arg2: memref<8x32xf32, #tpu.memory_space<vmem>>, %arg3: memref<1x32xf32, #tpu.memory_space<vmem>>, %arg4: memref<1x32xf32, #tpu.memory_space<vmem>>, %arg5: memref<256x64xf32, #tpu.memory_space<vmem>>, %arg6: memref<1x64xf32, #tpu.memory_space<vmem>>, %arg7: memref<1x64xf32, #tpu.memory_space<vmem>>, %arg8: memref<512x128xf32, #tpu.memory_space<vmem>>, %arg9: memref<1x128xf32, #tpu.memory_space<vmem>>, %arg10: memref<1x128xf32, #tpu.memory_space<vmem>>, %arg11: memref<128x110xf32, #tpu.memory_space<vmem>>, %arg12: memref<1x5xf32, #tpu.memory_space<vmem>>, %arg13: memref<1x22x128xf32, #tpu.memory_space<vmem>>, %arg14: memref<1x1x5xf32, #tpu.memory_space<vmem>>, %arg15: memref<384x1xf32, #tpu.memory_space<vmem>>, %arg16: memref<384x32xf32, #tpu.memory_space<vmem>>, %arg17: memref<200x32xf32, #tpu.memory_space<vmem>>, %arg18: memref<192x64xf32, #tpu.memory_space<vmem>>, %arg19: memref<72x64xf32, #tpu.memory_space<vmem>>, %arg20: memref<72x128xf32, #tpu.memory_space<vmem>>) attributes {dimension_semantics = [#tpu.dimension_semantics<parallel>], iteration_bounds = array<i64: 2>, scalar_prefetch = 0 : i64, scratch_operands = 6 : i64, tpu.core_type = #tpu.core_type<tc>, window_params = [{transform_indices = @transform_0, window_bounds = array<i64: 1, 376, 1>}, {pipeline_mode = #tpu.pipeline_mode<synchronous>, transform_indices = @transform_1, window_bounds = array<i64: 8, 32>}, {pipeline_mode = #tpu.pipeline_mode<synchronous>, transform_indices = @transform_2, window_bounds = array<i64: 1, 32>}, {pipeline_mode = #tpu.pipeline_mode<synchronous>, transform_indices = @transform_3, window_bounds = array<i64: 1, 32>}, {pipeline_mode = #tpu.pipeline_mode<synchronous>, transform_indices = @transform_4, window_bounds = array<i64: 256, 64>}, {pipeline_mode = #tpu.pipeline_mode<synchronous>, transform_indices = @transform_5, window_bounds = array<i64: 1, 64>}, {pipeline_mode = #tpu.pipeline_mode<synchronous>, transform_indices = @transform_6, window_bounds = array<i64: 1, 64>}, {pipeline_mode = #tpu.pipeline_mode<synchronous>, transform_indices = @transform_7, window_bounds = array<i64: 512, 128>}, {pipeline_mode = #tpu.pipeline_mode<synchronous>, transform_indices = @transform_8, window_bounds = array<i64: 1, 128>}, {pipeline_mode = #tpu.pipeline_mode<synchronous>, transform_indices = @transform_9, window_bounds = array<i64: 1, 128>}, {pipeline_mode = #tpu.pipeline_mode<synchronous>, transform_indices = @transform_10, window_bounds = array<i64: 128, 110>}, {pipeline_mode = #tpu.pipeline_mode<synchronous>, transform_indices = @transform_11, window_bounds = array<i64: 1, 5>}, {transform_indices = @transform_12, window_bounds = array<i64: 1, 22, 128>}, {transform_indices = @transform_13, window_bounds = array<i64: 1, 1, 5>}]} {
    %c0 = arith.constant 0 : index
    %c0_0 = arith.constant 0 : index
    %c0_1 = arith.constant 0 : index
    %0 = vector.load %arg1[%c0, %c0_0, %c0_1] : memref<1x376x1xf32, #tpu.memory_space<vmem>>, vector<1x376x1xf32>
    %1 = vector.shape_cast %0 : vector<1x376x1xf32> to vector<376x1xf32>
    %cst = arith.constant 0.000000e+00 : f32
    %2 = vector.broadcast %cst : f32 to vector<384x1xf32>
    %c0_2 = arith.constant 0 : index
    %c0_3 = arith.constant 0 : index
    %3 = vector.load %arg15[%c0_2, %c0_3] : memref<384x1xf32, #tpu.memory_space<vmem>>, vector<384x1xf32>
    tpu.vector_store %arg15[%c0_2, %c0_3], %2 {strides = array<i32>} : memref<384x1xf32, #tpu.memory_space<vmem>>, vector<384x1xf32>,
    %c4 = arith.constant 4 : index
    %c0_4 = arith.constant 0 : index
    %4 = vector.load %arg15[%c4, %c0_4] : memref<384x1xf32, #tpu.memory_space<vmem>>, vector<376x1xf32>
    tpu.vector_store %arg15[%c4, %c0_4], %1 {strides = array<i32>} : memref<384x1xf32, #tpu.memory_space<vmem>>, vector<376x1xf32>,
    %c0_5 = arith.constant 0 : index
    %c0_6 = arith.constant 0 : index
    %5 = vector.load %arg15[%c0_5, %c0_6] : memref<384x1xf32, #tpu.memory_space<vmem>>, vector<377x1xf32>
    %c1 = arith.constant 1 : index
    %c0_7 = arith.constant 0 : index
    %6 = vector.load %arg15[%c1, %c0_7] : memref<384x1xf32, #tpu.memory_space<vmem>>, vector<377x1xf32>
    %c2 = arith.constant 2 : index
    %c0_8 = arith.constant 0 : index
    %7 = vector.load %arg15[%c2, %c0_8] : memref<384x1xf32, #tpu.memory_space<vmem>>, vector<377x1xf32>
    %c3 = arith.constant 3 : index
    %c0_9 = arith.constant 0 : index
    %8 = vector.load %arg15[%c3, %c0_9] : memref<384x1xf32, #tpu.memory_space<vmem>>, vector<377x1xf32>
    %c4_10 = arith.constant 4 : index
    %c0_11 = arith.constant 0 : index
    %9 = vector.load %arg15[%c4_10, %c0_11] : memref<384x1xf32, #tpu.memory_space<vmem>>, vector<377x1xf32>
    %c5 = arith.constant 5 : index
    %c0_12 = arith.constant 0 : index
    %10 = vector.load %arg15[%c5, %c0_12] : memref<384x1xf32, #tpu.memory_space<vmem>>, vector<377x1xf32>
    %c6 = arith.constant 6 : index
    %c0_13 = arith.constant 0 : index
    %11 = vector.load %arg15[%c6, %c0_13] : memref<384x1xf32, #tpu.memory_space<vmem>>, vector<377x1xf32>
    %c7 = arith.constant 7 : index
    %c0_14 = arith.constant 0 : index
    %12 = vector.load %arg15[%c7, %c0_14] : memref<384x1xf32, #tpu.memory_space<vmem>>, vector<377x1xf32>
    %13 = tpu.concatenate %5, %6, %7, %8, %9, %10, %11, %12 in 1 : vector<377x1xf32>, vector<377x1xf32>, vector<377x1xf32>, vector<377x1xf32>, vector<377x1xf32>, vector<377x1xf32>, vector<377x1xf32>, vector<377x1xf32> -> vector<377x8xf32>
    %c0_15 = arith.constant 0 : index
    %c0_16 = arith.constant 0 : index
    %14 = vector.load %arg2[%c0_15, %c0_16] : memref<8x32xf32, #tpu.memory_space<vmem>>, vector<8x32xf32>
    %cst_17 = arith.constant dense<0.000000e+00> : vector<377x32xf32>
    %15 = tpu.matmul %13, %14, %cst_17 {dimension_numbers = #tpu.dot_dimension_numbers<[1], [0], [0], [1], [0, 0, 1, 1], [], []>} : vector<377x8xf32>, vector<8x32xf32>, vector<377x32xf32> -> vector<377x32xf32>
    %c0_18 = arith.constant 0 : index
    %c0_19 = arith.constant 0 : index
    %16 = vector.load %arg3[%c0_18, %c0_19] : memref<1x32xf32, #tpu.memory_space<vmem>>, vector<1x32xf32>
    %17 = vector.broadcast %16 : vector<1x32xf32> to vector<377x32xf32>
    %18 = arith.mulf %15, %17 : vector<377x32xf32>
    %c0_20 = arith.constant 0 : index
    %c0_21 = arith.constant 0 : index
    %19 = vector.load %arg4[%c0_20, %c0_21] : memref<1x32xf32, #tpu.memory_space<vmem>>, vector<1x32xf32>
    %20 = vector.broadcast %19 : vector<1x32xf32> to vector<377x32xf32>
    %21 = arith.addf %18, %20 : vector<377x32xf32>
    %cst_22 = arith.constant 0.000000e+00 : f32
    %22 = vector.broadcast %cst_22 : f32 to vector<377x32xf32>
    %23 = arith.maximumf %21, %22 : vector<377x32xf32>
    %cst_23 = arith.constant 0xFF800000 : f32
    %24 = vector.broadcast %cst_23 : f32 to vector<384x32xf32>
    %c0_24 = arith.constant 0 : index
    %c0_25 = arith.constant 0 : index
    %25 = vector.load %arg16[%c0_24, %c0_25] : memref<384x32xf32, #tpu.memory_space<vmem>>, vector<384x32xf32>
    tpu.vector_store %arg16[%c0_24, %c0_25], %24 {strides = array<i32>} : memref<384x32xf32, #tpu.memory_space<vmem>>, vector<384x32xf32>,
    %c1_26 = arith.constant 1 : index
    %c0_27 = arith.constant 0 : index
    %26 = vector.load %arg16[%c1_26, %c0_27] : memref<384x32xf32, #tpu.memory_space<vmem>>, vector<377x32xf32>
    tpu.vector_store %arg16[%c1_26, %c0_27], %23 {strides = array<i32>} : memref<384x32xf32, #tpu.memory_space<vmem>>, vector<377x32xf32>,
    %c0_28 = arith.constant 0 : index
    %c0_29 = arith.constant 0 : index
    %27 = tpu.strided_load %arg16[%c0_28, %c0_29] {strides = array<i32: 2, 1>} : memref<384x32xf32, #tpu.memory_space<vmem>>, vector<189x32xf32>
    %c1_30 = arith.constant 1 : index
    %c0_31 = arith.constant 0 : index
    %28 = tpu.strided_load %arg16[%c1_30, %c0_31] {strides = array<i32: 2, 1>} : memref<384x32xf32, #tpu.memory_space<vmem>>, vector<189x32xf32>
    %29 = arith.maximumf %27, %28 : vector<189x32xf32>
    %cst_32 = arith.constant 0.000000e+00 : f32
    %30 = vector.broadcast %cst_32 : f32 to vector<200x32xf32>
    %c0_33 = arith.constant 0 : index
    %c0_34 = arith.constant 0 : index
    %31 = vector.load %arg17[%c0_33, %c0_34] : memref<200x32xf32, #tpu.memory_space<vmem>>, vector<200x32xf32>
    tpu.vector_store %arg17[%c0_33, %c0_34], %30 {strides = array<i32>} : memref<200x32xf32, #tpu.memory_space<vmem>>, vector<200x32xf32>,
    %c4_35 = arith.constant 4 : index
    %c0_36 = arith.constant 0 : index
    %32 = vector.load %arg17[%c4_35, %c0_36] : memref<200x32xf32, #tpu.memory_space<vmem>>, vector<189x32xf32>
    tpu.vector_store %arg17[%c4_35, %c0_36], %29 {strides = array<i32>} : memref<200x32xf32, #tpu.memory_space<vmem>>, vector<189x32xf32>,
    %c0_37 = arith.constant 0 : index
    %c0_38 = arith.constant 0 : index
    %33 = vector.load %arg17[%c0_37, %c0_38] : memref<200x32xf32, #tpu.memory_space<vmem>>, vector<190x32xf32>
    %c1_39 = arith.constant 1 : index
    %c0_40 = arith.constant 0 : index
    %34 = vector.load %arg17[%c1_39, %c0_40] : memref<200x32xf32, #tpu.memory_space<vmem>>, vector<190x32xf32>
    %c2_41 = arith.constant 2 : index
    %c0_42 = arith.constant 0 : index
    %35 = vector.load %arg17[%c2_41, %c0_42] : memref<200x32xf32, #tpu.memory_space<vmem>>, vector<190x32xf32>
    %c3_43 = arith.constant 3 : index
    %c0_44 = arith.constant 0 : index
    %36 = vector.load %arg17[%c3_43, %c0_44] : memref<200x32xf32, #tpu.memory_space<vmem>>, vector<190x32xf32>
    %c4_45 = arith.constant 4 : index
    %c0_46 = arith.constant 0 : index
    %37 = vector.load %arg17[%c4_45, %c0_46] : memref<200x32xf32, #tpu.memory_space<vmem>>, vector<190x32xf32>
    %c5_47 = arith.constant 5 : index
    %c0_48 = arith.constant 0 : index
    %38 = vector.load %arg17[%c5_47, %c0_48] : memref<200x32xf32, #tpu.memory_space<vmem>>, vector<190x32xf32>
    %c6_49 = arith.constant 6 : index
    %c0_50 = arith.constant 0 : index
    %39 = vector.load %arg17[%c6_49, %c0_50] : memref<200x32xf32, #tpu.memory_space<vmem>>, vector<190x32xf32>
    %c7_51 = arith.constant 7 : index
    %c0_52 = arith.constant 0 : index
    %40 = vector.load %arg17[%c7_51, %c0_52] : memref<200x32xf32, #tpu.memory_space<vmem>>, vector<190x32xf32>
    %41 = tpu.concatenate %33, %34, %35, %36, %37, %38, %39, %40 in 1 : vector<190x32xf32>, vector<190x32xf32>, vector<190x32xf32>, vector<190x32xf32>, vector<190x32xf32>, vector<190x32xf32>, vector<190x32xf32>, vector<190x32xf32> -> vector<190x256xf32>
    %c0_53 = arith.constant 0 : index
    %c0_54 = arith.constant 0 : index
    %42 = vector.load %arg5[%c0_53, %c0_54] : memref<256x64xf32, #tpu.memory_space<vmem>>, vector<256x64xf32>
    %cst_55 = arith.constant dense<0.000000e+00> : vector<190x64xf32>
    %43 = tpu.matmul %41, %42, %cst_55 {dimension_numbers = #tpu.dot_dimension_numbers<[1], [0], [0], [1], [0, 0, 1, 1], [], []>} : vector<190x256xf32>, vector<256x64xf32>, vector<190x64xf32> -> vector<190x64xf32>
    %c0_56 = arith.constant 0 : index
    %c0_57 = arith.constant 0 : index
    %44 = vector.load %arg6[%c0_56, %c0_57] : memref<1x64xf32, #tpu.memory_space<vmem>>, vector<1x64xf32>
    %45 = vector.broadcast %44 : vector<1x64xf32> to vector<190x64xf32>
    %46 = arith.mulf %43, %45 : vector<190x64xf32>
    %c0_58 = arith.constant 0 : index
    %c0_59 = arith.constant 0 : index
    %47 = vector.load %arg7[%c0_58, %c0_59] : memref<1x64xf32, #tpu.memory_space<vmem>>, vector<1x64xf32>
    %48 = vector.broadcast %47 : vector<1x64xf32> to vector<190x64xf32>
    %49 = arith.addf %46, %48 : vector<190x64xf32>
    %cst_60 = arith.constant 0.000000e+00 : f32
    %50 = vector.broadcast %cst_60 : f32 to vector<190x64xf32>
    %51 = arith.maximumf %49, %50 : vector<190x64xf32>
    %cst_61 = arith.constant 0xFF800000 : f32
    %52 = vector.broadcast %cst_61 : f32 to vector<192x64xf32>
    %c0_62 = arith.constant 0 : index
    %c0_63 = arith.constant 0 : index
    %53 = vector.load %arg18[%c0_62, %c0_63] : memref<192x64xf32, #tpu.memory_space<vmem>>, vector<192x64xf32>
    tpu.vector_store %arg18[%c0_62, %c0_63], %52 {strides = array<i32>} : memref<192x64xf32, #tpu.memory_space<vmem>>, vector<192x64xf32>,
    %c1_64 = arith.constant 1 : index
    %c0_65 = arith.constant 0 : index
    %54 = vector.load %arg18[%c1_64, %c0_65] : memref<192x64xf32, #tpu.memory_space<vmem>>, vector<190x64xf32>
    tpu.vector_store %arg18[%c1_64, %c0_65], %51 {strides = array<i32>} : memref<192x64xf32, #tpu.memory_space<vmem>>, vector<190x64xf32>,
    %c0_66 = arith.constant 0 : index
    %c0_67 = arith.constant 0 : index
    %55 = tpu.strided_load %arg18[%c0_66, %c0_67] {strides = array<i32: 3, 1>} : memref<192x64xf32, #tpu.memory_space<vmem>>, vector<64x64xf32>
    %c1_68 = arith.constant 1 : index
    %c0_69 = arith.constant 0 : index
    %56 = tpu.strided_load %arg18[%c1_68, %c0_69] {strides = array<i32: 3, 1>} : memref<192x64xf32, #tpu.memory_space<vmem>>, vector<64x64xf32>
    %57 = arith.maximumf %55, %56 : vector<64x64xf32>
    %c2_70 = arith.constant 2 : index
    %c0_71 = arith.constant 0 : index
    %58 = tpu.strided_load %arg18[%c2_70, %c0_71] {strides = array<i32: 3, 1>} : memref<192x64xf32, #tpu.memory_space<vmem>>, vector<64x64xf32>
    %59 = arith.maximumf %57, %58 : vector<64x64xf32>
    %cst_72 = arith.constant 0.000000e+00 : f32
    %60 = vector.broadcast %cst_72 : f32 to vector<72x64xf32>
    %c0_73 = arith.constant 0 : index
    %c0_74 = arith.constant 0 : index
    %61 = vector.load %arg19[%c0_73, %c0_74] : memref<72x64xf32, #tpu.memory_space<vmem>>, vector<72x64xf32>
    tpu.vector_store %arg19[%c0_73, %c0_74], %60 {strides = array<i32>} : memref<72x64xf32, #tpu.memory_space<vmem>>, vector<72x64xf32>,
    %c4_75 = arith.constant 4 : index
    %c0_76 = arith.constant 0 : index
    %62 = vector.load %arg19[%c4_75, %c0_76] : memref<72x64xf32, #tpu.memory_space<vmem>>, vector<64x64xf32>
    tpu.vector_store %arg19[%c4_75, %c0_76], %59 {strides = array<i32>} : memref<72x64xf32, #tpu.memory_space<vmem>>, vector<64x64xf32>,
    %c0_77 = arith.constant 0 : index
    %c0_78 = arith.constant 0 : index
    %63 = vector.load %arg19[%c0_77, %c0_78] : memref<72x64xf32, #tpu.memory_space<vmem>>, vector<65x64xf32>
    %c1_79 = arith.constant 1 : index
    %c0_80 = arith.constant 0 : index
    %64 = vector.load %arg19[%c1_79, %c0_80] : memref<72x64xf32, #tpu.memory_space<vmem>>, vector<65x64xf32>
    %c2_81 = arith.constant 2 : index
    %c0_82 = arith.constant 0 : index
    %65 = vector.load %arg19[%c2_81, %c0_82] : memref<72x64xf32, #tpu.memory_space<vmem>>, vector<65x64xf32>
    %c3_83 = arith.constant 3 : index
    %c0_84 = arith.constant 0 : index
    %66 = vector.load %arg19[%c3_83, %c0_84] : memref<72x64xf32, #tpu.memory_space<vmem>>, vector<65x64xf32>
    %c4_85 = arith.constant 4 : index
    %c0_86 = arith.constant 0 : index
    %67 = vector.load %arg19[%c4_85, %c0_86] : memref<72x64xf32, #tpu.memory_space<vmem>>, vector<65x64xf32>
    %c5_87 = arith.constant 5 : index
    %c0_88 = arith.constant 0 : index
    %68 = vector.load %arg19[%c5_87, %c0_88] : memref<72x64xf32, #tpu.memory_space<vmem>>, vector<65x64xf32>
    %c6_89 = arith.constant 6 : index
    %c0_90 = arith.constant 0 : index
    %69 = vector.load %arg19[%c6_89, %c0_90] : memref<72x64xf32, #tpu.memory_space<vmem>>, vector<65x64xf32>
    %c7_91 = arith.constant 7 : index
    %c0_92 = arith.constant 0 : index
    %70 = vector.load %arg19[%c7_91, %c0_92] : memref<72x64xf32, #tpu.memory_space<vmem>>, vector<65x64xf32>
    %71 = tpu.concatenate %63, %64, %65, %66, %67, %68, %69, %70 in 1 : vector<65x64xf32>, vector<65x64xf32>, vector<65x64xf32>, vector<65x64xf32>, vector<65x64xf32>, vector<65x64xf32>, vector<65x64xf32>, vector<65x64xf32> -> vector<65x512xf32>
    %c0_93 = arith.constant 0 : index
    %c0_94 = arith.constant 0 : index
    %72 = vector.load %arg8[%c0_93, %c0_94] : memref<512x128xf32, #tpu.memory_space<vmem>>, vector<512x128xf32>
    %cst_95 = arith.constant dense<0.000000e+00> : vector<65x128xf32>
    %73 = tpu.matmul %71, %72, %cst_95 {dimension_numbers = #tpu.dot_dimension_numbers<[1], [0], [0], [1], [0, 0, 1, 1], [], []>} : vector<65x512xf32>, vector<512x128xf32>, vector<65x128xf32> -> vector<65x128xf32>
    %c0_96 = arith.constant 0 : index
    %c0_97 = arith.constant 0 : index
    %74 = vector.load %arg9[%c0_96, %c0_97] : memref<1x128xf32, #tpu.memory_space<vmem>>, vector<1x128xf32>
    %75 = vector.broadcast %74 : vector<1x128xf32> to vector<65x128xf32>
    %76 = arith.mulf %73, %75 : vector<65x128xf32>
    %c0_98 = arith.constant 0 : index
    %c0_99 = arith.constant 0 : index
    %77 = vector.load %arg10[%c0_98, %c0_99] : memref<1x128xf32, #tpu.memory_space<vmem>>, vector<1x128xf32>
    %78 = vector.broadcast %77 : vector<1x128xf32> to vector<65x128xf32>
    %79 = arith.addf %76, %78 : vector<65x128xf32>
    %cst_100 = arith.constant 0.000000e+00 : f32
    %80 = vector.broadcast %cst_100 : f32 to vector<65x128xf32>
    %81 = arith.maximumf %79, %80 : vector<65x128xf32>
    %cst_101 = arith.constant 0xFF800000 : f32
    %82 = vector.broadcast %cst_101 : f32 to vector<72x128xf32>
    %c0_102 = arith.constant 0 : index
    %c0_103 = arith.constant 0 : index
    %83 = vector.load %arg20[%c0_102, %c0_103] : memref<72x128xf32, #tpu.memory_space<vmem>>, vector<72x128xf32>
    tpu.vector_store %arg20[%c0_102, %c0_103], %82 {strides = array<i32>} : memref<72x128xf32, #tpu.memory_space<vmem>>, vector<72x128xf32>,
    %c1_104 = arith.constant 1 : index
    %c0_105 = arith.constant 0 : index
    %84 = vector.load %arg20[%c1_104, %c0_105] : memref<72x128xf32, #tpu.memory_space<vmem>>, vector<65x128xf32>
    tpu.vector_store %arg20[%c1_104, %c0_105], %81 {strides = array<i32>} : memref<72x128xf32, #tpu.memory_space<vmem>>, vector<65x128xf32>,
    %c0_106 = arith.constant 0 : index
    %c0_107 = arith.constant 0 : index
    %85 = tpu.strided_load %arg20[%c0_106, %c0_107] {strides = array<i32: 3, 1>} : memref<72x128xf32, #tpu.memory_space<vmem>>, vector<22x128xf32>
    %c1_108 = arith.constant 1 : index
    %c0_109 = arith.constant 0 : index
    %86 = tpu.strided_load %arg20[%c1_108, %c0_109] {strides = array<i32: 3, 1>} : memref<72x128xf32, #tpu.memory_space<vmem>>, vector<22x128xf32>
    %87 = arith.maximumf %85, %86 : vector<22x128xf32>
    %c2_110 = arith.constant 2 : index
    %c0_111 = arith.constant 0 : index
    %88 = tpu.strided_load %arg20[%c2_110, %c0_111] {strides = array<i32: 3, 1>} : memref<72x128xf32, #tpu.memory_space<vmem>>, vector<22x128xf32>
    %89 = arith.maximumf %87, %88 : vector<22x128xf32>
    %c0_112 = arith.constant 0 : index
    %c0_113 = arith.constant 0 : index
    %c0_114 = arith.constant 0 : index
    %90 = vector.load %arg13[%c0_112, %c0_113, %c0_114] : memref<1x22x128xf32, #tpu.memory_space<vmem>>, vector<1x22x128xf32>
    %91 = vector.shape_cast %90 : vector<1x22x128xf32> to vector<22x128xf32>
    %92 = vector.shape_cast %89 : vector<22x128xf32> to vector<1x22x128xf32>
    tpu.vector_store %arg13[%c0_112, %c0_113, %c0_114], %92 {strides = array<i32>} : memref<1x22x128xf32, #tpu.memory_space<vmem>>, vector<1x22x128xf32>,
    %c0_115 = arith.constant 0 : index
    %c0_116 = arith.constant 0 : index
    %93 = vector.load %arg11[%c0_115, %c0_116] : memref<128x110xf32, #tpu.memory_space<vmem>>, vector<128x110xf32>
    %cst_117 = arith.constant dense<0.000000e+00> : vector<22x110xf32>
    %94 = tpu.matmul %89, %93, %cst_117 {dimension_numbers = #tpu.dot_dimension_numbers<[1], [0], [0], [1], [0, 0, 1, 1], [], []>} : vector<22x128xf32>, vector<128x110xf32>, vector<22x110xf32> -> vector<22x110xf32>
    %c0_118 = arith.constant 0 : index
    %c0_119 = arith.constant 0 : index
    %95 = vector.load %arg12[%c0_118, %c0_119] : memref<1x5xf32, #tpu.memory_space<vmem>>, vector<1x5xf32>
    %96 = vector.extract_strided_slice %94 {offsets = [0, 0], sizes = [1, 5], strides = [1, 1]} : vector<22x110xf32> to vector<1x5xf32>
    %97 = arith.addf %95, %96 : vector<1x5xf32>
    %98 = vector.extract_strided_slice %94 {offsets = [1, 5], sizes = [1, 5], strides = [1, 1]} : vector<22x110xf32> to vector<1x5xf32>
    %99 = arith.addf %97, %98 : vector<1x5xf32>
    %100 = vector.extract_strided_slice %94 {offsets = [2, 10], sizes = [1, 5], strides = [1, 1]} : vector<22x110xf32> to vector<1x5xf32>
    %101 = arith.addf %99, %100 : vector<1x5xf32>
    %102 = vector.extract_strided_slice %94 {offsets = [3, 15], sizes = [1, 5], strides = [1, 1]} : vector<22x110xf32> to vector<1x5xf32>
    %103 = arith.addf %101, %102 : vector<1x5xf32>
    %104 = vector.extract_strided_slice %94 {offsets = [4, 20], sizes = [1, 5], strides = [1, 1]} : vector<22x110xf32> to vector<1x5xf32>
    %105 = arith.addf %103, %104 : vector<1x5xf32>
    %106 = vector.extract_strided_slice %94 {offsets = [5, 25], sizes = [1, 5], strides = [1, 1]} : vector<22x110xf32> to vector<1x5xf32>
    %107 = arith.addf %105, %106 : vector<1x5xf32>
    %108 = vector.extract_strided_slice %94 {offsets = [6, 30], sizes = [1, 5], strides = [1, 1]} : vector<22x110xf32> to vector<1x5xf32>
    %109 = arith.addf %107, %108 : vector<1x5xf32>
    %110 = vector.extract_strided_slice %94 {offsets = [7, 35], sizes = [1, 5], strides = [1, 1]} : vector<22x110xf32> to vector<1x5xf32>
    %111 = arith.addf %109, %110 : vector<1x5xf32>
    %112 = vector.extract_strided_slice %94 {offsets = [8, 40], sizes = [1, 5], strides = [1, 1]} : vector<22x110xf32> to vector<1x5xf32>
    %113 = arith.addf %111, %112 : vector<1x5xf32>
    %114 = vector.extract_strided_slice %94 {offsets = [9, 45], sizes = [1, 5], strides = [1, 1]} : vector<22x110xf32> to vector<1x5xf32>
    %115 = arith.addf %113, %114 : vector<1x5xf32>
    %116 = vector.extract_strided_slice %94 {offsets = [10, 50], sizes = [1, 5], strides = [1, 1]} : vector<22x110xf32> to vector<1x5xf32>
    %117 = arith.addf %115, %116 : vector<1x5xf32>
    %118 = vector.extract_strided_slice %94 {offsets = [11, 55], sizes = [1, 5], strides = [1, 1]} : vector<22x110xf32> to vector<1x5xf32>
    %119 = arith.addf %117, %118 : vector<1x5xf32>
    %120 = vector.extract_strided_slice %94 {offsets = [12, 60], sizes = [1, 5], strides = [1, 1]} : vector<22x110xf32> to vector<1x5xf32>
    %121 = arith.addf %119, %120 : vector<1x5xf32>
    %122 = vector.extract_strided_slice %94 {offsets = [13, 65], sizes = [1, 5], strides = [1, 1]} : vector<22x110xf32> to vector<1x5xf32>
    %123 = arith.addf %121, %122 : vector<1x5xf32>
    %124 = vector.extract_strided_slice %94 {offsets = [14, 70], sizes = [1, 5], strides = [1, 1]} : vector<22x110xf32> to vector<1x5xf32>
    %125 = arith.addf %123, %124 : vector<1x5xf32>
    %126 = vector.extract_strided_slice %94 {offsets = [15, 75], sizes = [1, 5], strides = [1, 1]} : vector<22x110xf32> to vector<1x5xf32>
    %127 = arith.addf %125, %126 : vector<1x5xf32>
    %128 = vector.extract_strided_slice %94 {offsets = [16, 80], sizes = [1, 5], strides = [1, 1]} : vector<22x110xf32> to vector<1x5xf32>
    %129 = arith.addf %127, %128 : vector<1x5xf32>
    %130 = vector.extract_strided_slice %94 {offsets = [17, 85], sizes = [1, 5], strides = [1, 1]} : vector<22x110xf32> to vector<1x5xf32>
    %131 = arith.addf %129, %130 : vector<1x5xf32>
    %132 = vector.extract_strided_slice %94 {offsets = [18, 90], sizes = [1, 5], strides = [1, 1]} : vector<22x110xf32> to vector<1x5xf32>
    %133 = arith.addf %131, %132 : vector<1x5xf32>
    %134 = vector.extract_strided_slice %94 {offsets = [19, 95], sizes = [1, 5], strides = [1, 1]} : vector<22x110xf32> to vector<1x5xf32>
    %135 = arith.addf %133, %134 : vector<1x5xf32>
    %136 = vector.extract_strided_slice %94 {offsets = [20, 100], sizes = [1, 5], strides = [1, 1]} : vector<22x110xf32> to vector<1x5xf32>
    %137 = arith.addf %135, %136 : vector<1x5xf32>
    %138 = vector.extract_strided_slice %94 {offsets = [21, 105], sizes = [1, 5], strides = [1, 1]} : vector<22x110xf32> to vector<1x5xf32>
    %139 = arith.addf %137, %138 : vector<1x5xf32>
    %c0_120 = arith.constant 0 : index
    %c0_121 = arith.constant 0 : index
    %c0_122 = arith.constant 0 : index
    %140 = vector.load %arg14[%c0_120, %c0_121, %c0_122] : memref<1x1x5xf32, #tpu.memory_space<vmem>>, vector<1x1x5xf32>
    %141 = vector.shape_cast %140 : vector<1x1x5xf32> to vector<1x5xf32>
    %142 = vector.shape_cast %139 : vector<1x5xf32> to vector<1x1x5xf32>
    tpu.vector_store %arg14[%c0_120, %c0_121, %c0_122], %142 {strides = array<i32>} : memref<1x1x5xf32, #tpu.memory_space<vmem>>, vector<1x1x5xf32>,
    return
  }
  func.func @transform_0(%arg0: i32) -> (i32, i32, i32) {
    %c0_i32 = arith.constant 0 : i32
    %c0_i32_0 = arith.constant 0 : i32
    %c0_i32_1 = arith.constant 0 : i32
    return %arg0, %c0_i32, %c0_i32_0 : i32, i32, i32
  }
  func.func @transform_1(%arg0: i32) -> (i32, i32) {
    %c0_i32 = arith.constant 0 : i32
    %c0_i32_0 = arith.constant 0 : i32
    %c0_i32_1 = arith.constant 0 : i32
    return %c0_i32, %c0_i32_0 : i32, i32
  }
  func.func @transform_2(%arg0: i32) -> (i32, i32) {
    %c0_i32 = arith.constant 0 : i32
    %c0_i32_0 = arith.constant 0 : i32
    %c0_i32_1 = arith.constant 0 : i32
    return %c0_i32, %c0_i32_0 : i32, i32
  }
  func.func @transform_3(%arg0: i32) -> (i32, i32) {
    %c0_i32 = arith.constant 0 : i32
    %c0_i32_0 = arith.constant 0 : i32
    %c0_i32_1 = arith.constant 0 : i32
    return %c0_i32, %c0_i32_0 : i32, i32
  }
  func.func @transform_4(%arg0: i32) -> (i32, i32) {
    %c0_i32 = arith.constant 0 : i32
    %c0_i32_0 = arith.constant 0 : i32
    %c0_i32_1 = arith.constant 0 : i32
    return %c0_i32, %c0_i32_0 : i32, i32
  }
  func.func @transform_5(%arg0: i32) -> (i32, i32) {
    %c0_i32 = arith.constant 0 : i32
    %c0_i32_0 = arith.constant 0 : i32
    %c0_i32_1 = arith.constant 0 : i32
    return %c0_i32, %c0_i32_0 : i32, i32
  }
  func.func @transform_6(%arg0: i32) -> (i32, i32) {
    %c0_i32 = arith.constant 0 : i32
    %c0_i32_0 = arith.constant 0 : i32
    %c0_i32_1 = arith.constant 0 : i32
    return %c0_i32, %c0_i32_0 : i32, i32
  }
  func.func @transform_7(%arg0: i32) -> (i32, i32) {
    %c0_i32 = arith.constant 0 : i32
    %c0_i32_0 = arith.constant 0 : i32
    %c0_i32_1 = arith.constant 0 : i32
    return %c0_i32, %c0_i32_0 : i32, i32
  }
  func.func @transform_8(%arg0: i32) -> (i32, i32) {
    %c0_i32 = arith.constant 0 : i32
    %c0_i32_0 = arith.constant 0 : i32
    %c0_i32_1 = arith.constant 0 : i32
    return %c0_i32, %c0_i32_0 : i32, i32
  }
  func.func @transform_9(%arg0: i32) -> (i32, i32) {
    %c0_i32 = arith.constant 0 : i32
    %c0_i32_0 = arith.constant 0 : i32
    %c0_i32_1 = arith.constant 0 : i32
    return %c0_i32, %c0_i32_0 : i32, i32
  }
  func.func @transform_10(%arg0: i32) -> (i32, i32) {
    %c0_i32 = arith.constant 0 : i32
    %c0_i32_0 = arith.constant 0 : i32
    %c0_i32_1 = arith.constant 0 : i32
    return %c0_i32, %c0_i32_0 : i32, i32
  }
  func.func @transform_11(%arg0: i32) -> (i32, i32) {
    %c0_i32 = arith.constant 0 : i32
    %c0_i32_0 = arith.constant 0 : i32
    %c0_i32_1 = arith.constant 0 : i32
    return %c0_i32, %c0_i32_0 : i32, i32
  }
  func.func @transform_12(%arg0: i32) -> (i32, i32, i32) {
    %c0_i32 = arith.constant 0 : i32
    %c0_i32_0 = arith.constant 0 : i32
    %c0_i32_1 = arith.constant 0 : i32
    return %arg0, %c0_i32, %c0_i32_0 : i32, i32, i32
  }
  func.func @transform_13(%arg0: i32) -> (i32, i32, i32) {
    %c0_i32 = arith.constant 0 : i32
    %c0_i32_0 = arith.constant 0 : i32
    %c0_i32_1 = arith.constant 0 : i32
    return %arg0, %c0_i32, %c0_i32_0 : i32, i32, i32
  }
}

</mosaic_0001>

<llo_original>
// kernel: _lambda_.1
$region0: #{_lambda_.1}
  #allocation0 [shape = 'u32[]', space=smem, size = 0x4, offset = 0x4, fixed_abs, tag = 'smem constant byte address 0x4 - core index']
  #allocation1 [shape = 'u32[144,128]{1,0:T(1,128)}', space=vmem, size = 0x12000, scoped, tag = 'internal scratch']
  #allocation2 [shape = 'f32[384,1]{1,0:T(8,128)}', space=vmem, size = 0x30000, scoped, tag = 'scratch operand']
  #allocation3 [shape = 'f32[384,32]{1,0:T(8,128)}', space=vmem, size = 0x30000, scoped, tag = 'scratch operand']
  #allocation4 [shape = 'f32[200,32]{1,0:T(8,128)}', space=vmem, size = 0x19000, scoped, tag = 'scratch operand']
  #allocation5 [shape = 'f32[192,64]{1,0:T(8,128)}', space=vmem, size = 0x18000, scoped, tag = 'scratch operand']
  #allocation6 [shape = 'f32[72,64]{1,0:T(8,128)}', space=vmem, size = 0x9000, scoped, tag = 'scratch operand']
  #allocation7 [shape = 'f32[72,128]{1,0:T(8,128)}', space=vmem, size = 0x9000, scoped, tag = 'scratch operand']
  %s0 = inlined_call_operand.vmem [shape: f32[2,376,1], index: 0, kind: input, shape index: {}]
  %s1 = inlined_call_operand.vmem [shape: f32[8,32], index: 1, kind: input, shape index: {}]
  %s2 = inlined_call_operand.vmem [shape: f32[1,32], index: 2, kind: input, shape index: {}]
  %s3 = inlined_call_operand.vmem [shape: f32[1,32], index: 3, kind: input, shape index: {}]
  %s4 = inlined_call_operand.vmem [shape: f32[256,64], index: 4, kind: input, shape index: {}]
  %s5 = inlined_call_operand.vmem [shape: f32[1,64], index: 5, kind: input, shape index: {}]
  %s6 = inlined_call_operand.vmem [shape: f32[1,64], index: 6, kind: input, shape index: {}]
  %s7 = inlined_call_operand.vmem [shape: f32[512,128], index: 7, kind: input, shape index: {}]
  %s8 = inlined_call_operand.vmem [shape: f32[1,128], index: 8, kind: input, shape index: {}]
  %s9 = inlined_call_operand.vmem [shape: f32[1,128], index: 9, kind: input, shape index: {}]
  %s10 = inlined_call_operand.vmem [shape: f32[128,110], index: 10, kind: input, shape index: {}]
  %s11 = inlined_call_operand.vmem [shape: f32[1,5], index: 11, kind: input, shape index: {}]
  %s12 = inlined_call_operand.vmem [shape: f32[2,22,128], index: 12, kind: output, shape index: {0}]
  %s13 = inlined_call_operand.hbm [shape: f32[2,1,5], index: 13, kind: output, shape index: {1}]
  %14 = xla_tuple %s12, %s13
  %s15 = sld [smem:[#allocation0]]
  $region89: #{_lambda_.1} parent=0
    _
  %s17 = ssub.s32 1, %s15
  %s18 = scalar_select 0, %s17, %s15
  $region1: #{_lambda_.1} parent=0
    #allocation8 [shape = 'u8[1024]{0}', space=vmem, size = 0x400, scoped, tag = 'output window, operand 1']
    #allocation9 [shape = 's32[2]{0}', space=sflag, size = 0x8, scoped, tag = 'scoped memory for _lambda_.1']
    %19 = vsyncpa [#allocation9], 0
    %s20 = scalar_lea.sflag [#allocation9], 1
    %21 = vsyncpa %s20, 0
    loop: start=0, step=1, limit=4
    $region2: #{_lambda_.1} parent=1 // loop_pre_header
      _
    $region3: #{_lambda_.1} parent=1 // loop_header
      %s23 = sphi 0, %s27
      %p24 = scmp.ge.s32.totalorder %s23, 4
      %s33 = sphi 0, %s35
      %s36 = sphi 0, %s33
      %s37 = sphi 0, %s36
      %s53 = sphi 0, %s37
      %s57 = sphi 0, %s57
      %s59 = sphi 0, %s57
      %s60 = sphi 0, %s59
      %s74 = sphi 0, %s60
      %s78 = sphi 0, %s78
      %s80 = sphi 0, %s78
      %s81 = sphi 0, %s80
      %s95 = sphi 0, %s81
      %s99 = sphi 0, %s99
      %s101 = sphi 0, %s99
      %s102 = sphi 0, %s101
      %s116 = sphi 0, %s102
      %s120 = sphi 0, %s120
      %s122 = sphi 0, %s120
      %s123 = sphi 0, %s122
      %s137 = sphi 0, %s123
      %s141 = sphi 0, %s141
      %s143 = sphi 0, %s141
      %s144 = sphi 0, %s143
      %s158 = sphi 0, %s144
      %s162 = sphi 0, %s162
      %s164 = sphi 0, %s162
      %s165 = sphi 0, %s164
      %s179 = sphi 0, %s165
      %s183 = sphi 0, %s183
      %s185 = sphi 0, %s183
      %s186 = sphi 0, %s185
      %s200 = sphi 0, %s186
      %s204 = sphi 0, %s204
      %s206 = sphi 0, %s204
      %s207 = sphi 0, %s206
      %s221 = sphi 0, %s207
      %s225 = sphi 0, %s225
      %s227 = sphi 0, %s225
      %s228 = sphi 0, %s227
      %s242 = sphi 0, %s228
      %s246 = sphi 0, %s246
      %s248 = sphi 0, %s246
      %s249 = sphi 0, %s248
      %s263 = sphi 0, %s249
      %s267 = sphi 0, %s267
      %s269 = sphi 0, %s267
      %s270 = sphi 0, %s269
      %s284 = sphi 0, %s270
      %s290 = sphi 0, %s292
      %s293 = sphi 0, %s290
      %s294 = sphi 0, %s293
      %s310 = sphi 0, %s294
      %s316 = sphi 0, %s318
      %s319 = sphi 0, %s316
      %s320 = sphi 0, %s319
      %s336 = sphi 0, %s320
    $region4: #{_lambda_.1} parent=1 // loop_header_branch
      %26 = sbr.rel (%p24) target = $region8
    $region5: #{_lambda_.1} parent=1 // loop_body
      %s28 = ssub.s32 %s23, 1
      %s29 = ssub.s32 %s23, 2
      %s30 = sadd.s32 %s23, 1
      %s31 = ssub.s32 %s23, %s30
      %p32 = scmp.eq.s32.totalorder %s31, 0
      %s34 = sadd.s32 %s33, 1
      %s35 = scalar_select %p32, %s33, %s34
      %p38 = pneg %p32
      %p39 = scmp.eq.s32.totalorder %s23, 1
      %p40 = por %p38, %p39
      %p41 = scmp.ne.s32.totalorder %s33, %s36
      %p42 = scmp.eq.s32.totalorder %s23, 0
      %p43 = por %p41, %p42
      %p44 = scmp.ne.s32.totalorder %s33, %s36
      %p45 = scmp.eq.s32.totalorder %s28, 1
      %p46 = por %p44, %p45
      %p47 = scmp.ne.s32.totalorder %s36, %s37
      %p48 = scmp.eq.s32.totalorder %s28, 0
      %p49 = por %p47, %p48
      %p50 = scmp.ne.s32.totalorder %s36, %s37
      %p51 = scmp.eq.s32.totalorder %s29, 1
      %p52 = por %p50, %p51
      %p54 = scmp.ne.s32.totalorder %s37, %s53
      %p55 = scmp.eq.s32.totalorder %s29, 0
      %p56 = por %p54, %p55
      %s58 = sadd.s32 %s57, 1
      %p61 = scmp.eq.s32.totalorder %s23, 1
      %p62 = scmp.ne.s32.totalorder %s57, %s59
      %p63 = scmp.eq.s32.totalorder %s23, 0
      %p64 = por %p62, %p63
      %p65 = scmp.ne.s32.totalorder %s57, %s59
      %p66 = scmp.eq.s32.totalorder %s28, 1
      %p67 = por %p65, %p66
      %p68 = scmp.ne.s32.totalorder %s59, %s60
      %p69 = scmp.eq.s32.totalorder %s28, 0
      %p70 = por %p68, %p69
      %p71 = scmp.ne.s32.totalorder %s59, %s60
      %p72 = scmp.eq.s32.totalorder %s29, 1
      %p73 = por %p71, %p72
      %p75 = scmp.ne.s32.totalorder %s60, %s74
      %p76 = scmp.eq.s32.totalorder %s29, 0
      %p77 = por %p75, %p76
      %s79 = sadd.s32 %s78, 1
      %p82 = scmp.eq.s32.totalorder %s23, 1
      %p83 = scmp.ne.s32.totalorder %s78, %s80
      %p84 = scmp.eq.s32.totalorder %s23, 0
      %p85 = por %p83, %p84
      %p86 = scmp.ne.s32.totalorder %s78, %s80
      %p87 = scmp.eq.s32.totalorder %s28, 1
      %p88 = por %p86, %p87
      %p89 = scmp.ne.s32.totalorder %s80, %s81
      %p90 = scmp.eq.s32.totalorder %s28, 0
      %p91 = por %p89, %p90
      %p92 = scmp.ne.s32.totalorder %s80, %s81
      %p93 = scmp.eq.s32.totalorder %s29, 1
      %p94 = por %p92, %p93
      %p96 = scmp.ne.s32.totalorder %s81, %s95
      %p97 = scmp.eq.s32.totalorder %s29, 0
      %p98 = por %p96, %p97
      %s100 = sadd.s32 %s99, 1
      %p103 = scmp.eq.s32.totalorder %s23, 1
      %p104 = scmp.ne.s32.totalorder %s99, %s101
      %p105 = scmp.eq.s32.totalorder %s23, 0
      %p106 = por %p104, %p105
      %p107 = scmp.ne.s32.totalorder %s99, %s101
      %p108 = scmp.eq.s32.totalorder %s28, 1
      %p109 = por %p107, %p108
      %p110 = scmp.ne.s32.totalorder %s101, %s102
      %p111 = scmp.eq.s32.totalorder %s28, 0
      %p112 = por %p110, %p111
      %p113 = scmp.ne.s32.totalorder %s101, %s102
      %p114 = scmp.eq.s32.totalorder %s29, 1
      %p115 = por %p113, %p114
      %p117 = scmp.ne.s32.totalorder %s102, %s116
      %p118 = scmp.eq.s32.totalorder %s29, 0
      %p119 = por %p117, %p118
      %s121 = sadd.s32 %s120, 1
      %p124 = scmp.eq.s32.totalorder %s23, 1
      %p125 = scmp.ne.s32.totalorder %s120, %s122
      %p126 = scmp.eq.s32.totalorder %s23, 0
      %p127 = por %p125, %p126
      %p128 = scmp.ne.s32.totalorder %s120, %s122
      %p129 = scmp.eq.s32.totalorder %s28, 1
      %p130 = por %p128, %p129
      %p131 = scmp.ne.s32.totalorder %s122, %s123
      %p132 = scmp.eq.s32.totalorder %s28, 0
      %p133 = por %p131, %p132
      %p134 = scmp.ne.s32.totalorder %s122, %s123
      %p135 = scmp.eq.s32.totalorder %s29, 1
      %p136 = por %p134, %p135
      %p138 = scmp.ne.s32.totalorder %s123, %s137
      %p139 = scmp.eq.s32.totalorder %s29, 0
      %p140 = por %p138, %p139
      %s142 = sadd.s32 %s141, 1
      %p145 = scmp.eq.s32.totalorder %s23, 1
      %p146 = scmp.ne.s32.totalorder %s141, %s143
      %p147 = scmp.eq.s32.totalorder %s23, 0
      %p148 = por %p146, %p147
      %p149 = scmp.ne.s32.totalorder %s141, %s143
      %p150 = scmp.eq.s32.totalorder %s28, 1
      %p151 = por %p149, %p150
      %p152 = scmp.ne.s32.totalorder %s143, %s144
      %p153 = scmp.eq.s32.totalorder %s28, 0
      %p154 = por %p152, %p153
      %p155 = scmp.ne.s32.totalorder %s143, %s144
      %p156 = scmp.eq.s32.totalorder %s29, 1
      %p157 = por %p155, %p156
      %p159 = scmp.ne.s32.totalorder %s144, %s158
      %p160 = scmp.eq.s32.totalorder %s29, 0
      %p161 = por %p159, %p160
      %s163 = sadd.s32 %s162, 1
      %p166 = scmp.eq.s32.totalorder %s23, 1
      %p167 = scmp.ne.s32.totalorder %s162, %s164
      %p168 = scmp.eq.s32.totalorder %s23, 0
      %p169 = por %p167, %p168
      %p170 = scmp.ne.s32.totalorder %s162, %s164
      %p171 = scmp.eq.s32.totalorder %s28, 1
      %p172 = por %p170, %p171
      %p173 = scmp.ne.s32.totalorder %s164, %s165
      %p174 = scmp.eq.s32.totalorder %s28, 0
      %p175 = por %p173, %p174
      %p176 = scmp.ne.s32.totalorder %s164, %s165
      %p177 = scmp.eq.s32.totalorder %s29, 1
      %p178 = por %p176, %p177
      %p180 = scmp.ne.s32.totalorder %s165, %s179
      %p181 = scmp.eq.s32.totalorder %s29, 0
      %p182 = por %p180, %p181
      %s184 = sadd.s32 %s183, 1
      %p187 = scmp.eq.s32.totalorder %s23, 1
      %p188 = scmp.ne.s32.totalorder %s183, %s185
      %p189 = scmp.eq.s32.totalorder %s23, 0
      %p190 = por %p188, %p189
      %p191 = scmp.ne.s32.totalorder %s183, %s185
      %p192 = scmp.eq.s32.totalorder %s28, 1
      %p193 = por %p191, %p192
      %p194 = scmp.ne.s32.totalorder %s185, %s186
      %p195 = scmp.eq.s32.totalorder %s28, 0
      %p196 = por %p194, %p195
      %p197 = scmp.ne.s32.totalorder %s185, %s186
      %p198 = scmp.eq.s32.totalorder %s29, 1
      %p199 = por %p197, %p198
      %p201 = scmp.ne.s32.totalorder %s186, %s200
      %p202 = scmp.eq.s32.totalorder %s29, 0
      %p203 = por %p201, %p202
      %s205 = sadd.s32 %s204, 1
      %p208 = scmp.eq.s32.totalorder %s23, 1
      %p209 = scmp.ne.s32.totalorder %s204, %s206
      %p210 = scmp.eq.s32.totalorder %s23, 0
      %p211 = por %p209, %p210
      %p212 = scmp.ne.s32.totalorder %s204, %s206
      %p213 = scmp.eq.s32.totalorder %s28, 1
      %p214 = por %p212, %p213
      %p215 = scmp.ne.s32.totalorder %s206, %s207
      %p216 = scmp.eq.s32.totalorder %s28, 0
      %p217 = por %p215, %p216
      %p218 = scmp.ne.s32.totalorder %s206, %s207
      %p219 = scmp.eq.s32.totalorder %s29, 1
      %p220 = por %p218, %p219
      %p222 = scmp.ne.s32.totalorder %s207, %s221
      %p223 = scmp.eq.s32.totalorder %s29, 0
      %p224 = por %p222, %p223
      %s226 = sadd.s32 %s225, 1
      %p229 = scmp.eq.s32.totalorder %s23, 1
      %p230 = scmp.ne.s32.totalorder %s225, %s227
      %p231 = scmp.eq.s32.totalorder %s23, 0
      %p232 = por %p230, %p231
      %p233 = scmp.ne.s32.totalorder %s225, %s227
      %p234 = scmp.eq.s32.totalorder %s28, 1
      %p235 = por %p233, %p234
      %p236 = scmp.ne.s32.totalorder %s227, %s228
      %p237 = scmp.eq.s32.totalorder %s28, 0
      %p238 = por %p236, %p237
      %p239 = scmp.ne.s32.totalorder %s227, %s228
      %p240 = scmp.eq.s32.totalorder %s29, 1
      %p241 = por %p239, %p240
      %p243 = scmp.ne.s32.totalorder %s228, %s242
      %p244 = scmp.eq.s32.totalorder %s29, 0
      %p245 = por %p243, %p244
      %s247 = sadd.s32 %s246, 1
      %p250 = scmp.eq.s32.totalorder %s23, 1
      %p251 = scmp.ne.s32.totalorder %s246, %s248
      %p252 = scmp.eq.s32.totalorder %s23, 0
      %p253 = por %p251, %p252
      %p254 = scmp.ne.s32.totalorder %s246, %s248
      %p255 = scmp.eq.s32.totalorder %s28, 1
      %p256 = por %p254, %p255
      %p257 = scmp.ne.s32.totalorder %s248, %s249
      %p258 = scmp.eq.s32.totalorder %s28, 0
      %p259 = por %p257, %p258
      %p260 = scmp.ne.s32.totalorder %s248, %s249
      %p261 = scmp.eq.s32.totalorder %s29, 1
      %p262 = por %p260, %p261
      %p264 = scmp.ne.s32.totalorder %s249, %s263
      %p265 = scmp.eq.s32.totalorder %s29, 0
      %p266 = por %p264, %p265
      %s268 = sadd.s32 %s267, 1
      %p271 = scmp.eq.s32.totalorder %s23, 1
      %p272 = scmp.ne.s32.totalorder %s267, %s269
      %p273 = scmp.eq.s32.totalorder %s23, 0
      %p274 = por %p272, %p273
      %p275 = scmp.ne.s32.totalorder %s267, %s269
      %p276 = scmp.eq.s32.totalorder %s28, 1
      %p277 = por %p275, %p276
      %p278 = scmp.ne.s32.totalorder %s269, %s270
      %p279 = scmp.eq.s32.totalorder %s28, 0
      %p280 = por %p278, %p279
      %p281 = scmp.ne.s32.totalorder %s269, %s270
      %p282 = scmp.eq.s32.totalorder %s29, 1
      %p283 = por %p281, %p282
      %p285 = scmp.ne.s32.totalorder %s270, %s284
      %p286 = scmp.eq.s32.totalorder %s29, 0
      %p287 = por %p285, %p286
      %s288 = ssub.s32 %s23, %s30
      %p289 = scmp.eq.s32.totalorder %s288, 0
      %s291 = sadd.s32 %s290, 1
      %s292 = scalar_select %p289, %s290, %s291
      %p295 = pneg %p289
      %p296 = scmp.eq.s32.totalorder %s23, 1
      %p297 = por %p295, %p296
      %p298 = scmp.ne.s32.totalorder %s290, %s293
      %p299 = scmp.eq.s32.totalorder %s23, 0
      %p300 = por %p298, %p299
      %p301 = scmp.ne.s32.totalorder %s290, %s293
      %p302 = scmp.eq.s32.totalorder %s28, 1
      %p303 = por %p301, %p302
      %p304 = scmp.ne.s32.totalorder %s293, %s294
      %p305 = scmp.eq.s32.totalorder %s28, 0
      %p306 = por %p304, %p305
      %p307 = scmp.ne.s32.totalorder %s293, %s294
      %p308 = scmp.eq.s32.totalorder %s29, 1
      %p309 = por %p307, %p308
      %p311 = scmp.ne.s32.totalorder %s294, %s310
      %p312 = scmp.eq.s32.totalorder %s29, 0
      %p313 = por %p311, %p312
      %s314 = ssub.s32 %s23, %s30
      %p315 = scmp.eq.s32.totalorder %s314, 0
      %s317 = sadd.s32 %s316, 1
      %s318 = scalar_select %p315, %s316, %s317
      %p321 = pneg %p315
      %p322 = scmp.eq.s32.totalorder %s23, 1
      %p323 = por %p321, %p322
      %p324 = scmp.ne.s32.totalorder %s316, %s319
      %p325 = scmp.eq.s32.totalorder %s23, 0
      %p326 = por %p324, %p325
      %p327 = scmp.ne.s32.totalorder %s316, %s319
      %p328 = scmp.eq.s32.totalorder %s28, 1
      %p329 = por %p327, %p328
      %p330 = scmp.ne.s32.totalorder %s319, %s320
      %p331 = scmp.eq.s32.totalorder %s28, 0
      %p332 = por %p330, %p331
      %p333 = scmp.ne.s32.totalorder %s319, %s320
      %p334 = scmp.eq.s32.totalorder %s29, 1
      %p335 = por %p333, %p334
      %p337 = scmp.ne.s32.totalorder %s320, %s336
      %p338 = scmp.eq.s32.totalorder %s29, 0
      %p339 = por %p337, %p338
      %p340 = scmp.le.s32.totalorder 1, %s23
      %p341 = scmp.lt.s32.totalorder %s23, 3
      %p342 = pnand %p340, %p341
      %p343 = pneg %p342
      // Predicated region
      $region9: #{_lambda_.1} parent=5 // pred_check
        _
      $region10: #{_lambda_.1} parent=5 // pred_check_branch
        %345 = sbr.rel (%p342) target = $region12
      $region11: #{_lambda_.1} parent=5 // pred_region
        %s346 = ssub.s32 %s23, 1
        // Predicated region
        $region13: #{_lambda_.1} parent=11 // pred_check
          %p347 = pneg %p70
        $region14: #{_lambda_.1} parent=11 // pred_check_branch
          %349 = sbr.rel (%p347) target = $region16
        $region15: #{_lambda_.1} parent=11 // pred_region
          _
        $region16: #{_lambda_.1} parent=11 // pred_fallthru
          _
        // Predicated region
        $region17: #{_lambda_.1} parent=11 // pred_check
          %p350 = pneg %p91
        $region18: #{_lambda_.1} parent=11 // pred_check_branch
          %352 = sbr.rel (%p350) target = $region20
        $region19: #{_lambda_.1} parent=11 // pred_region
          _
        $region20: #{_lambda_.1} parent=11 // pred_fallthru
          _
        // Predicated region
        $region21: #{_lambda_.1} parent=11 // pred_check
          %p353 = pneg %p112
        $region22: #{_lambda_.1} parent=11 // pred_check_branch
          %355 = sbr.rel (%p353) target = $region24
        $region23: #{_lambda_.1} parent=11 // pred_region
          _
        $region24: #{_lambda_.1} parent=11 // pred_fallthru
          _
        // Predicated region
        $region25: #{_lambda_.1} parent=11 // pred_check
          %p356 = pneg %p133
        $region26: #{_lambda_.1} parent=11 // pred_check_branch
          %358 = sbr.rel (%p356) target = $region28
        $region27: #{_lambda_.1} parent=11 // pred_region
          _
        $region28: #{_lambda_.1} parent=11 // pred_fallthru
          _
        // Predicated region
        $region29: #{_lambda_.1} parent=11 // pred_check
          %p359 = pneg %p154
        $region30: #{_lambda_.1} parent=11 // pred_check_branch
          %361 = sbr.rel (%p359) target = $region32
        $region31: #{_lambda_.1} parent=11 // pred_region
          _
        $region32: #{_lambda_.1} parent=11 // pred_fallthru
          _
        // Predicated region
        $region33: #{_lambda_.1} parent=11 // pred_check
          %p362 = pneg %p175
        $region34: #{_lambda_.1} parent=11 // pred_check_branch
          %364 = sbr.rel (%p362) target = $region36
        $region35: #{_lambda_.1} parent=11 // pred_region
          _
        $region36: #{_lambda_.1} parent=11 // pred_fallthru
          _
        // Predicated region
        $region37: #{_lambda_.1} parent=11 // pred_check
          %p365 = pneg %p196
        $region38: #{_lambda_.1} parent=11 // pred_check_branch
          %367 = sbr.rel (%p365) target = $region40
        $region39: #{_lambda_.1} parent=11 // pred_region
          _
        $region40: #{_lambda_.1} parent=11 // pred_fallthru
          _
        // Predicated region
        $region41: #{_lambda_.1} parent=11 // pred_check
          %p368 = pneg %p217
        $region42: #{_lambda_.1} parent=11 // pred_check_branch
          %370 = sbr.rel (%p368) target = $region44
        $region43: #{_lambda_.1} parent=11 // pred_region
          _
        $region44: #{_lambda_.1} parent=11 // pred_fallthru
          _
        // Predicated region
        $region45: #{_lambda_.1} parent=11 // pred_check
          %p371 = pneg %p238
        $region46: #{_lambda_.1} parent=11 // pred_check_branch
          %373 = sbr.rel (%p371) target = $region48
        $region47: #{_lambda_.1} parent=11 // pred_region
          _
        $region48: #{_lambda_.1} parent=11 // pred_fallthru
          _
        // Predicated region
        $region49: #{_lambda_.1} parent=11 // pred_check
          %p374 = pneg %p259
        $region50: #{_lambda_.1} parent=11 // pred_check_branch
          %376 = sbr.rel (%p374) target = $region52
        $region51: #{_lambda_.1} parent=11 // pred_region
          _
        $region52: #{_lambda_.1} parent=11 // pred_fallthru
          _
        // Predicated region
        $region53: #{_lambda_.1} parent=11 // pred_check
          %p377 = pneg %p280
        $region54: #{_lambda_.1} parent=11 // pred_check_branch
          %379 = sbr.rel (%p377) target = $region56
        $region55: #{_lambda_.1} parent=11 // pred_region
          _
        $region56: #{_lambda_.1} parent=11 // pred_fallthru
          _
      $region12: #{_lambda_.1} parent=5 // pred_fallthru
        _
      %p380 = scmp.lt.s32.totalorder %s23, 2
      // Predicated region
      $region57: #{_lambda_.1} parent=5 // pred_check
        %p381 = pneg %p380
      $region58: #{_lambda_.1} parent=5 // pred_check_branch
        %383 = sbr.rel (%p381) target = $region60
      $region59: #{_lambda_.1} parent=5 // pred_region
        // Predicated region
        $region61: #{_lambda_.1} parent=59 // pred_check
          %p384 = pneg %p43
        $region62: #{_lambda_.1} parent=59 // pred_check_branch
          %386 = sbr.rel (%p384) target = $region64
        $region63: #{_lambda_.1} parent=59 // pred_region
          %p387 = scmp.lt.s32.totalorder %s23, 1
          %s388 = scalar_select %p387, %s23, 1
          %s389 = smul.addr %s388, 47
          %s390 = smul.addr %s389, 8
          %s391 = scalar_lea.vmem %s0, %s390
        $region64: #{_lambda_.1} parent=59 // pred_fallthru
          _
      $region60: #{_lambda_.1} parent=5 // pred_fallthru
        _
      %p392 = scmp.le.s32.totalorder 1, %s23
      %p393 = scmp.lt.s32.totalorder %s23, 3
      %p394 = pnand %p392, %p393
      %p395 = pneg %p394
      // Predicated region
      $region65: #{_lambda_.1} parent=5 // pred_check
        _
      $region66: #{_lambda_.1} parent=5 // pred_check_branch
        %397 = sbr.rel (%p394) target = $region68
      $region67: #{_lambda_.1} parent=5 // pred_region
        %s398 = ssub.s32 %s23, 1
        %p399 = scmp.lt.s32.totalorder %s28, 1
        %s400 = scalar_select %p399, %s28, 1
        %s401 = smul.addr %s400, 47
        %s402 = smul.addr %s401, 8
        %s403 = scalar_lea.vmem %s0, %s402
        %p404 = pneg %p49
        %p405 = pneg %p46
        %p406 = pneg %p70
        %p407 = pneg %p67
        %p408 = pneg %p91
        %p409 = pneg %p88
        %p410 = pneg %p112
        %p411 = pneg %p109
        %p412 = pneg %p133
        %p413 = pneg %p130
        %p414 = pneg %p154
        %p415 = pneg %p151
        %p416 = pneg %p175
        %p417 = pneg %p172
        %p418 = pneg %p196
        %p419 = pneg %p193
        %p420 = pneg %p217
        %p421 = pneg %p214
        %p422 = pneg %p238
        %p423 = pneg %p235
        %p424 = pneg %p259
        %p425 = pneg %p256
        %p426 = pneg %p280
        %p427 = pneg %p277
        %p428 = pneg %p306
        %p429 = pneg %p303
        %p430 = scmp.lt.s32.totalorder %s28, 1
        %s431 = scalar_select %p430, %s28, 1
        %s432 = smul.addr %s431, 3
        %s433 = smul.addr %s432, 8
        %s434 = scalar_lea.vmem %s12, %s433
        %p435 = pneg %p332
        %p436 = pneg %p329
        %s437 = sand.u32 %s319, 1
        %s438 = scalar_lea.sflag [#allocation9], %s437
        %s439 = sand.u32 %s319, 1
        %s440 = scalar_lea.vmem [#allocation8], %s439
        %p441 = scmp.lt.s32.totalorder %s28, 1
        %s442 = scalar_select %p441, %s28, 1
        %s443 = smul.addr %s442, 47
        %s444 = smul.addr %s443, 8
        %s445 = scalar_lea.vmem %s0, %s444
        %p446 = scmp.lt.s32.totalorder %s28, 1
        %s447 = scalar_select %p446, %s28, 1
        %s448 = smul.addr %s447, 3
        %s449 = smul.addr %s448, 8
        %s450 = scalar_lea.vmem %s12, %s449
        %v451 = vld [vmem:[%s445] sm:$0xff]
        %v452 = vld [vmem:[%s445 + $0x8] sm:$0xff]
        %v453 = vld [vmem:[%s445 + $0x10] sm:$0xff]
        %v454 = vld [vmem:[%s445 + $0x18] sm:$0xff]
        %v455 = vld [vmem:[%s445 + $0x20] sm:$0xff]
        %v456 = vld [vmem:[%s445 + $0x28] sm:$0xff]
        %v457 = vld [vmem:[%s445 + $0x30] sm:$0xff]
        %v458 = vld [vmem:[%s445 + $0x38] sm:$0xff]
        %v459 = vld [vmem:[%s445 + $0x40] sm:$0xff]
        %v460 = vld [vmem:[%s445 + $0x48] sm:$0xff]
        %v461 = vld [vmem:[%s445 + $0x50] sm:$0xff]
        %v462 = vld [vmem:[%s445 + $0x58] sm:$0xff]
        %v463 = vld [vmem:[%s445 + $0x60] sm:$0xff]
        %v464 = vld [vmem:[%s445 + $0x68] sm:$0xff]
        %v465 = vld [vmem:[%s445 + $0x70] sm:$0xff]
        %v466 = vld [vmem:[%s445 + $0x78] sm:$0xff]
        %v467 = vld [vmem:[%s445 + $0x80] sm:$0xff]
        %v468 = vld [vmem:[%s445 + $0x88] sm:$0xff]
        %v469 = vld [vmem:[%s445 + $0x90] sm:$0xff]
        %v470 = vld [vmem:[%s445 + $0x98] sm:$0xff]
        %v471 = vld [vmem:[%s445 + $0xa0] sm:$0xff]
        %v472 = vld [vmem:[%s445 + $0xa8] sm:$0xff]
        %v473 = vld [vmem:[%s445 + $0xb0] sm:$0xff]
        %v474 = vld [vmem:[%s445 + $0xb8] sm:$0xff]
        %v475 = vld [vmem:[%s445 + $0xc0] sm:$0xff]
        %v476 = vld [vmem:[%s445 + $0xc8] sm:$0xff]
        %v477 = vld [vmem:[%s445 + $0xd0] sm:$0xff]
        %v478 = vld [vmem:[%s445 + $0xd8] sm:$0xff]
        %v479 = vld [vmem:[%s445 + $0xe0] sm:$0xff]
        %v480 = vld [vmem:[%s445 + $0xe8] sm:$0xff]
        %v481 = vld [vmem:[%s445 + $0xf0] sm:$0xff]
        %v482 = vld [vmem:[%s445 + $0xf8] sm:$0xff]
        %v483 = vld [vmem:[%s445 + $0x100] sm:$0xff]
        %v484 = vld [vmem:[%s445 + $0x108] sm:$0xff]
        %v485 = vld [vmem:[%s445 + $0x110] sm:$0xff]
        %v486 = vld [vmem:[%s445 + $0x118] sm:$0xff]
        %v487 = vld [vmem:[%s445 + $0x120] sm:$0xff]
        %v488 = vld [vmem:[%s445 + $0x128] sm:$0xff]
        %v489 = vld [vmem:[%s445 + $0x130] sm:$0xff]
        %v490 = vld [vmem:[%s445 + $0x138] sm:$0xff]
        %v491 = vld [vmem:[%s445 + $0x140] sm:$0xff]
        %v492 = vld [vmem:[%s445 + $0x148] sm:$0xff]
        %v493 = vld [vmem:[%s445 + $0x150] sm:$0xff]
        %v494 = vld [vmem:[%s445 + $0x158] sm:$0xff]
        %v495 = vld [vmem:[%s445 + $0x160] sm:$0xff]
        %v496 = vld [vmem:[%s445 + $0x168] sm:$0xff]
        %v497 = vld [vmem:[%s445 + $0x170] sm:$0xff]
        %vm498 = vcmask 7168
        %499 = vst.msk [vmem:[#allocation2] sm:$0xff] %vm498, 0.0
        %500 = vst.msk [vmem:[#allocation2 + $0x8] sm:$0xff] %vm498, 0.0
        %501 = vst.msk [vmem:[#allocation2 + $0x10] sm:$0xff] %vm498, 0.0
        %502 = vst.msk [vmem:[#allocation2 + $0x18] sm:$0xff] %vm498, 0.0
        %503 = vst.msk [vmem:[#allocation2 + $0x20] sm:$0xff] %vm498, 0.0
        %504 = vst.msk [vmem:[#allocation2 + $0x28] sm:$0xff] %vm498, 0.0
        %505 = vst.msk [vmem:[#allocation2 + $0x30] sm:$0xff] %vm498, 0.0
        %506 = vst.msk [vmem:[#allocation2 + $0x38] sm:$0xff] %vm498, 0.0
        %507 = vst.msk [vmem:[#allocation2 + $0x40] sm:$0xff] %vm498, 0.0
        %508 = vst.msk [vmem:[#allocation2 + $0x48] sm:$0xff] %vm498, 0.0
        %509 = vst.msk [vmem:[#allocation2 + $0x50] sm:$0xff] %vm498, 0.0
        %510 = vst.msk [vmem:[#allocation2 + $0x58] sm:$0xff] %vm498, 0.0
        %511 = vst.msk [vmem:[#allocation2 + $0x60] sm:$0xff] %vm498, 0.0
        %512 = vst.msk [vmem:[#allocation2 + $0x68] sm:$0xff] %vm498, 0.0
        %513 = vst.msk [vmem:[#allocation2 + $0x70] sm:$0xff] %vm498, 0.0
        %514 = vst.msk [vmem:[#allocation2 + $0x78] sm:$0xff] %vm498, 0.0
        %515 = vst.msk [vmem:[#allocation2 + $0x80] sm:$0xff] %vm498, 0.0
        %516 = vst.msk [vmem:[#allocation2 + $0x88] sm:$0xff] %vm498, 0.0
        %517 = vst.msk [vmem:[#allocation2 + $0x90] sm:$0xff] %vm498, 0.0
        %518 = vst.msk [vmem:[#allocation2 + $0x98] sm:$0xff] %vm498, 0.0
        %519 = vst.msk [vmem:[#allocation2 + $0xa0] sm:$0xff] %vm498, 0.0
        %520 = vst.msk [vmem:[#allocation2 + $0xa8] sm:$0xff] %vm498, 0.0
        %521 = vst.msk [vmem:[#allocation2 + $0xb0] sm:$0xff] %vm498, 0.0
        %522 = vst.msk [vmem:[#allocation2 + $0xb8] sm:$0xff] %vm498, 0.0
        %523 = vst.msk [vmem:[#allocation2 + $0xc0] sm:$0xff] %vm498, 0.0
        %524 = vst.msk [vmem:[#allocation2 + $0xc8] sm:$0xff] %vm498, 0.0
        %525 = vst.msk [vmem:[#allocation2 + $0xd0] sm:$0xff] %vm498, 0.0
        %526 = vst.msk [vmem:[#allocation2 + $0xd8] sm:$0xff] %vm498, 0.0
        %527 = vst.msk [vmem:[#allocation2 + $0xe0] sm:$0xff] %vm498, 0.0
        %528 = vst.msk [vmem:[#allocation2 + $0xe8] sm:$0xff] %vm498, 0.0
        %529 = vst.msk [vmem:[#allocation2 + $0xf0] sm:$0xff] %vm498, 0.0
        %530 = vst.msk [vmem:[#allocation2 + $0xf8] sm:$0xff] %vm498, 0.0
        %531 = vst.msk [vmem:[#allocation2 + $0x100] sm:$0xff] %vm498, 0.0
        %532 = vst.msk [vmem:[#allocation2 + $0x108] sm:$0xff] %vm498, 0.0
        %533 = vst.msk [vmem:[#allocation2 + $0x110] sm:$0xff] %vm498, 0.0
        %534 = vst.msk [vmem:[#allocation2 + $0x118] sm:$0xff] %vm498, 0.0
        %535 = vst.msk [vmem:[#allocation2 + $0x120] sm:$0xff] %vm498, 0.0
        %536 = vst.msk [vmem:[#allocation2 + $0x128] sm:$0xff] %vm498, 0.0
        %537 = vst.msk [vmem:[#allocation2 + $0x130] sm:$0xff] %vm498, 0.0
        %538 = vst.msk [vmem:[#allocation2 + $0x138] sm:$0xff] %vm498, 0.0
        %539 = vst.msk [vmem:[#allocation2 + $0x140] sm:$0xff] %vm498, 0.0
        %540 = vst.msk [vmem:[#allocation2 + $0x148] sm:$0xff] %vm498, 0.0
        %541 = vst.msk [vmem:[#allocation2 + $0x150] sm:$0xff] %vm498, 0.0
        %542 = vst.msk [vmem:[#allocation2 + $0x158] sm:$0xff] %vm498, 0.0
        %543 = vst.msk [vmem:[#allocation2 + $0x160] sm:$0xff] %vm498, 0.0
        %544 = vst.msk [vmem:[#allocation2 + $0x168] sm:$0xff] %vm498, 0.0
        %545 = vst.msk [vmem:[#allocation2 + $0x170] sm:$0xff] %vm498, 0.0
        %546 = vst.msk [vmem:[#allocation2 + $0x178] sm:$0xff] %vm498, 0.0
        %547 = vst.msk [vmem:[#allocation2 + $0x4] sm:$0xff] %vm498, %v451
        %548 = vst.msk [vmem:[#allocation2 + $0xc] sm:$0xff] %vm498, %v452
        %549 = vst.msk [vmem:[#allocation2 + $0x14] sm:$0xff] %vm498, %v453
        %550 = vst.msk [vmem:[#allocation2 + $0x1c] sm:$0xff] %vm498, %v454
        %551 = vst.msk [vmem:[#allocation2 + $0x24] sm:$0xff] %vm498, %v455
        %552 = vst.msk [vmem:[#allocation2 + $0x2c] sm:$0xff] %vm498, %v456
        %553 = vst.msk [vmem:[#allocation2 + $0x34] sm:$0xff] %vm498, %v457
        %554 = vst.msk [vmem:[#allocation2 + $0x3c] sm:$0xff] %vm498, %v458
        %555 = vst.msk [vmem:[#allocation2 + $0x44] sm:$0xff] %vm498, %v459
        %556 = vst.msk [vmem:[#allocation2 + $0x4c] sm:$0xff] %vm498, %v460
        %557 = vst.msk [vmem:[#allocation2 + $0x54] sm:$0xff] %vm498, %v461
        %558 = vst.msk [vmem:[#allocation2 + $0x5c] sm:$0xff] %vm498, %v462
        %559 = vst.msk [vmem:[#allocation2 + $0x64] sm:$0xff] %vm498, %v463
        %560 = vst.msk [vmem:[#allocation2 + $0x6c] sm:$0xff] %vm498, %v464
        %561 = vst.msk [vmem:[#allocation2 + $0x74] sm:$0xff] %vm498, %v465
        %562 = vst.msk [vmem:[#allocation2 + $0x7c] sm:$0xff] %vm498, %v466
        %563 = vst.msk [vmem:[#allocation2 + $0x84] sm:$0xff] %vm498, %v467
        %564 = vst.msk [vmem:[#allocation2 + $0x8c] sm:$0xff] %vm498, %v468
        %565 = vst.msk [vmem:[#allocation2 + $0x94] sm:$0xff] %vm498, %v469
        %566 = vst.msk [vmem:[#allocation2 + $0x9c] sm:$0xff] %vm498, %v470
        %567 = vst.msk [vmem:[#allocation2 + $0xa4] sm:$0xff] %vm498, %v471
        %568 = vst.msk [vmem:[#allocation2 + $0xac] sm:$0xff] %vm498, %v472
        %569 = vst.msk [vmem:[#allocation2 + $0xb4] sm:$0xff] %vm498, %v473
        %570 = vst.msk [vmem:[#allocation2 + $0xbc] sm:$0xff] %vm498, %v474
        %571 = vst.msk [vmem:[#allocation2 + $0xc4] sm:$0xff] %vm498, %v475
        %572 = vst.msk [vmem:[#allocation2 + $0xcc] sm:$0xff] %vm498, %v476
        %573 = vst.msk [vmem:[#allocation2 + $0xd4] sm:$0xff] %vm498, %v477
        %574 = vst.msk [vmem:[#allocation2 + $0xdc] sm:$0xff] %vm498, %v478
        %575 = vst.msk [vmem:[#allocation2 + $0xe4] sm:$0xff] %vm498, %v479
        %576 = vst.msk [vmem:[#allocation2 + $0xec] sm:$0xff] %vm498, %v480
        %577 = vst.msk [vmem:[#allocation2 + $0xf4] sm:$0xff] %vm498, %v481
        %578 = vst.msk [vmem:[#allocation2 + $0xfc] sm:$0xff] %vm498, %v482
        %579 = vst.msk [vmem:[#allocation2 + $0x104] sm:$0xff] %vm498, %v483
        %580 = vst.msk [vmem:[#allocation2 + $0x10c] sm:$0xff] %vm498, %v484
        %581 = vst.msk [vmem:[#allocation2 + $0x114] sm:$0xff] %vm498, %v485
        %582 = vst.msk [vmem:[#allocation2 + $0x11c] sm:$0xff] %vm498, %v486
        %583 = vst.msk [vmem:[#allocation2 + $0x124] sm:$0xff] %vm498, %v487
        %584 = vst.msk [vmem:[#allocation2 + $0x12c] sm:$0xff] %vm498, %v488
        %585 = vst.msk [vmem:[#allocation2 + $0x134] sm:$0xff] %vm498, %v489
        %586 = vst.msk [vmem:[#allocation2 + $0x13c] sm:$0xff] %vm498, %v490
        %587 = vst.msk [vmem:[#allocation2 + $0x144] sm:$0xff] %vm498, %v491
        %588 = vst.msk [vmem:[#allocation2 + $0x14c] sm:$0xff] %vm498, %v492
        %589 = vst.msk [vmem:[#allocation2 + $0x154] sm:$0xff] %vm498, %v493
        %590 = vst.msk [vmem:[#allocation2 + $0x15c] sm:$0xff] %vm498, %v494
        %591 = vst.msk [vmem:[#allocation2 + $0x164] sm:$0xff] %vm498, %v495
        %592 = vst.msk [vmem:[#allocation2 + $0x16c] sm:$0xff] %vm498, %v496
        %593 = vst.msk [vmem:[#allocation2 + $0x174] sm:$0xff] %vm498, %v497
        %v594 = vld [vmem:[#allocation2] sm:$0xff]
        %v595 = vld [vmem:[#allocation2 + $0x8] sm:$0xff]
        %v596 = vld [vmem:[#allocation2 + $0x10] sm:$0xff]
        %v597 = vld [vmem:[#allocation2 + $0x18] sm:$0xff]
        %v598 = vld [vmem:[#allocation2 + $0x20] sm:$0xff]
        %v599 = vld [vmem:[#allocation2 + $0x28] sm:$0xff]
        %v600 = vld [vmem:[#allocation2 + $0x30] sm:$0xff]
        %v601 = vld [vmem:[#allocation2 + $0x38] sm:$0xff]
        %v602 = vld [vmem:[#allocation2 + $0x40] sm:$0xff]
        %v603 = vld [vmem:[#allocation2 + $0x48] sm:$0xff]
        %v604 = vld [vmem:[#allocation2 + $0x50] sm:$0xff]
        %v605 = vld [vmem:[#allocation2 + $0x58] sm:$0xff]
        %v606 = vld [vmem:[#allocation2 + $0x60] sm:$0xff]
        %v607 = vld [vmem:[#allocation2 + $0x68] sm:$0xff]
        %v608 = vld [vmem:[#allocation2 + $0x70] sm:$0xff]
        %v609 = vld [vmem:[#allocation2 + $0x78] sm:$0xff]
        %v610 = vld [vmem:[#allocation2 + $0x80] sm:$0xff]
        %v611 = vld [vmem:[#allocation2 + $0x88] sm:$0xff]
        %v612 = vld [vmem:[#allocation2 + $0x90] sm:$0xff]
        %v613 = vld [vmem:[#allocation2 + $0x98] sm:$0xff]
        %v614 = vld [vmem:[#allocation2 + $0xa0] sm:$0xff]
        %v615 = vld [vmem:[#allocation2 + $0xa8] sm:$0xff]
        %v616 = vld [vmem:[#allocation2 + $0xb0] sm:$0xff]
        %v617 = vld [vmem:[#allocation2 + $0xb8] sm:$0xff]
        %v618 = vld [vmem:[#allocation2 + $0xc0] sm:$0xff]
        %v619 = vld [vmem:[#allocation2 + $0xc8] sm:$0xff]
        %v620 = vld [vmem:[#allocation2 + $0xd0] sm:$0xff]
        %v621 = vld [vmem:[#allocation2 + $0xd8] sm:$0xff]
        %v622 = vld [vmem:[#allocation2 + $0xe0] sm:$0xff]
        %v623 = vld [vmem:[#allocation2 + $0xe8] sm:$0xff]
        %v624 = vld [vmem:[#allocation2 + $0xf0] sm:$0xff]
        %v625 = vld [vmem:[#allocation2 + $0xf8] sm:$0xff]
        %v626 = vld [vmem:[#allocation2 + $0x100] sm:$0xff]
        %v627 = vld [vmem:[#allocation2 + $0x108] sm:$0xff]
        %v628 = vld [vmem:[#allocation2 + $0x110] sm:$0xff]
        %v629 = vld [vmem:[#allocation2 + $0x118] sm:$0xff]
        %v630 = vld [vmem:[#allocation2 + $0x120] sm:$0xff]
        %v631 = vld [vmem:[#allocation2 + $0x128] sm:$0xff]
        %v632 = vld [vmem:[#allocation2 + $0x130] sm:$0xff]
        %v633 = vld [vmem:[#allocation2 + $0x138] sm:$0xff]
        %v634 = vld [vmem:[#allocation2 + $0x140] sm:$0xff]
        %v635 = vld [vmem:[#allocation2 + $0x148] sm:$0xff]
        %v636 = vld [vmem:[#allocation2 + $0x150] sm:$0xff]
        %v637 = vld [vmem:[#allocation2 + $0x158] sm:$0xff]
        %v638 = vld [vmem:[#allocation2 + $0x160] sm:$0xff]
        %v639 = vld [vmem:[#allocation2 + $0x168] sm:$0xff]
        %v640 = vld [vmem:[#allocation2 + $0x170] sm:$0xff]
        %v641 = vld [vmem:[#allocation2 + $0x178] sm:$0x1]
        %v642 = vld [vmem:[#allocation2 + $0x1] sm:$0xff]
        %v643 = vld [vmem:[#allocation2 + $0x9] sm:$0xff]
        %v644 = vld [vmem:[#allocation2 + $0x11] sm:$0xff]
        %v645 = vld [vmem:[#allocation2 + $0x19] sm:$0xff]
        %v646 = vld [vmem:[#allocation2 + $0x21] sm:$0xff]
        %v647 = vld [vmem:[#allocation2 + $0x29] sm:$0xff]
        %v648 = vld [vmem:[#allocation2 + $0x31] sm:$0xff]
        %v649 = vld [vmem:[#allocation2 + $0x39] sm:$0xff]
        %v650 = vld [vmem:[#allocation2 + $0x41] sm:$0xff]
        %v651 = vld [vmem:[#allocation2 + $0x49] sm:$0xff]
        %v652 = vld [vmem:[#allocation2 + $0x51] sm:$0xff]
        %v653 = vld [vmem:[#allocation2 + $0x59] sm:$0xff]
        %v654 = vld [vmem:[#allocation2 + $0x61] sm:$0xff]
        %v655 = vld [vmem:[#allocation2 + $0x69] sm:$0xff]
        %v656 = vld [vmem:[#allocation2 + $0x71] sm:$0xff]
        %v657 = vld [vmem:[#allocation2 + $0x79] sm:$0xff]
        %v658 = vld [vmem:[#allocation2 + $0x81] sm:$0xff]
        %v659 = vld [vmem:[#allocation2 + $0x89] sm:$0xff]
        %v660 = vld [vmem:[#allocation2 + $0x91] sm:$0xff]
        %v661 = vld [vmem:[#allocation2 + $0x99] sm:$0xff]
        %v662 = vld [vmem:[#allocation2 + $0xa1] sm:$0xff]
        %v663 = vld [vmem:[#allocation2 + $0xa9] sm:$0xff]
        %v664 = vld [vmem:[#allocation2 + $0xb1] sm:$0xff]
        %v665 = vld [vmem:[#allocation2 + $0xb9] sm:$0xff]
        %v666 = vld [vmem:[#allocation2 + $0xc1] sm:$0xff]
        %v667 = vld [vmem:[#allocation2 + $0xc9] sm:$0xff]
        %v668 = vld [vmem:[#allocation2 + $0xd1] sm:$0xff]
        %v669 = vld [vmem:[#allocation2 + $0xd9] sm:$0xff]
        %v670 = vld [vmem:[#allocation2 + $0xe1] sm:$0xff]
        %v671 = vld [vmem:[#allocation2 + $0xe9] sm:$0xff]
        %v672 = vld [vmem:[#allocation2 + $0xf1] sm:$0xff]
        %v673 = vld [vmem:[#allocation2 + $0xf9] sm:$0xff]
        %v674 = vld [vmem:[#allocation2 + $0x101] sm:$0xff]
        %v675 = vld [vmem:[#allocation2 + $0x109] sm:$0xff]
        %v676 = vld [vmem:[#allocation2 + $0x111] sm:$0xff]
        %v677 = vld [vmem:[#allocation2 + $0x119] sm:$0xff]
        %v678 = vld [vmem:[#allocation2 + $0x121] sm:$0xff]
        %v679 = vld [vmem:[#allocation2 + $0x129] sm:$0xff]
        %v680 = vld [vmem:[#allocation2 + $0x131] sm:$0xff]
        %v681 = vld [vmem:[#allocation2 + $0x139] sm:$0xff]
        %v682 = vld [vmem:[#allocation2 + $0x141] sm:$0xff]
        %v683 = vld [vmem:[#allocation2 + $0x149] sm:$0xff]
        %v684 = vld [vmem:[#allocation2 + $0x151] sm:$0xff]
        %v685 = vld [vmem:[#allocation2 + $0x159] sm:$0xff]
        %v686 = vld [vmem:[#allocation2 + $0x161] sm:$0xff]
        %v687 = vld [vmem:[#allocation2 + $0x169] sm:$0xff]
        %v688 = vld [vmem:[#allocation2 + $0x171] sm:$0xff]
        %v689 = vld [vmem:[#allocation2 + $0x179] sm:$0x1]
        %v690 = vld [vmem:[#allocation2 + $0x2] sm:$0xff]
        %v691 = vld [vmem:[#allocation2 + $0xa] sm:$0xff]
        %v692 = vld [vmem:[#allocation2 + $0x12] sm:$0xff]
        %v693 = vld [vmem:[#allocation2 + $0x1a] sm:$0xff]
        %v694 = vld [vmem:[#allocation2 + $0x22] sm:$0xff]
        %v695 = vld [vmem:[#allocation2 + $0x2a] sm:$0xff]
        %v696 = vld [vmem:[#allocation2 + $0x32] sm:$0xff]
        %v697 = vld [vmem:[#allocation2 + $0x3a] sm:$0xff]
        %v698 = vld [vmem:[#allocation2 + $0x42] sm:$0xff]
        %v699 = vld [vmem:[#allocation2 + $0x4a] sm:$0xff]
        %v700 = vld [vmem:[#allocation2 + $0x52] sm:$0xff]
        %v701 = vld [vmem:[#allocation2 + $0x5a] sm:$0xff]
        %v702 = vld [vmem:[#allocation2 + $0x62] sm:$0xff]
        %v703 = vld [vmem:[#allocation2 + $0x6a] sm:$0xff]
        %v704 = vld [vmem:[#allocation2 + $0x72] sm:$0xff]
        %v705 = vld [vmem:[#allocation2 + $0x7a] sm:$0xff]
        %v706 = vld [vmem:[#allocation2 + $0x82] sm:$0xff]
        %v707 = vld [vmem:[#allocation2 + $0x8a] sm:$0xff]
        %v708 = vld [vmem:[#allocation2 + $0x92] sm:$0xff]
        %v709 = vld [vmem:[#allocation2 + $0x9a] sm:$0xff]
        %v710 = vld [vmem:[#allocation2 + $0xa2] sm:$0xff]
        %v711 = vld [vmem:[#allocation2 + $0xaa] sm:$0xff]
        %v712 = vld [vmem:[#allocation2 + $0xb2] sm:$0xff]
        %v713 = vld [vmem:[#allocation2 + $0xba] sm:$0xff]
        %v714 = vld [vmem:[#allocation2 + $0xc2] sm:$0xff]
        %v715 = vld [vmem:[#allocation2 + $0xca] sm:$0xff]
        %v716 = vld [vmem:[#allocation2 + $0xd2] sm:$0xff]
        %v717 = vld [vmem:[#allocation2 + $0xda] sm:$0xff]
        %v718 = vld [vmem:[#allocation2 + $0xe2] sm:$0xff]
        %v719 = vld [vmem:[#allocation2 + $0xea] sm:$0xff]
        %v720 = vld [vmem:[#allocation2 + $0xf2] sm:$0xff]
        %v721 = vld [vmem:[#allocation2 + $0xfa] sm:$0xff]
        %v722 = vld [vmem:[#allocation2 + $0x102] sm:$0xff]
        %v723 = vld [vmem:[#allocation2 + $0x10a] sm:$0xff]
        %v724 = vld [vmem:[#allocation2 + $0x112] sm:$0xff]
        %v725 = vld [vmem:[#allocation2 + $0x11a] sm:$0xff]
        %v726 = vld [vmem:[#allocation2 + $0x122] sm:$0xff]
        %v727 = vld [vmem:[#allocation2 + $0x12a] sm:$0xff]
        %v728 = vld [vmem:[#allocation2 + $0x132] sm:$0xff]
        %v729 = vld [vmem:[#allocation2 + $0x13a] sm:$0xff]
        %v730 = vld [vmem:[#allocation2 + $0x142] sm:$0xff]
        %v731 = vld [vmem:[#allocation2 + $0x14a] sm:$0xff]
        %v732 = vld [vmem:[#allocation2 + $0x152] sm:$0xff]
        %v733 = vld [vmem:[#allocation2 + $0x15a] sm:$0xff]
        %v734 = vld [vmem:[#allocation2 + $0x162] sm:$0xff]
        %v735 = vld [vmem:[#allocation2 + $0x16a] sm:$0xff]
        %v736 = vld [vmem:[#allocation2 + $0x172] sm:$0xff]
        %v737 = vld [vmem:[#allocation2 + $0x17a] sm:$0x1]
        %v738 = vld [vmem:[#allocation2 + $0x3] sm:$0xff]
        %v739 = vld [vmem:[#allocation2 + $0xb] sm:$0xff]
        %v740 = vld [vmem:[#allocation2 + $0x13] sm:$0xff]
        %v741 = vld [vmem:[#allocation2 + $0x1b] sm:$0xff]
        %v742 = vld [vmem:[#allocation2 + $0x23] sm:$0xff]
        %v743 = vld [vmem:[#allocation2 + $0x2b] sm:$0xff]
        %v744 = vld [vmem:[#allocation2 + $0x33] sm:$0xff]
        %v745 = vld [vmem:[#allocation2 + $0x3b] sm:$0xff]
        %v746 = vld [vmem:[#allocation2 + $0x43] sm:$0xff]
        %v747 = vld [vmem:[#allocation2 + $0x4b] sm:$0xff]
        %v748 = vld [vmem:[#allocation2 + $0x53] sm:$0xff]
        %v749 = vld [vmem:[#allocation2 + $0x5b] sm:$0xff]
        %v750 = vld [vmem:[#allocation2 + $0x63] sm:$0xff]
        %v751 = vld [vmem:[#allocation2 + $0x6b] sm:$0xff]
        %v752 = vld [vmem:[#allocation2 + $0x73] sm:$0xff]
        %v753 = vld [vmem:[#allocation2 + $0x7b] sm:$0xff]
        %v754 = vld [vmem:[#allocation2 + $0x83] sm:$0xff]
        %v755 = vld [vmem:[#allocation2 + $0x8b] sm:$0xff]
        %v756 = vld [vmem:[#allocation2 + $0x93] sm:$0xff]
        %v757 = vld [vmem:[#allocation2 + $0x9b] sm:$0xff]
        %v758 = vld [vmem:[#allocation2 + $0xa3] sm:$0xff]
        %v759 = vld [vmem:[#allocation2 + $0xab] sm:$0xff]
        %v760 = vld [vmem:[#allocation2 + $0xb3] sm:$0xff]
        %v761 = vld [vmem:[#allocation2 + $0xbb] sm:$0xff]
        %v762 = vld [vmem:[#allocation2 + $0xc3] sm:$0xff]
        %v763 = vld [vmem:[#allocation2 + $0xcb] sm:$0xff]
        %v764 = vld [vmem:[#allocation2 + $0xd3] sm:$0xff]
        %v765 = vld [vmem:[#allocation2 + $0xdb] sm:$0xff]
        %v766 = vld [vmem:[#allocation2 + $0xe3] sm:$0xff]
        %v767 = vld [vmem:[#allocation2 + $0xeb] sm:$0xff]
        %v768 = vld [vmem:[#allocation2 + $0xf3] sm:$0xff]
        %v769 = vld [vmem:[#allocation2 + $0xfb] sm:$0xff]
        %v770 = vld [vmem:[#allocation2 + $0x103] sm:$0xff]
        %v771 = vld [vmem:[#allocation2 + $0x10b] sm:$0xff]
        %v772 = vld [vmem:[#allocation2 + $0x113] sm:$0xff]
        %v773 = vld [vmem:[#allocation2 + $0x11b] sm:$0xff]
        %v774 = vld [vmem:[#allocation2 + $0x123] sm:$0xff]
        %v775 = vld [vmem:[#allocation2 + $0x12b] sm:$0xff]
        %v776 = vld [vmem:[#allocation2 + $0x133] sm:$0xff]
        %v777 = vld [vmem:[#allocation2 + $0x13b] sm:$0xff]
        %v778 = vld [vmem:[#allocation2 + $0x143] sm:$0xff]
        %v779 = vld [vmem:[#allocation2 + $0x14b] sm:$0xff]
        %v780 = vld [vmem:[#allocation2 + $0x153] sm:$0xff]
        %v781 = vld [vmem:[#allocation2 + $0x15b] sm:$0xff]
        %v782 = vld [vmem:[#allocation2 + $0x163] sm:$0xff]
        %v783 = vld [vmem:[#allocation2 + $0x16b] sm:$0xff]
        %v784 = vld [vmem:[#allocation2 + $0x173] sm:$0xff]
        %v785 = vld [vmem:[#allocation2 + $0x17b] sm:$0x1]
        %v786 = vld [vmem:[#allocation2 + $0x4] sm:$0xff]
        %v787 = vld [vmem:[#allocation2 + $0xc] sm:$0xff]
        %v788 = vld [vmem:[#allocation2 + $0x14] sm:$0xff]
        %v789 = vld [vmem:[#allocation2 + $0x1c] sm:$0xff]
        %v790 = vld [vmem:[#allocation2 + $0x24] sm:$0xff]
        %v791 = vld [vmem:[#allocation2 + $0x2c] sm:$0xff]
        %v792 = vld [vmem:[#allocation2 + $0x34] sm:$0xff]
        %v793 = vld [vmem:[#allocation2 + $0x3c] sm:$0xff]
        %v794 = vld [vmem:[#allocation2 + $0x44] sm:$0xff]
        %v795 = vld [vmem:[#allocation2 + $0x4c] sm:$0xff]
        %v796 = vld [vmem:[#allocation2 + $0x54] sm:$0xff]
        %v797 = vld [vmem:[#allocation2 + $0x5c] sm:$0xff]
        %v798 = vld [vmem:[#allocation2 + $0x64] sm:$0xff]
        %v799 = vld [vmem:[#allocation2 + $0x6c] sm:$0xff]
        %v800 = vld [vmem:[#allocation2 + $0x74] sm:$0xff]
        %v801 = vld [vmem:[#allocation2 + $0x7c] sm:$0xff]
        %v802 = vld [vmem:[#allocation2 + $0x84] sm:$0xff]
        %v803 = vld [vmem:[#allocation2 + $0x8c] sm:$0xff]
        %v804 = vld [vmem:[#allocation2 + $0x94] sm:$0xff]
        %v805 = vld [vmem:[#allocation2 + $0x9c] sm:$0xff]
        %v806 = vld [vmem:[#allocation2 + $0xa4] sm:$0xff]
        %v807 = vld [vmem:[#allocation2 + $0xac] sm:$0xff]
        %v808 = vld [vmem:[#allocation2 + $0xb4] sm:$0xff]
        %v809 = vld [vmem:[#allocation2 + $0xbc] sm:$0xff]
        %v810 = vld [vmem:[#allocation2 + $0xc4] sm:$0xff]
        %v811 = vld [vmem:[#allocation2 + $0xcc] sm:$0xff]
        %v812 = vld [vmem:[#allocation2 + $0xd4] sm:$0xff]
        %v813 = vld [vmem:[#allocation2 + $0xdc] sm:$0xff]
        %v814 = vld [vmem:[#allocation2 + $0xe4] sm:$0xff]
        %v815 = vld [vmem:[#allocation2 + $0xec] sm:$0xff]
        %v816 = vld [vmem:[#allocation2 + $0xf4] sm:$0xff]
        %v817 = vld [vmem:[#allocation2 + $0xfc] sm:$0xff]
        %v818 = vld [vmem:[#allocation2 + $0x104] sm:$0xff]
        %v819 = vld [vmem:[#allocation2 + $0x10c] sm:$0xff]
        %v820 = vld [vmem:[#allocation2 + $0x114] sm:$0xff]
        %v821 = vld [vmem:[#allocation2 + $0x11c] sm:$0xff]
        %v822 = vld [vmem:[#allocation2 + $0x124] sm:$0xff]
        %v823 = vld [vmem:[#allocation2 + $0x12c] sm:$0xff]
        %v824 = vld [vmem:[#allocation2 + $0x134] sm:$0xff]
        %v825 = vld [vmem:[#allocation2 + $0x13c] sm:$0xff]
        %v826 = vld [vmem:[#allocation2 + $0x144] sm:$0xff]
        %v827 = vld [vmem:[#allocation2 + $0x14c] sm:$0xff]
        %v828 = vld [vmem:[#allocation2 + $0x154] sm:$0xff]
        %v829 = vld [vmem:[#allocation2 + $0x15c] sm:$0xff]
        %v830 = vld [vmem:[#allocation2 + $0x164] sm:$0xff]
        %v831 = vld [vmem:[#allocation2 + $0x16c] sm:$0xff]
        %v832 = vld [vmem:[#allocation2 + $0x174] sm:$0xff]
        %v833 = vld [vmem:[#allocation2 + $0x17c] sm:$0x1]
        %v834 = vld [vmem:[#allocation2 + $0x5] sm:$0xff]
        %v835 = vld [vmem:[#allocation2 + $0xd] sm:$0xff]
        %v836 = vld [vmem:[#allocation2 + $0x15] sm:$0xff]
        %v837 = vld [vmem:[#allocation2 + $0x1d] sm:$0xff]
        %v838 = vld [vmem:[#allocation2 + $0x25] sm:$0xff]
        %v839 = vld [vmem:[#allocation2 + $0x2d] sm:$0xff]
        %v840 = vld [vmem:[#allocation2 + $0x35] sm:$0xff]
        %v841 = vld [vmem:[#allocation2 + $0x3d] sm:$0xff]
        %v842 = vld [vmem:[#allocation2 + $0x45] sm:$0xff]
        %v843 = vld [vmem:[#allocation2 + $0x4d] sm:$0xff]
        %v844 = vld [vmem:[#allocation2 + $0x55] sm:$0xff]
        %v845 = vld [vmem:[#allocation2 + $0x5d] sm:$0xff]
        %v846 = vld [vmem:[#allocation2 + $0x65] sm:$0xff]
        %v847 = vld [vmem:[#allocation2 + $0x6d] sm:$0xff]
        %v848 = vld [vmem:[#allocation2 + $0x75] sm:$0xff]
        %v849 = vld [vmem:[#allocation2 + $0x7d] sm:$0xff]
        %v850 = vld [vmem:[#allocation2 + $0x85] sm:$0xff]
        %v851 = vld [vmem:[#allocation2 + $0x8d] sm:$0xff]
        %v852 = vld [vmem:[#allocation2 + $0x95] sm:$0xff]
        %v853 = vld [vmem:[#allocation2 + $0x9d] sm:$0xff]
        %v854 = vld [vmem:[#allocation2 + $0xa5] sm:$0xff]
        %v855 = vld [vmem:[#allocation2 + $0xad] sm:$0xff]
        %v856 = vld [vmem:[#allocation2 + $0xb5] sm:$0xff]
        %v857 = vld [vmem:[#allocation2 + $0xbd] sm:$0xff]
        %v858 = vld [vmem:[#allocation2 + $0xc5] sm:$0xff]
        %v859 = vld [vmem:[#allocation2 + $0xcd] sm:$0xff]
        %v860 = vld [vmem:[#allocation2 + $0xd5] sm:$0xff]
        %v861 = vld [vmem:[#allocation2 + $0xdd] sm:$0xff]
        %v862 = vld [vmem:[#allocation2 + $0xe5] sm:$0xff]
        %v863 = vld [vmem:[#allocation2 + $0xed] sm:$0xff]
        %v864 = vld [vmem:[#allocation2 + $0xf5] sm:$0xff]
        %v865 = vld [vmem:[#allocation2 + $0xfd] sm:$0xff]
        %v866 = vld [vmem:[#allocation2 + $0x105] sm:$0xff]
        %v867 = vld [vmem:[#allocation2 + $0x10d] sm:$0xff]
        %v868 = vld [vmem:[#allocation2 + $0x115] sm:$0xff]
        %v869 = vld [vmem:[#allocation2 + $0x11d] sm:$0xff]
        %v870 = vld [vmem:[#allocation2 + $0x125] sm:$0xff]
        %v871 = vld [vmem:[#allocation2 + $0x12d] sm:$0xff]
        %v872 = vld [vmem:[#allocation2 + $0x135] sm:$0xff]
        %v873 = vld [vmem:[#allocation2 + $0x13d] sm:$0xff]
        %v874 = vld [vmem:[#allocation2 + $0x145] sm:$0xff]
        %v875 = vld [vmem:[#allocation2 + $0x14d] sm:$0xff]
        %v876 = vld [vmem:[#allocation2 + $0x155] sm:$0xff]
        %v877 = vld [vmem:[#allocation2 + $0x15d] sm:$0xff]
        %v878 = vld [vmem:[#allocation2 + $0x165] sm:$0xff]
        %v879 = vld [vmem:[#allocation2 + $0x16d] sm:$0xff]
        %v880 = vld [vmem:[#allocation2 + $0x175] sm:$0xff]
        %v881 = vld [vmem:[#allocation2 + $0x17d] sm:$0x1]
        %v882 = vld [vmem:[#allocation2 + $0x6] sm:$0xff]
        %v883 = vld [vmem:[#allocation2 + $0xe] sm:$0xff]
        %v884 = vld [vmem:[#allocation2 + $0x16] sm:$0xff]
        %v885 = vld [vmem:[#allocation2 + $0x1e] sm:$0xff]
        %v886 = vld [vmem:[#allocation2 + $0x26] sm:$0xff]
        %v887 = vld [vmem:[#allocation2 + $0x2e] sm:$0xff]
        %v888 = vld [vmem:[#allocation2 + $0x36] sm:$0xff]
        %v889 = vld [vmem:[#allocation2 + $0x3e] sm:$0xff]
        %v890 = vld [vmem:[#allocation2 + $0x46] sm:$0xff]
        %v891 = vld [vmem:[#allocation2 + $0x4e] sm:$0xff]
        %v892 = vld [vmem:[#allocation2 + $0x56] sm:$0xff]
        %v893 = vld [vmem:[#allocation2 + $0x5e] sm:$0xff]
        %v894 = vld [vmem:[#allocation2 + $0x66] sm:$0xff]
        %v895 = vld [vmem:[#allocation2 + $0x6e] sm:$0xff]
        %v896 = vld [vmem:[#allocation2 + $0x76] sm:$0xff]
        %v897 = vld [vmem:[#allocation2 + $0x7e] sm:$0xff]
        %v898 = vld [vmem:[#allocation2 + $0x86] sm:$0xff]
        %v899 = vld [vmem:[#allocation2 + $0x8e] sm:$0xff]
        %v900 = vld [vmem:[#allocation2 + $0x96] sm:$0xff]
        %v901 = vld [vmem:[#allocation2 + $0x9e] sm:$0xff]
        %v902 = vld [vmem:[#allocation2 + $0xa6] sm:$0xff]
        %v903 = vld [vmem:[#allocation2 + $0xae] sm:$0xff]
        %v904 = vld [vmem:[#allocation2 + $0xb6] sm:$0xff]
        %v905 = vld [vmem:[#allocation2 + $0xbe] sm:$0xff]
        %v906 = vld [vmem:[#allocation2 + $0xc6] sm:$0xff]
        %v907 = vld [vmem:[#allocation2 + $0xce] sm:$0xff]
        %v908 = vld [vmem:[#allocation2 + $0xd6] sm:$0xff]
        %v909 = vld [vmem:[#allocation2 + $0xde] sm:$0xff]
        %v910 = vld [vmem:[#allocation2 + $0xe6] sm:$0xff]
        %v911 = vld [vmem:[#allocation2 + $0xee] sm:$0xff]
        %v912 = vld [vmem:[#allocation2 + $0xf6] sm:$0xff]
        %v913 = vld [vmem:[#allocation2 + $0xfe] sm:$0xff]
        %v914 = vld [vmem:[#allocation2 + $0x106] sm:$0xff]
        %v915 = vld [vmem:[#allocation2 + $0x10e] sm:$0xff]
        %v916 = vld [vmem:[#allocation2 + $0x116] sm:$0xff]
        %v917 = vld [vmem:[#allocation2 + $0x11e] sm:$0xff]
        %v918 = vld [vmem:[#allocation2 + $0x126] sm:$0xff]
        %v919 = vld [vmem:[#allocation2 + $0x12e] sm:$0xff]
        %v920 = vld [vmem:[#allocation2 + $0x136] sm:$0xff]
        %v921 = vld [vmem:[#allocation2 + $0x13e] sm:$0xff]
        %v922 = vld [vmem:[#allocation2 + $0x146] sm:$0xff]
        %v923 = vld [vmem:[#allocation2 + $0x14e] sm:$0xff]
        %v924 = vld [vmem:[#allocation2 + $0x156] sm:$0xff]
        %v925 = vld [vmem:[#allocation2 + $0x15e] sm:$0xff]
        %v926 = vld [vmem:[#allocation2 + $0x166] sm:$0xff]
        %v927 = vld [vmem:[#allocation2 + $0x16e] sm:$0xff]
        %v928 = vld [vmem:[#allocation2 + $0x176] sm:$0xff]
        %v929 = vld [vmem:[#allocation2 + $0x17e] sm:$0x1]
        %v930 = vld [vmem:[#allocation2 + $0x7] sm:$0xff]
        %v931 = vld [vmem:[#allocation2 + $0xf] sm:$0xff]
        %v932 = vld [vmem:[#allocation2 + $0x17] sm:$0xff]
        %v933 = vld [vmem:[#allocation2 + $0x1f] sm:$0xff]
        %v934 = vld [vmem:[#allocation2 + $0x27] sm:$0xff]
        %v935 = vld [vmem:[#allocation2 + $0x2f] sm:$0xff]
        %v936 = vld [vmem:[#allocation2 + $0x37] sm:$0xff]
        %v937 = vld [vmem:[#allocation2 + $0x3f] sm:$0xff]
        %v938 = vld [vmem:[#allocation2 + $0x47] sm:$0xff]
        %v939 = vld [vmem:[#allocation2 + $0x4f] sm:$0xff]
        %v940 = vld [vmem:[#allocation2 + $0x57] sm:$0xff]
        %v941 = vld [vmem:[#allocation2 + $0x5f] sm:$0xff]
        %v942 = vld [vmem:[#allocation2 + $0x67] sm:$0xff]
        %v943 = vld [vmem:[#allocation2 + $0x6f] sm:$0xff]
        %v944 = vld [vmem:[#allocation2 + $0x77] sm:$0xff]
        %v945 = vld [vmem:[#allocation2 + $0x7f] sm:$0xff]
        %v946 = vld [vmem:[#allocation2 + $0x87] sm:$0xff]
        %v947 = vld [vmem:[#allocation2 + $0x8f] sm:$0xff]
        %v948 = vld [vmem:[#allocation2 + $0x97] sm:$0xff]
        %v949 = vld [vmem:[#allocation2 + $0x9f] sm:$0xff]
        %v950 = vld [vmem:[#allocation2 + $0xa7] sm:$0xff]
        %v951 = vld [vmem:[#allocation2 + $0xaf] sm:$0xff]
        %v952 = vld [vmem:[#allocation2 + $0xb7] sm:$0xff]
        %v953 = vld [vmem:[#allocation2 + $0xbf] sm:$0xff]
        %v954 = vld [vmem:[#allocation2 + $0xc7] sm:$0xff]
        %v955 = vld [vmem:[#allocation2 + $0xcf] sm:$0xff]
        %v956 = vld [vmem:[#allocation2 + $0xd7] sm:$0xff]
        %v957 = vld [vmem:[#allocation2 + $0xdf] sm:$0xff]
        %v958 = vld [vmem:[#allocation2 + $0xe7] sm:$0xff]
        %v959 = vld [vmem:[#allocation2 + $0xef] sm:$0xff]
        %v960 = vld [vmem:[#allocation2 + $0xf7] sm:$0xff]
        %v961 = vld [vmem:[#allocation2 + $0xff] sm:$0xff]
        %v962 = vld [vmem:[#allocation2 + $0x107] sm:$0xff]
        %v963 = vld [vmem:[#allocation2 + $0x10f] sm:$0xff]
        %v964 = vld [vmem:[#allocation2 + $0x117] sm:$0xff]
        %v965 = vld [vmem:[#allocation2 + $0x11f] sm:$0xff]
        %v966 = vld [vmem:[#allocation2 + $0x127] sm:$0xff]
        %v967 = vld [vmem:[#allocation2 + $0x12f] sm:$0xff]
        %v968 = vld [vmem:[#allocation2 + $0x137] sm:$0xff]
        %v969 = vld [vmem:[#allocation2 + $0x13f] sm:$0xff]
        %v970 = vld [vmem:[#allocation2 + $0x147] sm:$0xff]
        %v971 = vld [vmem:[#allocation2 + $0x14f] sm:$0xff]
        %v972 = vld [vmem:[#allocation2 + $0x157] sm:$0xff]
        %v973 = vld [vmem:[#allocation2 + $0x15f] sm:$0xff]
        %v974 = vld [vmem:[#allocation2 + $0x167] sm:$0xff]
        %v975 = vld [vmem:[#allocation2 + $0x16f] sm:$0xff]
        %v976 = vld [vmem:[#allocation2 + $0x177] sm:$0xff]
        %v977 = vld [vmem:[#allocation2 + $0x17f] sm:$0x1]
        %1026 = vrot.lane.b32.xlu0 %v642, 1
        %v1027 = vpop.permute.xlu0 %1026
        %1028 = vrot.lane.b32.xlu0 %v643, 1
        %v1029 = vpop.permute.xlu0 %1028
        %1030 = vrot.lane.b32.xlu0 %v644, 1
        %v1031 = vpop.permute.xlu0 %1030
        %1032 = vrot.lane.b32.xlu0 %v645, 1
        %v1033 = vpop.permute.xlu0 %1032
        %1034 = vrot.lane.b32.xlu0 %v646, 1
        %v1035 = vpop.permute.xlu0 %1034
        %1036 = vrot.lane.b32.xlu0 %v647, 1
        %v1037 = vpop.permute.xlu0 %1036
        %1038 = vrot.lane.b32.xlu0 %v648, 1
        %v1039 = vpop.permute.xlu0 %1038
        %1040 = vrot.lane.b32.xlu0 %v649, 1
        %v1041 = vpop.permute.xlu0 %1040
        %1042 = vrot.lane.b32.xlu0 %v650, 1
        %v1043 = vpop.permute.xlu0 %1042
        %1044 = vrot.lane.b32.xlu0 %v651, 1
        %v1045 = vpop.permute.xlu0 %1044
        %1046 = vrot.lane.b32.xlu0 %v652, 1
        %v1047 = vpop.permute.xlu0 %1046
        %1048 = vrot.lane.b32.xlu0 %v653, 1
        %v1049 = vpop.permute.xlu0 %1048
        %1050 = vrot.lane.b32.xlu0 %v654, 1
        %v1051 = vpop.permute.xlu0 %1050
        %1052 = vrot.lane.b32.xlu0 %v655, 1
        %v1053 = vpop.permute.xlu0 %1052
        %1054 = vrot.lane.b32.xlu0 %v656, 1
        %v1055 = vpop.permute.xlu0 %1054
        %1056 = vrot.lane.b32.xlu0 %v657, 1
        %v1057 = vpop.permute.xlu0 %1056
        %1058 = vrot.lane.b32.xlu0 %v658, 1
        %v1059 = vpop.permute.xlu0 %1058
        %1060 = vrot.lane.b32.xlu0 %v659, 1
        %v1061 = vpop.permute.xlu0 %1060
        %1062 = vrot.lane.b32.xlu0 %v660, 1
        %v1063 = vpop.permute.xlu0 %1062
        %1064 = vrot.lane.b32.xlu0 %v661, 1
        %v1065 = vpop.permute.xlu0 %1064
        %1066 = vrot.lane.b32.xlu0 %v662, 1
        %v1067 = vpop.permute.xlu0 %1066
        %1068 = vrot.lane.b32.xlu0 %v663, 1
        %v1069 = vpop.permute.xlu0 %1068
        %1070 = vrot.lane.b32.xlu0 %v664, 1
        %v1071 = vpop.permute.xlu0 %1070
        %1072 = vrot.lane.b32.xlu0 %v665, 1
        %v1073 = vpop.permute.xlu0 %1072
        %1074 = vrot.lane.b32.xlu0 %v666, 1
        %v1075 = vpop.permute.xlu0 %1074
        %1076 = vrot.lane.b32.xlu0 %v667, 1
        %v1077 = vpop.permute.xlu0 %1076
        %1078 = vrot.lane.b32.xlu0 %v668, 1
        %v1079 = vpop.permute.xlu0 %1078
        %1080 = vrot.lane.b32.xlu0 %v669, 1
        %v1081 = vpop.permute.xlu0 %1080
        %1082 = vrot.lane.b32.xlu0 %v670, 1
        %v1083 = vpop.permute.xlu0 %1082
        %1084 = vrot.lane.b32.xlu0 %v671, 1
        %v1085 = vpop.permute.xlu0 %1084
        %1086 = vrot.lane.b32.xlu0 %v672, 1
        %v1087 = vpop.permute.xlu0 %1086
        %1088 = vrot.lane.b32.xlu0 %v673, 1
        %v1089 = vpop.permute.xlu0 %1088
        %1090 = vrot.lane.b32.xlu0 %v674, 1
        %v1091 = vpop.permute.xlu0 %1090
        %1092 = vrot.lane.b32.xlu0 %v675, 1
        %v1093 = vpop.permute.xlu0 %1092
        %1094 = vrot.lane.b32.xlu0 %v676, 1
        %v1095 = vpop.permute.xlu0 %1094
        %1096 = vrot.lane.b32.xlu0 %v677, 1
        %v1097 = vpop.permute.xlu0 %1096
        %1098 = vrot.lane.b32.xlu0 %v678, 1
        %v1099 = vpop.permute.xlu0 %1098
        %1100 = vrot.lane.b32.xlu0 %v679, 1
        %v1101 = vpop.permute.xlu0 %1100
        %1102 = vrot.lane.b32.xlu0 %v680, 1
        %v1103 = vpop.permute.xlu0 %1102
        %1104 = vrot.lane.b32.xlu0 %v681, 1
        %v1105 = vpop.permute.xlu0 %1104
        %1106 = vrot.lane.b32.xlu0 %v682, 1
        %v1107 = vpop.permute.xlu0 %1106
        %1108 = vrot.lane.b32.xlu0 %v683, 1
        %v1109 = vpop.permute.xlu0 %1108
        %1110 = vrot.lane.b32.xlu0 %v684, 1
        %v1111 = vpop.permute.xlu0 %1110
        %1112 = vrot.lane.b32.xlu0 %v685, 1
        %v1113 = vpop.permute.xlu0 %1112
        %1114 = vrot.lane.b32.xlu0 %v686, 1
        %v1115 = vpop.permute.xlu0 %1114
        %1116 = vrot.lane.b32.xlu0 %v687, 1
        %v1117 = vpop.permute.xlu0 %1116
        %1118 = vrot.lane.b32.xlu0 %v688, 1
        %v1119 = vpop.permute.xlu0 %1118
        %1120 = vrot.lane.b32.xlu0 %v689, 1
        %v1121 = vpop.permute.xlu0 %1120
        %1218 = vrot.lane.b32.xlu0 %v690, 2
        %v1219 = vpop.permute.xlu0 %1218
        %1220 = vrot.lane.b32.xlu0 %v691, 2
        %v1221 = vpop.permute.xlu0 %1220
        %1222 = vrot.lane.b32.xlu0 %v692, 2
        %v1223 = vpop.permute.xlu0 %1222
        %1224 = vrot.lane.b32.xlu0 %v693, 2
        %v1225 = vpop.permute.xlu0 %1224
        %1226 = vrot.lane.b32.xlu0 %v694, 2
        %v1227 = vpop.permute.xlu0 %1226
        %1228 = vrot.lane.b32.xlu0 %v695, 2
        %v1229 = vpop.permute.xlu0 %1228
        %1230 = vrot.lane.b32.xlu0 %v696, 2
        %v1231 = vpop.permute.xlu0 %1230
        %1232 = vrot.lane.b32.xlu0 %v697, 2
        %v1233 = vpop.permute.xlu0 %1232
        %1234 = vrot.lane.b32.xlu0 %v698, 2
        %v1235 = vpop.permute.xlu0 %1234
        %1236 = vrot.lane.b32.xlu0 %v699, 2
        %v1237 = vpop.permute.xlu0 %1236
        %1238 = vrot.lane.b32.xlu0 %v700, 2
        %v1239 = vpop.permute.xlu0 %1238
        %1240 = vrot.lane.b32.xlu0 %v701, 2
        %v1241 = vpop.permute.xlu0 %1240
        %1242 = vrot.lane.b32.xlu0 %v702, 2
        %v1243 = vpop.permute.xlu0 %1242
        %1244 = vrot.lane.b32.xlu0 %v703, 2
        %v1245 = vpop.permute.xlu0 %1244
        %1246 = vrot.lane.b32.xlu0 %v704, 2
        %v1247 = vpop.permute.xlu0 %1246
        %1248 = vrot.lane.b32.xlu0 %v705, 2
        %v1249 = vpop.permute.xlu0 %1248
        %1250 = vrot.lane.b32.xlu0 %v706, 2
        %v1251 = vpop.permute.xlu0 %1250
        %1252 = vrot.lane.b32.xlu0 %v707, 2
        %v1253 = vpop.permute.xlu0 %1252
        %1254 = vrot.lane.b32.xlu0 %v708, 2
        %v1255 = vpop.permute.xlu0 %1254
        %1256 = vrot.lane.b32.xlu0 %v709, 2
        %v1257 = vpop.permute.xlu0 %1256
        %1258 = vrot.lane.b32.xlu0 %v710, 2
        %v1259 = vpop.permute.xlu0 %1258
        %1260 = vrot.lane.b32.xlu0 %v711, 2
        %v1261 = vpop.permute.xlu0 %1260
        %1262 = vrot.lane.b32.xlu0 %v712, 2
        %v1263 = vpop.permute.xlu0 %1262
        %1264 = vrot.lane.b32.xlu0 %v713, 2
        %v1265 = vpop.permute.xlu0 %1264
        %1266 = vrot.lane.b32.xlu0 %v714, 2
        %v1267 = vpop.permute.xlu0 %1266
        %1268 = vrot.lane.b32.xlu0 %v715, 2
        %v1269 = vpop.permute.xlu0 %1268
        %1270 = vrot.lane.b32.xlu0 %v716, 2
        %v1271 = vpop.permute.xlu0 %1270
        %1272 = vrot.lane.b32.xlu0 %v717, 2
        %v1273 = vpop.permute.xlu0 %1272
        %1274 = vrot.lane.b32.xlu0 %v718, 2
        %v1275 = vpop.permute.xlu0 %1274
        %1276 = vrot.lane.b32.xlu0 %v719, 2
        %v1277 = vpop.permute.xlu0 %1276
        %1278 = vrot.lane.b32.xlu0 %v720, 2
        %v1279 = vpop.permute.xlu0 %1278
        %1280 = vrot.lane.b32.xlu0 %v721, 2
        %v1281 = vpop.permute.xlu0 %1280
        %1282 = vrot.lane.b32.xlu0 %v722, 2
        %v1283 = vpop.permute.xlu0 %1282
        %1284 = vrot.lane.b32.xlu0 %v723, 2
        %v1285 = vpop.permute.xlu0 %1284
        %1286 = vrot.lane.b32.xlu0 %v724, 2
        %v1287 = vpop.permute.xlu0 %1286
        %1288 = vrot.lane.b32.xlu0 %v725, 2
        %v1289 = vpop.permute.xlu0 %1288
        %1290 = vrot.lane.b32.xlu0 %v726, 2
        %v1291 = vpop.permute.xlu0 %1290
        %1292 = vrot.lane.b32.xlu0 %v727, 2
        %v1293 = vpop.permute.xlu0 %1292
        %1294 = vrot.lane.b32.xlu0 %v728, 2
        %v1295 = vpop.permute.xlu0 %1294
        %1296 = vrot.lane.b32.xlu0 %v729, 2
        %v1297 = vpop.permute.xlu0 %1296
        %1298 = vrot.lane.b32.xlu0 %v730, 2
        %v1299 = vpop.permute.xlu0 %1298
        %1300 = vrot.lane.b32.xlu0 %v731, 2
        %v1301 = vpop.permute.xlu0 %1300
        %1302 = vrot.lane.b32.xlu0 %v732, 2
        %v1303 = vpop.permute.xlu0 %1302
        %1304 = vrot.lane.b32.xlu0 %v733, 2
        %v1305 = vpop.permute.xlu0 %1304
        %1306 = vrot.lane.b32.xlu0 %v734, 2
        %v1307 = vpop.permute.xlu0 %1306
        %1308 = vrot.lane.b32.xlu0 %v735, 2
        %v1309 = vpop.permute.xlu0 %1308
        %1310 = vrot.lane.b32.xlu0 %v736, 2
        %v1311 = vpop.permute.xlu0 %1310
        %1312 = vrot.lane.b32.xlu0 %v737, 2
        %v1313 = vpop.permute.xlu0 %1312
        %1410 = vrot.lane.b32.xlu0 %v738, 3
        %v1411 = vpop.permute.xlu0 %1410
        %1412 = vrot.lane.b32.xlu0 %v739, 3
        %v1413 = vpop.permute.xlu0 %1412
        %1414 = vrot.lane.b32.xlu0 %v740, 3
        %v1415 = vpop.permute.xlu0 %1414
        %1416 = vrot.lane.b32.xlu0 %v741, 3
        %v1417 = vpop.permute.xlu0 %1416
        %1418 = vrot.lane.b32.xlu0 %v742, 3
        %v1419 = vpop.permute.xlu0 %1418
        %1420 = vrot.lane.b32.xlu0 %v743, 3
        %v1421 = vpop.permute.xlu0 %1420
        %1422 = vrot.lane.b32.xlu0 %v744, 3
        %v1423 = vpop.permute.xlu0 %1422
        %1424 = vrot.lane.b32.xlu0 %v745, 3
        %v1425 = vpop.permute.xlu0 %1424
        %1426 = vrot.lane.b32.xlu0 %v746, 3
        %v1427 = vpop.permute.xlu0 %1426
        %1428 = vrot.lane.b32.xlu0 %v747, 3
        %v1429 = vpop.permute.xlu0 %1428
        %1430 = vrot.lane.b32.xlu0 %v748, 3
        %v1431 = vpop.permute.xlu0 %1430
        %1432 = vrot.lane.b32.xlu0 %v749, 3
        %v1433 = vpop.permute.xlu0 %1432
        %1434 = vrot.lane.b32.xlu0 %v750, 3
        %v1435 = vpop.permute.xlu0 %1434
        %1436 = vrot.lane.b32.xlu0 %v751, 3
        %v1437 = vpop.permute.xlu0 %1436
        %1438 = vrot.lane.b32.xlu0 %v752, 3
        %v1439 = vpop.permute.xlu0 %1438
        %1440 = vrot.lane.b32.xlu0 %v753, 3
        %v1441 = vpop.permute.xlu0 %1440
        %1442 = vrot.lane.b32.xlu0 %v754, 3
        %v1443 = vpop.permute.xlu0 %1442
        %1444 = vrot.lane.b32.xlu0 %v755, 3
        %v1445 = vpop.permute.xlu0 %1444
        %1446 = vrot.lane.b32.xlu0 %v756, 3
        %v1447 = vpop.permute.xlu0 %1446
        %1448 = vrot.lane.b32.xlu0 %v757, 3
        %v1449 = vpop.permute.xlu0 %1448
        %1450 = vrot.lane.b32.xlu0 %v758, 3
        %v1451 = vpop.permute.xlu0 %1450
        %1452 = vrot.lane.b32.xlu0 %v759, 3
        %v1453 = vpop.permute.xlu0 %1452
        %1454 = vrot.lane.b32.xlu0 %v760, 3
        %v1455 = vpop.permute.xlu0 %1454
        %1456 = vrot.lane.b32.xlu0 %v761, 3
        %v1457 = vpop.permute.xlu0 %1456
        %1458 = vrot.lane.b32.xlu0 %v762, 3
        %v1459 = vpop.permute.xlu0 %1458
        %1460 = vrot.lane.b32.xlu0 %v763, 3
        %v1461 = vpop.permute.xlu0 %1460
        %1462 = vrot.lane.b32.xlu0 %v764, 3
        %v1463 = vpop.permute.xlu0 %1462
        %1464 = vrot.lane.b32.xlu0 %v765, 3
        %v1465 = vpop.permute.xlu0 %1464
        %1466 = vrot.lane.b32.xlu0 %v766, 3
        %v1467 = vpop.permute.xlu0 %1466
        %1468 = vrot.lane.b32.xlu0 %v767, 3
        %v1469 = vpop.permute.xlu0 %1468
        %1470 = vrot.lane.b32.xlu0 %v768, 3
        %v1471 = vpop.permute.xlu0 %1470
        %1472 = vrot.lane.b32.xlu0 %v769, 3
        %v1473 = vpop.permute.xlu0 %1472
        %1474 = vrot.lane.b32.xlu0 %v770, 3
        %v1475 = vpop.permute.xlu0 %1474
        %1476 = vrot.lane.b32.xlu0 %v771, 3
        %v1477 = vpop.permute.xlu0 %1476
        %1478 = vrot.lane.b32.xlu0 %v772, 3
        %v1479 = vpop.permute.xlu0 %1478
        %1480 = vrot.lane.b32.xlu0 %v773, 3
        %v1481 = vpop.permute.xlu0 %1480
        %1482 = vrot.lane.b32.xlu0 %v774, 3
        %v1483 = vpop.permute.xlu0 %1482
        %1484 = vrot.lane.b32.xlu0 %v775, 3
        %v1485 = vpop.permute.xlu0 %1484
        %1486 = vrot.lane.b32.xlu0 %v776, 3
        %v1487 = vpop.permute.xlu0 %1486
        %1488 = vrot.lane.b32.xlu0 %v777, 3
        %v1489 = vpop.permute.xlu0 %1488
        %1490 = vrot.lane.b32.xlu0 %v778, 3
        %v1491 = vpop.permute.xlu0 %1490
        %1492 = vrot.lane.b32.xlu0 %v779, 3
        %v1493 = vpop.permute.xlu0 %1492
        %1494 = vrot.lane.b32.xlu0 %v780, 3
        %v1495 = vpop.permute.xlu0 %1494
        %1496 = vrot.lane.b32.xlu0 %v781, 3
        %v1497 = vpop.permute.xlu0 %1496
        %1498 = vrot.lane.b32.xlu0 %v782, 3
        %v1499 = vpop.permute.xlu0 %1498
        %1500 = vrot.lane.b32.xlu0 %v783, 3
        %v1501 = vpop.permute.xlu0 %1500
        %1502 = vrot.lane.b32.xlu0 %v784, 3
        %v1503 = vpop.permute.xlu0 %1502
        %1504 = vrot.lane.b32.xlu0 %v785, 3
        %v1505 = vpop.permute.xlu0 %1504
        %1602 = vrot.lane.b32.xlu0 %v786, 4
        %v1603 = vpop.permute.xlu0 %1602
        %1604 = vrot.lane.b32.xlu0 %v787, 4
        %v1605 = vpop.permute.xlu0 %1604
        %1606 = vrot.lane.b32.xlu0 %v788, 4
        %v1607 = vpop.permute.xlu0 %1606
        %1608 = vrot.lane.b32.xlu0 %v789, 4
        %v1609 = vpop.permute.xlu0 %1608
        %1610 = vrot.lane.b32.xlu0 %v790, 4
        %v1611 = vpop.permute.xlu0 %1610
        %1612 = vrot.lane.b32.xlu0 %v791, 4
        %v1613 = vpop.permute.xlu0 %1612
        %1614 = vrot.lane.b32.xlu0 %v792, 4
        %v1615 = vpop.permute.xlu0 %1614
        %1616 = vrot.lane.b32.xlu0 %v793, 4
        %v1617 = vpop.permute.xlu0 %1616
        %1618 = vrot.lane.b32.xlu0 %v794, 4
        %v1619 = vpop.permute.xlu0 %1618
        %1620 = vrot.lane.b32.xlu0 %v795, 4
        %v1621 = vpop.permute.xlu0 %1620
        %1622 = vrot.lane.b32.xlu0 %v796, 4
        %v1623 = vpop.permute.xlu0 %1622
        %1624 = vrot.lane.b32.xlu0 %v797, 4
        %v1625 = vpop.permute.xlu0 %1624
        %1626 = vrot.lane.b32.xlu0 %v798, 4
        %v1627 = vpop.permute.xlu0 %1626
        %1628 = vrot.lane.b32.xlu0 %v799, 4
        %v1629 = vpop.permute.xlu0 %1628
        %1630 = vrot.lane.b32.xlu0 %v800, 4
        %v1631 = vpop.permute.xlu0 %1630
        %1632 = vrot.lane.b32.xlu0 %v801, 4
        %v1633 = vpop.permute.xlu0 %1632
        %1634 = vrot.lane.b32.xlu0 %v802, 4
        %v1635 = vpop.permute.xlu0 %1634
        %1636 = vrot.lane.b32.xlu0 %v803, 4
        %v1637 = vpop.permute.xlu0 %1636
        %1638 = vrot.lane.b32.xlu0 %v804, 4
        %v1639 = vpop.permute.xlu0 %1638
        %1640 = vrot.lane.b32.xlu0 %v805, 4
        %v1641 = vpop.permute.xlu0 %1640
        %1642 = vrot.lane.b32.xlu0 %v806, 4
        %v1643 = vpop.permute.xlu0 %1642
        %1644 = vrot.lane.b32.xlu0 %v807, 4
        %v1645 = vpop.permute.xlu0 %1644
        %1646 = vrot.lane.b32.xlu0 %v808, 4
        %v1647 = vpop.permute.xlu0 %1646
        %1648 = vrot.lane.b32.xlu0 %v809, 4
        %v1649 = vpop.permute.xlu0 %1648
        %1650 = vrot.lane.b32.xlu0 %v810, 4
        %v1651 = vpop.permute.xlu0 %1650
        %1652 = vrot.lane.b32.xlu0 %v811, 4
        %v1653 = vpop.permute.xlu0 %1652
        %1654 = vrot.lane.b32.xlu0 %v812, 4
        %v1655 = vpop.permute.xlu0 %1654
        %1656 = vrot.lane.b32.xlu0 %v813, 4
        %v1657 = vpop.permute.xlu0 %1656
        %1658 = vrot.lane.b32.xlu0 %v814, 4
        %v1659 = vpop.permute.xlu0 %1658
        %1660 = vrot.lane.b32.xlu0 %v815, 4
        %v1661 = vpop.permute.xlu0 %1660
        %1662 = vrot.lane.b32.xlu0 %v816, 4
        %v1663 = vpop.permute.xlu0 %1662
        %1664 = vrot.lane.b32.xlu0 %v817, 4
        %v1665 = vpop.permute.xlu0 %1664
        %1666 = vrot.lane.b32.xlu0 %v818, 4
        %v1667 = vpop.permute.xlu0 %1666
        %1668 = vrot.lane.b32.xlu0 %v819, 4
        %v1669 = vpop.permute.xlu0 %1668
        %1670 = vrot.lane.b32.xlu0 %v820, 4
        %v1671 = vpop.permute.xlu0 %1670
        %1672 = vrot.lane.b32.xlu0 %v821, 4
        %v1673 = vpop.permute.xlu0 %1672
        %1674 = vrot.lane.b32.xlu0 %v822, 4
        %v1675 = vpop.permute.xlu0 %1674
        %1676 = vrot.lane.b32.xlu0 %v823, 4
        %v1677 = vpop.permute.xlu0 %1676
        %1678 = vrot.lane.b32.xlu0 %v824, 4
        %v1679 = vpop.permute.xlu0 %1678
        %1680 = vrot.lane.b32.xlu0 %v825, 4
        %v1681 = vpop.permute.xlu0 %1680
        %1682 = vrot.lane.b32.xlu0 %v826, 4
        %v1683 = vpop.permute.xlu0 %1682
        %1684 = vrot.lane.b32.xlu0 %v827, 4
        %v1685 = vpop.permute.xlu0 %1684
        %1686 = vrot.lane.b32.xlu0 %v828, 4
        %v1687 = vpop.permute.xlu0 %1686
        %1688 = vrot.lane.b32.xlu0 %v829, 4
        %v1689 = vpop.permute.xlu0 %1688
        %1690 = vrot.lane.b32.xlu0 %v830, 4
        %v1691 = vpop.permute.xlu0 %1690
        %1692 = vrot.lane.b32.xlu0 %v831, 4
        %v1693 = vpop.permute.xlu0 %1692
        %1694 = vrot.lane.b32.xlu0 %v832, 4
        %v1695 = vpop.permute.xlu0 %1694
        %1696 = vrot.lane.b32.xlu0 %v833, 4
        %v1697 = vpop.permute.xlu0 %1696
        %1794 = vrot.lane.b32.xlu0 %v834, 5
        %v1795 = vpop.permute.xlu0 %1794
        %1796 = vrot.lane.b32.xlu0 %v835, 5
        %v1797 = vpop.permute.xlu0 %1796
        %1798 = vrot.lane.b32.xlu0 %v836, 5
        %v1799 = vpop.permute.xlu0 %1798
        %1800 = vrot.lane.b32.xlu0 %v837, 5
        %v1801 = vpop.permute.xlu0 %1800
        %1802 = vrot.lane.b32.xlu0 %v838, 5
        %v1803 = vpop.permute.xlu0 %1802
        %1804 = vrot.lane.b32.xlu0 %v839, 5
        %v1805 = vpop.permute.xlu0 %1804
        %1806 = vrot.lane.b32.xlu0 %v840, 5
        %v1807 = vpop.permute.xlu0 %1806
        %1808 = vrot.lane.b32.xlu0 %v841, 5
        %v1809 = vpop.permute.xlu0 %1808
        %1810 = vrot.lane.b32.xlu0 %v842, 5
        %v1811 = vpop.permute.xlu0 %1810
        %1812 = vrot.lane.b32.xlu0 %v843, 5
        %v1813 = vpop.permute.xlu0 %1812
        %1814 = vrot.lane.b32.xlu0 %v844, 5
        %v1815 = vpop.permute.xlu0 %1814
        %1816 = vrot.lane.b32.xlu0 %v845, 5
        %v1817 = vpop.permute.xlu0 %1816
        %1818 = vrot.lane.b32.xlu0 %v846, 5
        %v1819 = vpop.permute.xlu0 %1818
        %1820 = vrot.lane.b32.xlu0 %v847, 5
        %v1821 = vpop.permute.xlu0 %1820
        %1822 = vrot.lane.b32.xlu0 %v848, 5
        %v1823 = vpop.permute.xlu0 %1822
        %1824 = vrot.lane.b32.xlu0 %v849, 5
        %v1825 = vpop.permute.xlu0 %1824
        %1826 = vrot.lane.b32.xlu0 %v850, 5
        %v1827 = vpop.permute.xlu0 %1826
        %1828 = vrot.lane.b32.xlu0 %v851, 5
        %v1829 = vpop.permute.xlu0 %1828
        %1830 = vrot.lane.b32.xlu0 %v852, 5
        %v1831 = vpop.permute.xlu0 %1830
        %1832 = vrot.lane.b32.xlu0 %v853, 5
        %v1833 = vpop.permute.xlu0 %1832
        %1834 = vrot.lane.b32.xlu0 %v854, 5
        %v1835 = vpop.permute.xlu0 %1834
        %1836 = vrot.lane.b32.xlu0 %v855, 5
        %v1837 = vpop.permute.xlu0 %1836
        %1838 = vrot.lane.b32.xlu0 %v856, 5
        %v1839 = vpop.permute.xlu0 %1838
        %1840 = vrot.lane.b32.xlu0 %v857, 5
        %v1841 = vpop.permute.xlu0 %1840
        %1842 = vrot.lane.b32.xlu0 %v858, 5
        %v1843 = vpop.permute.xlu0 %1842
        %1844 = vrot.lane.b32.xlu0 %v859, 5
        %v1845 = vpop.permute.xlu0 %1844
        %1846 = vrot.lane.b32.xlu0 %v860, 5
        %v1847 = vpop.permute.xlu0 %1846
        %1848 = vrot.lane.b32.xlu0 %v861, 5
        %v1849 = vpop.permute.xlu0 %1848
        %1850 = vrot.lane.b32.xlu0 %v862, 5
        %v1851 = vpop.permute.xlu0 %1850
        %1852 = vrot.lane.b32.xlu0 %v863, 5
        %v1853 = vpop.permute.xlu0 %1852
        %1854 = vrot.lane.b32.xlu0 %v864, 5
        %v1855 = vpop.permute.xlu0 %1854
        %1856 = vrot.lane.b32.xlu0 %v865, 5
        %v1857 = vpop.permute.xlu0 %1856
        %1858 = vrot.lane.b32.xlu0 %v866, 5
        %v1859 = vpop.permute.xlu0 %1858
        %1860 = vrot.lane.b32.xlu0 %v867, 5
        %v1861 = vpop.permute.xlu0 %1860
        %1862 = vrot.lane.b32.xlu0 %v868, 5
        %v1863 = vpop.permute.xlu0 %1862
        %1864 = vrot.lane.b32.xlu0 %v869, 5
        %v1865 = vpop.permute.xlu0 %1864
        %1866 = vrot.lane.b32.xlu0 %v870, 5
        %v1867 = vpop.permute.xlu0 %1866
        %1868 = vrot.lane.b32.xlu0 %v871, 5
        %v1869 = vpop.permute.xlu0 %1868
        %1870 = vrot.lane.b32.xlu0 %v872, 5
        %v1871 = vpop.permute.xlu0 %1870
        %1872 = vrot.lane.b32.xlu0 %v873, 5
        %v1873 = vpop.permute.xlu0 %1872
        %1874 = vrot.lane.b32.xlu0 %v874, 5
        %v1875 = vpop.permute.xlu0 %1874
        %1876 = vrot.lane.b32.xlu0 %v875, 5
        %v1877 = vpop.permute.xlu0 %1876
        %1878 = vrot.lane.b32.xlu0 %v876, 5
        %v1879 = vpop.permute.xlu0 %1878
        %1880 = vrot.lane.b32.xlu0 %v877, 5
        %v1881 = vpop.permute.xlu0 %1880
        %1882 = vrot.lane.b32.xlu0 %v878, 5
        %v1883 = vpop.permute.xlu0 %1882
        %1884 = vrot.lane.b32.xlu0 %v879, 5
        %v1885 = vpop.permute.xlu0 %1884
        %1886 = vrot.lane.b32.xlu0 %v880, 5
        %v1887 = vpop.permute.xlu0 %1886
        %1888 = vrot.lane.b32.xlu0 %v881, 5
        %v1889 = vpop.permute.xlu0 %1888
        %1986 = vrot.lane.b32.xlu0 %v882, 6
        %v1987 = vpop.permute.xlu0 %1986
        %1988 = vrot.lane.b32.xlu0 %v883, 6
        %v1989 = vpop.permute.xlu0 %1988
        %1990 = vrot.lane.b32.xlu0 %v884, 6
        %v1991 = vpop.permute.xlu0 %1990
        %1992 = vrot.lane.b32.xlu0 %v885, 6
        %v1993 = vpop.permute.xlu0 %1992
        %1994 = vrot.lane.b32.xlu0 %v886, 6
        %v1995 = vpop.permute.xlu0 %1994
        %1996 = vrot.lane.b32.xlu0 %v887, 6
        %v1997 = vpop.permute.xlu0 %1996
        %1998 = vrot.lane.b32.xlu0 %v888, 6
        %v1999 = vpop.permute.xlu0 %1998
        %2000 = vrot.lane.b32.xlu0 %v889, 6
        %v2001 = vpop.permute.xlu0 %2000
        %2002 = vrot.lane.b32.xlu0 %v890, 6
        %v2003 = vpop.permute.xlu0 %2002
        %2004 = vrot.lane.b32.xlu0 %v891, 6
        %v2005 = vpop.permute.xlu0 %2004
        %2006 = vrot.lane.b32.xlu0 %v892, 6
        %v2007 = vpop.permute.xlu0 %2006
        %2008 = vrot.lane.b32.xlu0 %v893, 6
        %v2009 = vpop.permute.xlu0 %2008
        %2010 = vrot.lane.b32.xlu0 %v894, 6
        %v2011 = vpop.permute.xlu0 %2010
        %2012 = vrot.lane.b32.xlu0 %v895, 6
        %v2013 = vpop.permute.xlu0 %2012
        %2014 = vrot.lane.b32.xlu0 %v896, 6
        %v2015 = vpop.permute.xlu0 %2014
        %2016 = vrot.lane.b32.xlu0 %v897, 6
        %v2017 = vpop.permute.xlu0 %2016
        %2018 = vrot.lane.b32.xlu0 %v898, 6
        %v2019 = vpop.permute.xlu0 %2018
        %2020 = vrot.lane.b32.xlu0 %v899, 6
        %v2021 = vpop.permute.xlu0 %2020
        %2022 = vrot.lane.b32.xlu0 %v900, 6
        %v2023 = vpop.permute.xlu0 %2022
        %2024 = vrot.lane.b32.xlu0 %v901, 6
        %v2025 = vpop.permute.xlu0 %2024
        %2026 = vrot.lane.b32.xlu0 %v902, 6
        %v2027 = vpop.permute.xlu0 %2026
        %2028 = vrot.lane.b32.xlu0 %v903, 6
        %v2029 = vpop.permute.xlu0 %2028
        %2030 = vrot.lane.b32.xlu0 %v904, 6
        %v2031 = vpop.permute.xlu0 %2030
        %2032 = vrot.lane.b32.xlu0 %v905, 6
        %v2033 = vpop.permute.xlu0 %2032
        %2034 = vrot.lane.b32.xlu0 %v906, 6
        %v2035 = vpop.permute.xlu0 %2034
        %2036 = vrot.lane.b32.xlu0 %v907, 6
        %v2037 = vpop.permute.xlu0 %2036
        %2038 = vrot.lane.b32.xlu0 %v908, 6
        %v2039 = vpop.permute.xlu0 %2038
        %2040 = vrot.lane.b32.xlu0 %v909, 6
        %v2041 = vpop.permute.xlu0 %2040
        %2042 = vrot.lane.b32.xlu0 %v910, 6
        %v2043 = vpop.permute.xlu0 %2042
        %2044 = vrot.lane.b32.xlu0 %v911, 6
        %v2045 = vpop.permute.xlu0 %2044
        %2046 = vrot.lane.b32.xlu0 %v912, 6
        %v2047 = vpop.permute.xlu0 %2046
        %2048 = vrot.lane.b32.xlu0 %v913, 6
        %v2049 = vpop.permute.xlu0 %2048
        %2050 = vrot.lane.b32.xlu0 %v914, 6
        %v2051 = vpop.permute.xlu0 %2050
        %2052 = vrot.lane.b32.xlu0 %v915, 6
        %v2053 = vpop.permute.xlu0 %2052
        %2054 = vrot.lane.b32.xlu0 %v916, 6
        %v2055 = vpop.permute.xlu0 %2054
        %2056 = vrot.lane.b32.xlu0 %v917, 6
        %v2057 = vpop.permute.xlu0 %2056
        %2058 = vrot.lane.b32.xlu0 %v918, 6
        %v2059 = vpop.permute.xlu0 %2058
        %2060 = vrot.lane.b32.xlu0 %v919, 6
        %v2061 = vpop.permute.xlu0 %2060
        %2062 = vrot.lane.b32.xlu0 %v920, 6
        %v2063 = vpop.permute.xlu0 %2062
        %2064 = vrot.lane.b32.xlu0 %v921, 6
        %v2065 = vpop.permute.xlu0 %2064
        %2066 = vrot.lane.b32.xlu0 %v922, 6
        %v2067 = vpop.permute.xlu0 %2066
        %2068 = vrot.lane.b32.xlu0 %v923, 6
        %v2069 = vpop.permute.xlu0 %2068
        %2070 = vrot.lane.b32.xlu0 %v924, 6
        %v2071 = vpop.permute.xlu0 %2070
        %2072 = vrot.lane.b32.xlu0 %v925, 6
        %v2073 = vpop.permute.xlu0 %2072
        %2074 = vrot.lane.b32.xlu0 %v926, 6
        %v2075 = vpop.permute.xlu0 %2074
        %2076 = vrot.lane.b32.xlu0 %v927, 6
        %v2077 = vpop.permute.xlu0 %2076
        %2078 = vrot.lane.b32.xlu0 %v928, 6
        %v2079 = vpop.permute.xlu0 %2078
        %2080 = vrot.lane.b32.xlu0 %v929, 6
        %v2081 = vpop.permute.xlu0 %2080
        %2178 = vrot.lane.b32.xlu0 %v930, 7
        %v2179 = vpop.permute.xlu0 %2178
        %2180 = vrot.lane.b32.xlu0 %v931, 7
        %v2181 = vpop.permute.xlu0 %2180
        %2182 = vrot.lane.b32.xlu0 %v932, 7
        %v2183 = vpop.permute.xlu0 %2182
        %2184 = vrot.lane.b32.xlu0 %v933, 7
        %v2185 = vpop.permute.xlu0 %2184
        %2186 = vrot.lane.b32.xlu0 %v934, 7
        %v2187 = vpop.permute.xlu0 %2186
        %2188 = vrot.lane.b32.xlu0 %v935, 7
        %v2189 = vpop.permute.xlu0 %2188
        %2190 = vrot.lane.b32.xlu0 %v936, 7
        %v2191 = vpop.permute.xlu0 %2190
        %2192 = vrot.lane.b32.xlu0 %v937, 7
        %v2193 = vpop.permute.xlu0 %2192
        %2194 = vrot.lane.b32.xlu0 %v938, 7
        %v2195 = vpop.permute.xlu0 %2194
        %2196 = vrot.lane.b32.xlu0 %v939, 7
        %v2197 = vpop.permute.xlu0 %2196
        %2198 = vrot.lane.b32.xlu0 %v940, 7
        %v2199 = vpop.permute.xlu0 %2198
        %2200 = vrot.lane.b32.xlu0 %v941, 7
        %v2201 = vpop.permute.xlu0 %2200
        %2202 = vrot.lane.b32.xlu0 %v942, 7
        %v2203 = vpop.permute.xlu0 %2202
        %2204 = vrot.lane.b32.xlu0 %v943, 7
        %v2205 = vpop.permute.xlu0 %2204
        %2206 = vrot.lane.b32.xlu0 %v944, 7
        %v2207 = vpop.permute.xlu0 %2206
        %2208 = vrot.lane.b32.xlu0 %v945, 7
        %v2209 = vpop.permute.xlu0 %2208
        %2210 = vrot.lane.b32.xlu0 %v946, 7
        %v2211 = vpop.permute.xlu0 %2210
        %2212 = vrot.lane.b32.xlu0 %v947, 7
        %v2213 = vpop.permute.xlu0 %2212
        %2214 = vrot.lane.b32.xlu0 %v948, 7
        %v2215 = vpop.permute.xlu0 %2214
        %2216 = vrot.lane.b32.xlu0 %v949, 7
        %v2217 = vpop.permute.xlu0 %2216
        %2218 = vrot.lane.b32.xlu0 %v950, 7
        %v2219 = vpop.permute.xlu0 %2218
        %2220 = vrot.lane.b32.xlu0 %v951, 7
        %v2221 = vpop.permute.xlu0 %2220
        %2222 = vrot.lane.b32.xlu0 %v952, 7
        %v2223 = vpop.permute.xlu0 %2222
        %2224 = vrot.lane.b32.xlu0 %v953, 7
        %v2225 = vpop.permute.xlu0 %2224
        %2226 = vrot.lane.b32.xlu0 %v954, 7
        %v2227 = vpop.permute.xlu0 %2226
        %2228 = vrot.lane.b32.xlu0 %v955, 7
        %v2229 = vpop.permute.xlu0 %2228
        %2230 = vrot.lane.b32.xlu0 %v956, 7
        %v2231 = vpop.permute.xlu0 %2230
        %2232 = vrot.lane.b32.xlu0 %v957, 7
        %v2233 = vpop.permute.xlu0 %2232
        %2234 = vrot.lane.b32.xlu0 %v958, 7
        %v2235 = vpop.permute.xlu0 %2234
        %2236 = vrot.lane.b32.xlu0 %v959, 7
        %v2237 = vpop.permute.xlu0 %2236
        %2238 = vrot.lane.b32.xlu0 %v960, 7
        %v2239 = vpop.permute.xlu0 %2238
        %2240 = vrot.lane.b32.xlu0 %v961, 7
        %v2241 = vpop.permute.xlu0 %2240
        %2242 = vrot.lane.b32.xlu0 %v962, 7
        %v2243 = vpop.permute.xlu0 %2242
        %2244 = vrot.lane.b32.xlu0 %v963, 7
        %v2245 = vpop.permute.xlu0 %2244
        %2246 = vrot.lane.b32.xlu0 %v964, 7
        %v2247 = vpop.permute.xlu0 %2246
        %2248 = vrot.lane.b32.xlu0 %v965, 7
        %v2249 = vpop.permute.xlu0 %2248
        %2250 = vrot.lane.b32.xlu0 %v966, 7
        %v2251 = vpop.permute.xlu0 %2250
        %2252 = vrot.lane.b32.xlu0 %v967, 7
        %v2253 = vpop.permute.xlu0 %2252
        %2254 = vrot.lane.b32.xlu0 %v968, 7
        %v2255 = vpop.permute.xlu0 %2254
        %2256 = vrot.lane.b32.xlu0 %v969, 7
        %v2257 = vpop.permute.xlu0 %2256
        %2258 = vrot.lane.b32.xlu0 %v970, 7
        %v2259 = vpop.permute.xlu0 %2258
        %2260 = vrot.lane.b32.xlu0 %v971, 7
        %v2261 = vpop.permute.xlu0 %2260
        %2262 = vrot.lane.b32.xlu0 %v972, 7
        %v2263 = vpop.permute.xlu0 %2262
        %2264 = vrot.lane.b32.xlu0 %v973, 7
        %v2265 = vpop.permute.xlu0 %2264
        %2266 = vrot.lane.b32.xlu0 %v974, 7
        %v2267 = vpop.permute.xlu0 %2266
        %2268 = vrot.lane.b32.xlu0 %v975, 7
        %v2269 = vpop.permute.xlu0 %2268
        %2270 = vrot.lane.b32.xlu0 %v976, 7
        %v2271 = vpop.permute.xlu0 %2270
        %2272 = vrot.lane.b32.xlu0 %v977, 7
        %v2273 = vpop.permute.xlu0 %2272
        %v2322 = vsel %vm498, %v594, %v1027
        %v2323 = vsel %vm498, %v595, %v1029
        %v2324 = vsel %vm498, %v596, %v1031
        %v2325 = vsel %vm498, %v597, %v1033
        %v2326 = vsel %vm498, %v598, %v1035
        %v2327 = vsel %vm498, %v599, %v1037
        %v2328 = vsel %vm498, %v600, %v1039
        %v2329 = vsel %vm498, %v601, %v1041
        %v2330 = vsel %vm498, %v602, %v1043
        %v2331 = vsel %vm498, %v603, %v1045
        %v2332 = vsel %vm498, %v604, %v1047
        %v2333 = vsel %vm498, %v605, %v1049
        %v2334 = vsel %vm498, %v606, %v1051
        %v2335 = vsel %vm498, %v607, %v1053
        %v2336 = vsel %vm498, %v608, %v1055
        %v2337 = vsel %vm498, %v609, %v1057
        %v2338 = vsel %vm498, %v610, %v1059
        %v2339 = vsel %vm498, %v611, %v1061
        %v2340 = vsel %vm498, %v612, %v1063
        %v2341 = vsel %vm498, %v613, %v1065
        %v2342 = vsel %vm498, %v614, %v1067
        %v2343 = vsel %vm498, %v615, %v1069
        %v2344 = vsel %vm498, %v616, %v1071
        %v2345 = vsel %vm498, %v617, %v1073
        %v2346 = vsel %vm498, %v618, %v1075
        %v2347 = vsel %vm498, %v619, %v1077
        %v2348 = vsel %vm498, %v620, %v1079
        %v2349 = vsel %vm498, %v621, %v1081
        %v2350 = vsel %vm498, %v622, %v1083
        %v2351 = vsel %vm498, %v623, %v1085
        %v2352 = vsel %vm498, %v624, %v1087
        %v2353 = vsel %vm498, %v625, %v1089
        %v2354 = vsel %vm498, %v626, %v1091
        %v2355 = vsel %vm498, %v627, %v1093
        %v2356 = vsel %vm498, %v628, %v1095
        %v2357 = vsel %vm498, %v629, %v1097
        %v2358 = vsel %vm498, %v630, %v1099
        %v2359 = vsel %vm498, %v631, %v1101
        %v2360 = vsel %vm498, %v632, %v1103
        %v2361 = vsel %vm498, %v633, %v1105
        %v2362 = vsel %vm498, %v634, %v1107
        %v2363 = vsel %vm498, %v635, %v1109
        %v2364 = vsel %vm498, %v636, %v1111
        %v2365 = vsel %vm498, %v637, %v1113
        %v2366 = vsel %vm498, %v638, %v1115
        %v2367 = vsel %vm498, %v639, %v1117
        %v2368 = vsel %vm498, %v640, %v1119
        %v2369 = vsel %vm498, %v641, %v1121
        %vm2370 = vcmask 15360
        %v2371 = vsel %vm2370, %v2322, %v1219
        %v2372 = vsel %vm2370, %v2323, %v1221
        %v2373 = vsel %vm2370, %v2324, %v1223
        %v2374 = vsel %vm2370, %v2325, %v1225
        %v2375 = vsel %vm2370, %v2326, %v1227
        %v2376 = vsel %vm2370, %v2327, %v1229
        %v2377 = vsel %vm2370, %v2328, %v1231
        %v2378 = vsel %vm2370, %v2329, %v1233
        %v2379 = vsel %vm2370, %v2330, %v1235
        %v2380 = vsel %vm2370, %v2331, %v1237
        %v2381 = vsel %vm2370, %v2332, %v1239
        %v2382 = vsel %vm2370, %v2333, %v1241
        %v2383 = vsel %vm2370, %v2334, %v1243
        %v2384 = vsel %vm2370, %v2335, %v1245
        %v2385 = vsel %vm2370, %v2336, %v1247
        %v2386 = vsel %vm2370, %v2337, %v1249
        %v2387 = vsel %vm2370, %v2338, %v1251
        %v2388 = vsel %vm2370, %v2339, %v1253
        %v2389 = vsel %vm2370, %v2340, %v1255
        %v2390 = vsel %vm2370, %v2341, %v1257
        %v2391 = vsel %vm2370, %v2342, %v1259
        %v2392 = vsel %vm2370, %v2343, %v1261
        %v2393 = vsel %vm2370, %v2344, %v1263
        %v2394 = vsel %vm2370, %v2345, %v1265
        %v2395 = vsel %vm2370, %v2346, %v1267
        %v2396 = vsel %vm2370, %v2347, %v1269
        %v2397 = vsel %vm2370, %v2348, %v1271
        %v2398 = vsel %vm2370, %v2349, %v1273
        %v2399 = vsel %vm2370, %v2350, %v1275
        %v2400 = vsel %vm2370, %v2351, %v1277
        %v2401 = vsel %vm2370, %v2352, %v1279
        %v2402 = vsel %vm2370, %v2353, %v1281
        %v2403 = vsel %vm2370, %v2354, %v1283
        %v2404 = vsel %vm2370, %v2355, %v1285
        %v2405 = vsel %vm2370, %v2356, %v1287
        %v2406 = vsel %vm2370, %v2357, %v1289
        %v2407 = vsel %vm2370, %v2358, %v1291
        %v2408 = vsel %vm2370, %v2359, %v1293
        %v2409 = vsel %vm2370, %v2360, %v1295
        %v2410 = vsel %vm2370, %v2361, %v1297
        %v2411 = vsel %vm2370, %v2362, %v1299
        %v2412 = vsel %vm2370, %v2363, %v1301
        %v2413 = vsel %vm2370, %v2364, %v1303
        %v2414 = vsel %vm2370, %v2365, %v1305
        %v2415 = vsel %vm2370, %v2366, %v1307
        %v2416 = vsel %vm2370, %v2367, %v1309
        %v2417 = vsel %vm2370, %v2368, %v1311
        %v2418 = vsel %vm2370, %v2369, %v1313
        %vm2419 = vcmask 23552
        %v2420 = vsel %vm2419, %v2371, %v1411
        %v2421 = vsel %vm2419, %v2372, %v1413
        %v2422 = vsel %vm2419, %v2373, %v1415
        %v2423 = vsel %vm2419, %v2374, %v1417
        %v2424 = vsel %vm2419, %v2375, %v1419
        %v2425 = vsel %vm2419, %v2376, %v1421
        %v2426 = vsel %vm2419, %v2377, %v1423
        %v2427 = vsel %vm2419, %v2378, %v1425
        %v2428 = vsel %vm2419, %v2379, %v1427
        %v2429 = vsel %vm2419, %v2380, %v1429
        %v2430 = vsel %vm2419, %v2381, %v1431
        %v2431 = vsel %vm2419, %v2382, %v1433
        %v2432 = vsel %vm2419, %v2383, %v1435
        %v2433 = vsel %vm2419, %v2384, %v1437
        %v2434 = vsel %vm2419, %v2385, %v1439
        %v2435 = vsel %vm2419, %v2386, %v1441
        %v2436 = vsel %vm2419, %v2387, %v1443
        %v2437 = vsel %vm2419, %v2388, %v1445
        %v2438 = vsel %vm2419, %v2389, %v1447
        %v2439 = vsel %vm2419, %v2390, %v1449
        %v2440 = vsel %vm2419, %v2391, %v1451
        %v2441 = vsel %vm2419, %v2392, %v1453
        %v2442 = vsel %vm2419, %v2393, %v1455
        %v2443 = vsel %vm2419, %v2394, %v1457
        %v2444 = vsel %vm2419, %v2395, %v1459
        %v2445 = vsel %vm2419, %v2396, %v1461
        %v2446 = vsel %vm2419, %v2397, %v1463
        %v2447 = vsel %vm2419, %v2398, %v1465
        %v2448 = vsel %vm2419, %v2399, %v1467
        %v2449 = vsel %vm2419, %v2400, %v1469
        %v2450 = vsel %vm2419, %v2401, %v1471
        %v2451 = vsel %vm2419, %v2402, %v1473
        %v2452 = vsel %vm2419, %v2403, %v1475
        %v2453 = vsel %vm2419, %v2404, %v1477
        %v2454 = vsel %vm2419, %v2405, %v1479
        %v2455 = vsel %vm2419, %v2406, %v1481
        %v2456 = vsel %vm2419, %v2407, %v1483
        %v2457 = vsel %vm2419, %v2408, %v1485
        %v2458 = vsel %vm2419, %v2409, %v1487
        %v2459 = vsel %vm2419, %v2410, %v1489
        %v2460 = vsel %vm2419, %v2411, %v1491
        %v2461 = vsel %vm2419, %v2412, %v1493
        %v2462 = vsel %vm2419, %v2413, %v1495
        %v2463 = vsel %vm2419, %v2414, %v1497
        %v2464 = vsel %vm2419, %v2415, %v1499
        %v2465 = vsel %vm2419, %v2416, %v1501
        %v2466 = vsel %vm2419, %v2417, %v1503
        %v2467 = vsel %vm2419, %v2418, %v1505
        %vm2468 = vcmask 31744
        %v2469 = vsel %vm2468, %v2420, %v1603
        %v2470 = vsel %vm2468, %v2421, %v1605
        %v2471 = vsel %vm2468, %v2422, %v1607
        %v2472 = vsel %vm2468, %v2423, %v1609
        %v2473 = vsel %vm2468, %v2424, %v1611
        %v2474 = vsel %vm2468, %v2425, %v1613
        %v2475 = vsel %vm2468, %v2426, %v1615
        %v2476 = vsel %vm2468, %v2427, %v1617
        %v2477 = vsel %vm2468, %v2428, %v1619
        %v2478 = vsel %vm2468, %v2429, %v1621
        %v2479 = vsel %vm2468, %v2430, %v1623
        %v2480 = vsel %vm2468, %v2431, %v1625
        %v2481 = vsel %vm2468, %v2432, %v1627
        %v2482 = vsel %vm2468, %v2433, %v1629
        %v2483 = vsel %vm2468, %v2434, %v1631
        %v2484 = vsel %vm2468, %v2435, %v1633
        %v2485 = vsel %vm2468, %v2436, %v1635
        %v2486 = vsel %vm2468, %v2437, %v1637
        %v2487 = vsel %vm2468, %v2438, %v1639
        %v2488 = vsel %vm2468, %v2439, %v1641
        %v2489 = vsel %vm2468, %v2440, %v1643
        %v2490 = vsel %vm2468, %v2441, %v1645
        %v2491 = vsel %vm2468, %v2442, %v1647
        %v2492 = vsel %vm2468, %v2443, %v1649
        %v2493 = vsel %vm2468, %v2444, %v1651
        %v2494 = vsel %vm2468, %v2445, %v1653
        %v2495 = vsel %vm2468, %v2446, %v1655
        %v2496 = vsel %vm2468, %v2447, %v1657
        %v2497 = vsel %vm2468, %v2448, %v1659
        %v2498 = vsel %vm2468, %v2449, %v1661
        %v2499 = vsel %vm2468, %v2450, %v1663
        %v2500 = vsel %vm2468, %v2451, %v1665
        %v2501 = vsel %vm2468, %v2452, %v1667
        %v2502 = vsel %vm2468, %v2453, %v1669
        %v2503 = vsel %vm2468, %v2454, %v1671
        %v2504 = vsel %vm2468, %v2455, %v1673
        %v2505 = vsel %vm2468, %v2456, %v1675
        %v2506 = vsel %vm2468, %v2457, %v1677
        %v2507 = vsel %vm2468, %v2458, %v1679
        %v2508 = vsel %vm2468, %v2459, %v1681
        %v2509 = vsel %vm2468, %v2460, %v1683
        %v2510 = vsel %vm2468, %v2461, %v1685
        %v2511 = vsel %vm2468, %v2462, %v1687
        %v2512 = vsel %vm2468, %v2463, %v1689
        %v2513 = vsel %vm2468, %v2464, %v1691
        %v2514 = vsel %vm2468, %v2465, %v1693
        %v2515 = vsel %vm2468, %v2466, %v1695
        %v2516 = vsel %vm2468, %v2467, %v1697
        %vm2517 = vcmask 39936
        %v2518 = vsel %vm2517, %v2469, %v1795
        %v2519 = vsel %vm2517, %v2470, %v1797
        %v2520 = vsel %vm2517, %v2471, %v1799
        %v2521 = vsel %vm2517, %v2472, %v1801
        %v2522 = vsel %vm2517, %v2473, %v1803
        %v2523 = vsel %vm2517, %v2474, %v1805
        %v2524 = vsel %vm2517, %v2475, %v1807
        %v2525 = vsel %vm2517, %v2476, %v1809
        %v2526 = vsel %vm2517, %v2477, %v1811
        %v2527 = vsel %vm2517, %v2478, %v1813
        %v2528 = vsel %vm2517, %v2479, %v1815
        %v2529 = vsel %vm2517, %v2480, %v1817
        %v2530 = vsel %vm2517, %v2481, %v1819
        %v2531 = vsel %vm2517, %v2482, %v1821
        %v2532 = vsel %vm2517, %v2483, %v1823
        %v2533 = vsel %vm2517, %v2484, %v1825
        %v2534 = vsel %vm2517, %v2485, %v1827
        %v2535 = vsel %vm2517, %v2486, %v1829
        %v2536 = vsel %vm2517, %v2487, %v1831
        %v2537 = vsel %vm2517, %v2488, %v1833
        %v2538 = vsel %vm2517, %v2489, %v1835
        %v2539 = vsel %vm2517, %v2490, %v1837
        %v2540 = vsel %vm2517, %v2491, %v1839
        %v2541 = vsel %vm2517, %v2492, %v1841
        %v2542 = vsel %vm2517, %v2493, %v1843
        %v2543 = vsel %vm2517, %v2494, %v1845
        %v2544 = vsel %vm2517, %v2495, %v1847
        %v2545 = vsel %vm2517, %v2496, %v1849
        %v2546 = vsel %vm2517, %v2497, %v1851
        %v2547 = vsel %vm2517, %v2498, %v1853
        %v2548 = vsel %vm2517, %v2499, %v1855
        %v2549 = vsel %vm2517, %v2500, %v1857
        %v2550 = vsel %vm2517, %v2501, %v1859
        %v2551 = vsel %vm2517, %v2502, %v1861
        %v2552 = vsel %vm2517, %v2503, %v1863
        %v2553 = vsel %vm2517, %v2504, %v1865
        %v2554 = vsel %vm2517, %v2505, %v1867
        %v2555 = vsel %vm2517, %v2506, %v1869
        %v2556 = vsel %vm2517, %v2507, %v1871
        %v2557 = vsel %vm2517, %v2508, %v1873
        %v2558 = vsel %vm2517, %v2509, %v1875
        %v2559 = vsel %vm2517, %v2510, %v1877
        %v2560 = vsel %vm2517, %v2511, %v1879
        %v2561 = vsel %vm2517, %v2512, %v1881
        %v2562 = vsel %vm2517, %v2513, %v1883
        %v2563 = vsel %vm2517, %v2514, %v1885
        %v2564 = vsel %vm2517, %v2515, %v1887
        %v2565 = vsel %vm2517, %v2516, %v1889
        %vm2566 = vcmask 48128
        %v2567 = vsel %vm2566, %v2518, %v1987
        %v2568 = vsel %vm2566, %v2519, %v1989
        %v2569 = vsel %vm2566, %v2520, %v1991
        %v2570 = vsel %vm2566, %v2521, %v1993
        %v2571 = vsel %vm2566, %v2522, %v1995
        %v2572 = vsel %vm2566, %v2523, %v1997
        %v2573 = vsel %vm2566, %v2524, %v1999
        %v2574 = vsel %vm2566, %v2525, %v2001
        %v2575 = vsel %vm2566, %v2526, %v2003
        %v2576 = vsel %vm2566, %v2527, %v2005
        %v2577 = vsel %vm2566, %v2528, %v2007
        %v2578 = vsel %vm2566, %v2529, %v2009
        %v2579 = vsel %vm2566, %v2530, %v2011
        %v2580 = vsel %vm2566, %v2531, %v2013
        %v2581 = vsel %vm2566, %v2532, %v2015
        %v2582 = vsel %vm2566, %v2533, %v2017
        %v2583 = vsel %vm2566, %v2534, %v2019
        %v2584 = vsel %vm2566, %v2535, %v2021
        %v2585 = vsel %vm2566, %v2536, %v2023
        %v2586 = vsel %vm2566, %v2537, %v2025
        %v2587 = vsel %vm2566, %v2538, %v2027
        %v2588 = vsel %vm2566, %v2539, %v2029
        %v2589 = vsel %vm2566, %v2540, %v2031
        %v2590 = vsel %vm2566, %v2541, %v2033
        %v2591 = vsel %vm2566, %v2542, %v2035
        %v2592 = vsel %vm2566, %v2543, %v2037
        %v2593 = vsel %vm2566, %v2544, %v2039
        %v2594 = vsel %vm2566, %v2545, %v2041
        %v2595 = vsel %vm2566, %v2546, %v2043
        %v2596 = vsel %vm2566, %v2547, %v2045
        %v2597 = vsel %vm2566, %v2548, %v2047
        %v2598 = vsel %vm2566, %v2549, %v2049
        %v2599 = vsel %vm2566, %v2550, %v2051
        %v2600 = vsel %vm2566, %v2551, %v2053
        %v2601 = vsel %vm2566, %v2552, %v2055
        %v2602 = vsel %vm2566, %v2553, %v2057
        %v2603 = vsel %vm2566, %v2554, %v2059
        %v2604 = vsel %vm2566, %v2555, %v2061
        %v2605 = vsel %vm2566, %v2556, %v2063
        %v2606 = vsel %vm2566, %v2557, %v2065
        %v2607 = vsel %vm2566, %v2558, %v2067
        %v2608 = vsel %vm2566, %v2559, %v2069
        %v2609 = vsel %vm2566, %v2560, %v2071
        %v2610 = vsel %vm2566, %v2561, %v2073
        %v2611 = vsel %vm2566, %v2562, %v2075
        %v2612 = vsel %vm2566, %v2563, %v2077
        %v2613 = vsel %vm2566, %v2564, %v2079
        %v2614 = vsel %vm2566, %v2565, %v2081
        %vm2615 = vcmask 56320
        %v2616 = vsel %vm2615, %v2567, %v2179
        %v2617 = vsel %vm2615, %v2568, %v2181
        %v2618 = vsel %vm2615, %v2569, %v2183
        %v2619 = vsel %vm2615, %v2570, %v2185
        %v2620 = vsel %vm2615, %v2571, %v2187
        %v2621 = vsel %vm2615, %v2572, %v2189
        %v2622 = vsel %vm2615, %v2573, %v2191
        %v2623 = vsel %vm2615, %v2574, %v2193
        %v2624 = vsel %vm2615, %v2575, %v2195
        %v2625 = vsel %vm2615, %v2576, %v2197
        %v2626 = vsel %vm2615, %v2577, %v2199
        %v2627 = vsel %vm2615, %v2578, %v2201
        %v2628 = vsel %vm2615, %v2579, %v2203
        %v2629 = vsel %vm2615, %v2580, %v2205
        %v2630 = vsel %vm2615, %v2581, %v2207
        %v2631 = vsel %vm2615, %v2582, %v2209
        %v2632 = vsel %vm2615, %v2583, %v2211
        %v2633 = vsel %vm2615, %v2584, %v2213
        %v2634 = vsel %vm2615, %v2585, %v2215
        %v2635 = vsel %vm2615, %v2586, %v2217
        %v2636 = vsel %vm2615, %v2587, %v2219
        %v2637 = vsel %vm2615, %v2588, %v2221
        %v2638 = vsel %vm2615, %v2589, %v2223
        %v2639 = vsel %vm2615, %v2590, %v2225
        %v2640 = vsel %vm2615, %v2591, %v2227
        %v2641 = vsel %vm2615, %v2592, %v2229
        %v2642 = vsel %vm2615, %v2593, %v2231
        %v2643 = vsel %vm2615, %v2594, %v2233
        %v2644 = vsel %vm2615, %v2595, %v2235
        %v2645 = vsel %vm2615, %v2596, %v2237
        %v2646 = vsel %vm2615, %v2597, %v2239
        %v2647 = vsel %vm2615, %v2598, %v2241
        %v2648 = vsel %vm2615, %v2599, %v2243
        %v2649 = vsel %vm2615, %v2600, %v2245
        %v2650 = vsel %vm2615, %v2601, %v2247
        %v2651 = vsel %vm2615, %v2602, %v2249
        %v2652 = vsel %vm2615, %v2603, %v2251
        %v2653 = vsel %vm2615, %v2604, %v2253
        %v2654 = vsel %vm2615, %v2605, %v2255
        %v2655 = vsel %vm2615, %v2606, %v2257
        %v2656 = vsel %vm2615, %v2607, %v2259
        %v2657 = vsel %vm2615, %v2608, %v2261
        %v2658 = vsel %vm2615, %v2609, %v2263
        %v2659 = vsel %vm2615, %v2610, %v2265
        %v2660 = vsel %vm2615, %v2611, %v2267
        %v2661 = vsel %vm2615, %v2612, %v2269
        %v2662 = vsel %vm2615, %v2613, %v2271
        %v2663 = vsel %vm2615, %v2614, %v2273
        %v2664 = vld [vmem:[%s1] sm:$0xff]
        %vm2665 = vcmask 64512
        %v2667 = vsel %vm2665, %v2616, 0
        %v2670 = vsel %vm2665, %v2617, 0
        %v2673 = vsel %vm2665, %v2618, 0
        %v2676 = vsel %vm2665, %v2619, 0
        %v2679 = vsel %vm2665, %v2620, 0
        %v2682 = vsel %vm2665, %v2621, 0
        %v2685 = vsel %vm2665, %v2622, 0
        %v2688 = vsel %vm2665, %v2623, 0
        %v2691 = vsel %vm2665, %v2624, 0
        %v2694 = vsel %vm2665, %v2625, 0
        %v2697 = vsel %vm2665, %v2626, 0
        %v2700 = vsel %vm2665, %v2627, 0
        %v2703 = vsel %vm2665, %v2628, 0
        %v2706 = vsel %vm2665, %v2629, 0
        %v2709 = vsel %vm2665, %v2630, 0
        %v2712 = vsel %vm2665, %v2631, 0
        %v2715 = vsel %vm2665, %v2632, 0
        %v2718 = vsel %vm2665, %v2633, 0
        %v2721 = vsel %vm2665, %v2634, 0
        %v2724 = vsel %vm2665, %v2635, 0
        %v2727 = vsel %vm2665, %v2636, 0
        %v2730 = vsel %vm2665, %v2637, 0
        %v2733 = vsel %vm2665, %v2638, 0
        %v2736 = vsel %vm2665, %v2639, 0
        %v2739 = vsel %vm2665, %v2640, 0
        %v2742 = vsel %vm2665, %v2641, 0
        %v2745 = vsel %vm2665, %v2642, 0
        %v2748 = vsel %vm2665, %v2643, 0
        %v2751 = vsel %vm2665, %v2644, 0
        %v2754 = vsel %vm2665, %v2645, 0
        %v2757 = vsel %vm2665, %v2646, 0
        %v2760 = vsel %vm2665, %v2647, 0
        %v2763 = vsel %vm2665, %v2648, 0
        %v2766 = vsel %vm2665, %v2649, 0
        %v2769 = vsel %vm2665, %v2650, 0
        %v2772 = vsel %vm2665, %v2651, 0
        %v2775 = vsel %vm2665, %v2652, 0
        %v2778 = vsel %vm2665, %v2653, 0
        %v2781 = vsel %vm2665, %v2654, 0
        %v2784 = vsel %vm2665, %v2655, 0
        %v2787 = vsel %vm2665, %v2656, 0
        %v2790 = vsel %vm2665, %v2657, 0
        %v2793 = vsel %vm2665, %v2658, 0
        %v2796 = vsel %vm2665, %v2659, 0
        %v2799 = vsel %vm2665, %v2660, 0
        %v2802 = vsel %vm2665, %v2661, 0
        %v2805 = vsel %vm2665, %v2662, 0
        %v2808 = vsel %vm2665, %v2663, 0
        %2810 = vmatprep.subr.mxu0 0.0
        %2811 = vmatpush1.msra.mxu0 %v2664
        %2812 = vmatprep.subr.mxu0 0.0
        %2813 = vmatpush1.msra.mxu0 0.0
        %2814 = vmatprep.subr.mxu0 0.0
        %2815 = vmatpush1.msra.mxu0 0.0
        %2816 = vmatprep.subr.mxu0 0.0
        %2817 = vmatpush1.msra.mxu0 0.0
        %2818 = vmatprep.subr.mxu0 0.0
        %2819 = vmatpush1.msra.mxu0 0.0
        %2820 = vmatprep.subr.mxu0 0.0
        %2821 = vmatpush1.msra.mxu0 0.0
        %2822 = vmatprep.subr.mxu0 0.0
        %2823 = vmatpush1.msra.mxu0 0.0
        %2824 = vmatprep.subr.mxu0 0.0
        %2825 = vmatpush1.msra.mxu0 0.0
        %2826 = vmatprep.subr.mxu0 0.0
        %2827 = vmatpush1.msra.mxu0 0.0
        %2828 = vmatprep.subr.mxu0 0.0
        %2829 = vmatpush1.msra.mxu0 0.0
        %2830 = vmatprep.subr.mxu0 0.0
        %2831 = vmatpush1.msra.mxu0 0.0
        %2832 = vmatprep.subr.mxu0 0.0
        %2833 = vmatpush1.msra.mxu0 0.0
        %2834 = vmatprep.subr.mxu0 0.0
        %2835 = vmatpush1.msra.mxu0 0.0
        %2836 = vmatprep.subr.mxu0 0.0
        %2837 = vmatpush1.msra.mxu0 0.0
        %2838 = vmatprep.subr.mxu0 0.0
        %2839 = vmatpush1.msra.mxu0 0.0
        %2840 = vmatprep.subr.mxu0 0.0
        %2841 = vmatpush1.msra.mxu0 0.0
        %2842 = vmatprep.subr.mxu0 0.0
        %2843 = vmatpush1.msra.mxu0 0.0
        %2844 = vmatprep.subr.mxu0 0.0
        %2845 = vmatpush1.msra.mxu0 0.0
        %2846 = vmatprep.subr.mxu0 0.0
        %2847 = vmatpush1.msra.mxu0 0.0
        %2848 = vmatprep.subr.mxu0 0.0
        %2849 = vmatpush1.msra.mxu0 0.0
        %2850 = vmatprep.subr.mxu0 0.0
        %2851 = vmatpush1.msra.mxu0 0.0
        %2852 = vmatprep.subr.mxu0 0.0
        %2853 = vmatpush1.msra.mxu0 0.0
        %2854 = vmatprep.subr.mxu0 0.0
        %2855 = vmatpush1.msra.mxu0 0.0
        %2856 = vmatprep.subr.mxu0 0.0
        %2857 = vmatpush1.msra.mxu0 0.0
        %2858 = vmatprep.subr.mxu0 0.0
        %2859 = vmatpush1.msra.mxu0 0.0
        %2860 = vmatprep.subr.mxu0 0.0
        %2861 = vmatpush1.msra.mxu0 0.0
        %2862 = vmatprep.subr.mxu0 0.0
        %2863 = vmatpush1.msra.mxu0 0.0
        %2864 = vmatprep.subr.mxu0 0.0
        %2865 = vmatpush1.msra.mxu0 0.0
        %2866 = vmatprep.subr.mxu0 0.0
        %2867 = vmatpush1.msra.mxu0 0.0
        %2868 = vmatprep.subr.mxu0 0.0
        %2869 = vmatpush1.msra.mxu0 0.0
        %2870 = vmatprep.subr.mxu0 0.0
        %2871 = vmatpush1.msra.mxu0 0.0
        %2872 = vmatprep.subr.mxu0 0.0
        %2873 = vmatpush1.msra.mxu0 0.0
        %2874 = vmatprep.mubr.f32.mxu0 0.0
        %2875 = vmatmul.mubr.f32.gmra.mrb[0].mxu0 %v2667
        %v2876 = vpop.f32.mrb[0].mxu0
        %v2877 = vadd.f32 0.0, %v2876
        %v2878 = vpop.f32.mrb[0].mxu0
        %2879 = vmatprep.mubr.f32.mxu0 0.0
        %2880 = vmatmul.mubr.f32.gmra.mrb[0].mxu0 %v2670
        %v2881 = vpop.f32.mrb[0].mxu0
        %v2882 = vadd.f32 0.0, %v2881
        %v2883 = vpop.f32.mrb[0].mxu0
        %2884 = vmatprep.mubr.f32.mxu0 0.0
        %2885 = vmatmul.mubr.f32.gmra.mrb[0].mxu0 %v2673
        %v2886 = vpop.f32.mrb[0].mxu0
        %v2887 = vadd.f32 0.0, %v2886
        %v2888 = vpop.f32.mrb[0].mxu0
        %2889 = vmatprep.mubr.f32.mxu0 0.0
        %2890 = vmatmul.mubr.f32.gmra.mrb[0].mxu0 %v2676
        %v2891 = vpop.f32.mrb[0].mxu0
        %v2892 = vadd.f32 0.0, %v2891
        %v2893 = vpop.f32.mrb[0].mxu0
        %2894 = vmatprep.mubr.f32.mxu0 0.0
        %2895 = vmatmul.mubr.f32.gmra.mrb[0].mxu0 %v2679
        %v2896 = vpop.f32.mrb[0].mxu0
        %v2897 = vadd.f32 0.0, %v2896
        %v2898 = vpop.f32.mrb[0].mxu0
        %2899 = vmatprep.mubr.f32.mxu0 0.0
        %2900 = vmatmul.mubr.f32.gmra.mrb[0].mxu0 %v2682
        %v2901 = vpop.f32.mrb[0].mxu0
        %v2902 = vadd.f32 0.0, %v2901
        %v2903 = vpop.f32.mrb[0].mxu0
        %2904 = vmatprep.mubr.f32.mxu0 0.0
        %2905 = vmatmul.mubr.f32.gmra.mrb[0].mxu0 %v2685
        %v2906 = vpop.f32.mrb[0].mxu0
        %v2907 = vadd.f32 0.0, %v2906
        %v2908 = vpop.f32.mrb[0].mxu0
        %2909 = vmatprep.mubr.f32.mxu0 0.0
        %2910 = vmatmul.mubr.f32.gmra.mrb[0].mxu0 %v2688
        %v2911 = vpop.f32.mrb[0].mxu0
        %v2912 = vadd.f32 0.0, %v2911
        %v2913 = vpop.f32.mrb[0].mxu0
        %2914 = vmatprep.mubr.f32.mxu0 0.0
        %2915 = vmatmul.mubr.f32.gmra.mrb[0].mxu0 %v2691
        %v2916 = vpop.f32.mrb[0].mxu0
        %v2917 = vadd.f32 0.0, %v2916
        %v2918 = vpop.f32.mrb[0].mxu0
        %2919 = vmatprep.mubr.f32.mxu0 0.0
        %2920 = vmatmul.mubr.f32.gmra.mrb[0].mxu0 %v2694
        %v2921 = vpop.f32.mrb[0].mxu0
        %v2922 = vadd.f32 0.0, %v2921
        %v2923 = vpop.f32.mrb[0].mxu0
        %2924 = vmatprep.mubr.f32.mxu0 0.0
        %2925 = vmatmul.mubr.f32.gmra.mrb[0].mxu0 %v2697
        %v2926 = vpop.f32.mrb[0].mxu0
        %v2927 = vadd.f32 0.0, %v2926
        %v2928 = vpop.f32.mrb[0].mxu0
        %2929 = vmatprep.mubr.f32.mxu0 0.0
        %2930 = vmatmul.mubr.f32.gmra.mrb[0].mxu0 %v2700
        %v2931 = vpop.f32.mrb[0].mxu0
        %v2932 = vadd.f32 0.0, %v2931
        %v2933 = vpop.f32.mrb[0].mxu0
        %2934 = vmatprep.mubr.f32.mxu0 0.0
        %2935 = vmatmul.mubr.f32.gmra.mrb[0].mxu0 %v2703
        %v2936 = vpop.f32.mrb[0].mxu0
        %v2937 = vadd.f32 0.0, %v2936
        %v2938 = vpop.f32.mrb[0].mxu0
        %2939 = vmatprep.mubr.f32.mxu0 0.0
        %2940 = vmatmul.mubr.f32.gmra.mrb[0].mxu0 %v2706
        %v2941 = vpop.f32.mrb[0].mxu0
        %v2942 = vadd.f32 0.0, %v2941
        %v2943 = vpop.f32.mrb[0].mxu0
        %2944 = vmatprep.mubr.f32.mxu0 0.0
        %2945 = vmatmul.mubr.f32.gmra.mrb[0].mxu0 %v2709
        %v2946 = vpop.f32.mrb[0].mxu0
        %v2947 = vadd.f32 0.0, %v2946
        %v2948 = vpop.f32.mrb[0].mxu0
        %2949 = vmatprep.mubr.f32.mxu0 0.0
        %2950 = vmatmul.mubr.f32.gmra.mrb[0].mxu0 %v2712
        %v2951 = vpop.f32.mrb[0].mxu0
        %v2952 = vadd.f32 0.0, %v2951
        %v2953 = vpop.f32.mrb[0].mxu0
        %2954 = vmatprep.mubr.f32.mxu0 0.0
        %2955 = vmatmul.mubr.f32.gmra.mrb[0].mxu0 %v2715
        %v2956 = vpop.f32.mrb[0].mxu0
        %v2957 = vadd.f32 0.0, %v2956
        %v2958 = vpop.f32.mrb[0].mxu0
        %2959 = vmatprep.mubr.f32.mxu0 0.0
        %2960 = vmatmul.mubr.f32.gmra.mrb[0].mxu0 %v2718
        %v2961 = vpop.f32.mrb[0].mxu0
        %v2962 = vadd.f32 0.0, %v2961
        %v2963 = vpop.f32.mrb[0].mxu0
        %2964 = vmatprep.mubr.f32.mxu0 0.0
        %2965 = vmatmul.mubr.f32.gmra.mrb[0].mxu0 %v2721
        %v2966 = vpop.f32.mrb[0].mxu0
        %v2967 = vadd.f32 0.0, %v2966
        %v2968 = vpop.f32.mrb[0].mxu0
        %2969 = vmatprep.mubr.f32.mxu0 0.0
        %2970 = vmatmul.mubr.f32.gmra.mrb[0].mxu0 %v2724
        %v2971 = vpop.f32.mrb[0].mxu0
        %v2972 = vadd.f32 0.0, %v2971
        %v2973 = vpop.f32.mrb[0].mxu0
        %2974 = vmatprep.mubr.f32.mxu0 0.0
        %2975 = vmatmul.mubr.f32.gmra.mrb[0].mxu0 %v2727
        %v2976 = vpop.f32.mrb[0].mxu0
        %v2977 = vadd.f32 0.0, %v2976
        %v2978 = vpop.f32.mrb[0].mxu0
        %2979 = vmatprep.mubr.f32.mxu0 0.0
        %2980 = vmatmul.mubr.f32.gmra.mrb[0].mxu0 %v2730
        %v2981 = vpop.f32.mrb[0].mxu0
        %v2982 = vadd.f32 0.0, %v2981
        %v2983 = vpop.f32.mrb[0].mxu0
        %2984 = vmatprep.mubr.f32.mxu0 0.0
        %2985 = vmatmul.mubr.f32.gmra.mrb[0].mxu0 %v2733
        %v2986 = vpop.f32.mrb[0].mxu0
        %v2987 = vadd.f32 0.0, %v2986
        %v2988 = vpop.f32.mrb[0].mxu0
        %2989 = vmatprep.mubr.f32.mxu0 0.0
        %2990 = vmatmul.mubr.f32.gmra.mrb[0].mxu0 %v2736
        %v2991 = vpop.f32.mrb[0].mxu0
        %v2992 = vadd.f32 0.0, %v2991
        %v2993 = vpop.f32.mrb[0].mxu0
        %2994 = vmatprep.mubr.f32.mxu0 0.0
        %2995 = vmatmul.mubr.f32.gmra.mrb[0].mxu0 %v2739
        %v2996 = vpop.f32.mrb[0].mxu0
        %v2997 = vadd.f32 0.0, %v2996
        %v2998 = vpop.f32.mrb[0].mxu0
        %2999 = vmatprep.mubr.f32.mxu0 0.0
        %3000 = vmatmul.mubr.f32.gmra.mrb[0].mxu0 %v2742
        %v3001 = vpop.f32.mrb[0].mxu0
        %v3002 = vadd.f32 0.0, %v3001
        %v3003 = vpop.f32.mrb[0].mxu0
        %3004 = vmatprep.mubr.f32.mxu0 0.0
        %3005 = vmatmul.mubr.f32.gmra.mrb[0].mxu0 %v2745
        %v3006 = vpop.f32.mrb[0].mxu0
        %v3007 = vadd.f32 0.0, %v3006
        %v3008 = vpop.f32.mrb[0].mxu0
        %3009 = vmatprep.mubr.f32.mxu0 0.0
        %3010 = vmatmul.mubr.f32.gmra.mrb[0].mxu0 %v2748
        %v3011 = vpop.f32.mrb[0].mxu0
        %v3012 = vadd.f32 0.0, %v3011
        %v3013 = vpop.f32.mrb[0].mxu0
        %3014 = vmatprep.mubr.f32.mxu0 0.0
        %3015 = vmatmul.mubr.f32.gmra.mrb[0].mxu0 %v2751
        %v3016 = vpop.f32.mrb[0].mxu0
        %v3017 = vadd.f32 0.0, %v3016
        %v3018 = vpop.f32.mrb[0].mxu0
        %3019 = vmatprep.mubr.f32.mxu0 0.0
        %3020 = vmatmul.mubr.f32.gmra.mrb[0].mxu0 %v2754
        %v3021 = vpop.f32.mrb[0].mxu0
        %v3022 = vadd.f32 0.0, %v3021
        %v3023 = vpop.f32.mrb[0].mxu0
        %3024 = vmatprep.mubr.f32.mxu0 0.0
        %3025 = vmatmul.mubr.f32.gmra.mrb[0].mxu0 %v2757
        %v3026 = vpop.f32.mrb[0].mxu0
        %v3027 = vadd.f32 0.0, %v3026
        %v3028 = vpop.f32.mrb[0].mxu0
        %3029 = vmatprep.mubr.f32.mxu0 0.0
        %3030 = vmatmul.mubr.f32.gmra.mrb[0].mxu0 %v2760
        %v3031 = vpop.f32.mrb[0].mxu0
        %v3032 = vadd.f32 0.0, %v3031
        %v3033 = vpop.f32.mrb[0].mxu0
        %3034 = vmatprep.mubr.f32.mxu0 0.0
        %3035 = vmatmul.mubr.f32.gmra.mrb[0].mxu0 %v2763
        %v3036 = vpop.f32.mrb[0].mxu0
        %v3037 = vadd.f32 0.0, %v3036
        %v3038 = vpop.f32.mrb[0].mxu0
        %3039 = vmatprep.mubr.f32.mxu0 0.0
        %3040 = vmatmul.mubr.f32.gmra.mrb[0].mxu0 %v2766
        %v3041 = vpop.f32.mrb[0].mxu0
        %v3042 = vadd.f32 0.0, %v3041
        %v3043 = vpop.f32.mrb[0].mxu0
        %3044 = vmatprep.mubr.f32.mxu0 0.0
        %3045 = vmatmul.mubr.f32.gmra.mrb[0].mxu0 %v2769
        %v3046 = vpop.f32.mrb[0].mxu0
        %v3047 = vadd.f32 0.0, %v3046
        %v3048 = vpop.f32.mrb[0].mxu0
        %3049 = vmatprep.mubr.f32.mxu0 0.0
        %3050 = vmatmul.mubr.f32.gmra.mrb[0].mxu0 %v2772
        %v3051 = vpop.f32.mrb[0].mxu0
        %v3052 = vadd.f32 0.0, %v3051
        %v3053 = vpop.f32.mrb[0].mxu0
        %3054 = vmatprep.mubr.f32.mxu0 0.0
        %3055 = vmatmul.mubr.f32.gmra.mrb[0].mxu0 %v2775
        %v3056 = vpop.f32.mrb[0].mxu0
        %v3057 = vadd.f32 0.0, %v3056
        %v3058 = vpop.f32.mrb[0].mxu0
        %3059 = vmatprep.mubr.f32.mxu0 0.0
        %3060 = vmatmul.mubr.f32.gmra.mrb[0].mxu0 %v2778
        %v3061 = vpop.f32.mrb[0].mxu0
        %v3062 = vadd.f32 0.0, %v3061
        %v3063 = vpop.f32.mrb[0].mxu0
        %3064 = vmatprep.mubr.f32.mxu0 0.0
        %3065 = vmatmul.mubr.f32.gmra.mrb[0].mxu0 %v2781
        %v3066 = vpop.f32.mrb[0].mxu0
        %v3067 = vadd.f32 0.0, %v3066
        %v3068 = vpop.f32.mrb[0].mxu0
        %3069 = vmatprep.mubr.f32.mxu0 0.0
        %3070 = vmatmul.mubr.f32.gmra.mrb[0].mxu0 %v2784
        %v3071 = vpop.f32.mrb[0].mxu0
        %v3072 = vadd.f32 0.0, %v3071
        %v3073 = vpop.f32.mrb[0].mxu0
        %3074 = vmatprep.mubr.f32.mxu0 0.0
        %3075 = vmatmul.mubr.f32.gmra.mrb[0].mxu0 %v2787
        %v3076 = vpop.f32.mrb[0].mxu0
        %v3077 = vadd.f32 0.0, %v3076
        %v3078 = vpop.f32.mrb[0].mxu0
        %3079 = vmatprep.mubr.f32.mxu0 0.0
        %3080 = vmatmul.mubr.f32.gmra.mrb[0].mxu0 %v2790
        %v3081 = vpop.f32.mrb[0].mxu0
        %v3082 = vadd.f32 0.0, %v3081
        %v3083 = vpop.f32.mrb[0].mxu0
        %3084 = vmatprep.mubr.f32.mxu0 0.0
        %3085 = vmatmul.mubr.f32.gmra.mrb[0].mxu0 %v2793
        %v3086 = vpop.f32.mrb[0].mxu0
        %v3087 = vadd.f32 0.0, %v3086
        %v3088 = vpop.f32.mrb[0].mxu0
        %3089 = vmatprep.mubr.f32.mxu0 0.0
        %3090 = vmatmul.mubr.f32.gmra.mrb[0].mxu0 %v2796
        %v3091 = vpop.f32.mrb[0].mxu0
        %v3092 = vadd.f32 0.0, %v3091
        %v3093 = vpop.f32.mrb[0].mxu0
        %3094 = vmatprep.mubr.f32.mxu0 0.0
        %3095 = vmatmul.mubr.f32.gmra.mrb[0].mxu0 %v2799
        %v3096 = vpop.f32.mrb[0].mxu0
        %v3097 = vadd.f32 0.0, %v3096
        %v3098 = vpop.f32.mrb[0].mxu0
        %3099 = vmatprep.mubr.f32.mxu0 0.0
        %3100 = vmatmul.mubr.f32.gmra.mrb[0].mxu0 %v2802
        %v3101 = vpop.f32.mrb[0].mxu0
        %v3102 = vadd.f32 0.0, %v3101
        %v3103 = vpop.f32.mrb[0].mxu0
        %3104 = vmatprep.mubr.f32.mxu0 0.0
        %3105 = vmatmul.mubr.f32.gmra.mrb[0].mxu0 %v2805
        %v3106 = vpop.f32.mrb[0].mxu0
        %v3107 = vadd.f32 0.0, %v3106
        %v3108 = vpop.f32.mrb[0].mxu0
        %3109 = vmatprep.mubr.f32.mxu0 0.0
        %3110 = vmatmul.mubr.f32.gmra.mrb[0].mxu0 %v2808
        %v3111 = vpop.f32.mrb[0].mxu0
        %v3112 = vadd.f32 0.0, %v3111
        %v3113 = vpop.f32.mrb[0].mxu0
        %3114 = vdwg.mxu0
        %v3115 = vld [vmem:[%s2] sm:$0x1]
        %v3117 = vlaneseq
        %v3118 = vshrl.u32 %v3117, 7
        %v3119 = vsub.s32 0, %v3118
        %v3120 = vrot.slane %v3115, %v3119
        %v3122 = vmul.f32 %v2877, %v3120
        %v3123 = vmul.f32 %v2882, %v3120
        %v3124 = vmul.f32 %v2887, %v3120
        %v3125 = vmul.f32 %v2892, %v3120
        %v3126 = vmul.f32 %v2897, %v3120
        %v3127 = vmul.f32 %v2902, %v3120
        %v3128 = vmul.f32 %v2907, %v3120
        %v3129 = vmul.f32 %v2912, %v3120
        %v3130 = vmul.f32 %v2917, %v3120
        %v3131 = vmul.f32 %v2922, %v3120
        %v3132 = vmul.f32 %v2927, %v3120
        %v3133 = vmul.f32 %v2932, %v3120
        %v3134 = vmul.f32 %v2937, %v3120
        %v3135 = vmul.f32 %v2942, %v3120
        %v3136 = vmul.f32 %v2947, %v3120
        %v3137 = vmul.f32 %v2952, %v3120
        %v3138 = vmul.f32 %v2957, %v3120
        %v3139 = vmul.f32 %v2962, %v3120
        %v3140 = vmul.f32 %v2967, %v3120
        %v3141 = vmul.f32 %v2972, %v3120
        %v3142 = vmul.f32 %v2977, %v3120
        %v3143 = vmul.f32 %v2982, %v3120
        %v3144 = vmul.f32 %v2987, %v3120
        %v3145 = vmul.f32 %v2992, %v3120
        %v3146 = vmul.f32 %v2997, %v3120
        %v3147 = vmul.f32 %v3002, %v3120
        %v3148 = vmul.f32 %v3007, %v3120
        %v3149 = vmul.f32 %v3012, %v3120
        %v3150 = vmul.f32 %v3017, %v3120
        %v3151 = vmul.f32 %v3022, %v3120
        %v3152 = vmul.f32 %v3027, %v3120
        %v3153 = vmul.f32 %v3032, %v3120
        %v3154 = vmul.f32 %v3037, %v3120
        %v3155 = vmul.f32 %v3042, %v3120
        %v3156 = vmul.f32 %v3047, %v3120
        %v3157 = vmul.f32 %v3052, %v3120
        %v3158 = vmul.f32 %v3057, %v3120
        %v3159 = vmul.f32 %v3062, %v3120
        %v3160 = vmul.f32 %v3067, %v3120
        %v3161 = vmul.f32 %v3072, %v3120
        %v3162 = vmul.f32 %v3077, %v3120
        %v3163 = vmul.f32 %v3082, %v3120
        %v3164 = vmul.f32 %v3087, %v3120
        %v3165 = vmul.f32 %v3092, %v3120
        %v3166 = vmul.f32 %v3097, %v3120
        %v3167 = vmul.f32 %v3102, %v3120
        %v3168 = vmul.f32 %v3107, %v3120
        %v3169 = vmul.f32 %v3112, %v3120
        %v3170 = vld [vmem:[%s3] sm:$0x1]
        %v3172 = vlaneseq
        %v3173 = vshrl.u32 %v3172, 7
        %v3174 = vsub.s32 0, %v3173
        %v3175 = vrot.slane %v3170, %v3174
        %v3177 = vadd.f32 %v3122, %v3175
        %v3178 = vadd.f32 %v3123, %v3175
        %v3179 = vadd.f32 %v3124, %v3175
        %v3180 = vadd.f32 %v3125, %v3175
        %v3181 = vadd.f32 %v3126, %v3175
        %v3182 = vadd.f32 %v3127, %v3175
        %v3183 = vadd.f32 %v3128, %v3175
        %v3184 = vadd.f32 %v3129, %v3175
        %v3185 = vadd.f32 %v3130, %v3175
        %v3186 = vadd.f32 %v3131, %v3175
        %v3187 = vadd.f32 %v3132, %v3175
        %v3188 = vadd.f32 %v3133, %v3175
        %v3189 = vadd.f32 %v3134, %v3175
        %v3190 = vadd.f32 %v3135, %v3175
        %v3191 = vadd.f32 %v3136, %v3175
        %v3192 = vadd.f32 %v3137, %v3175
        %v3193 = vadd.f32 %v3138, %v3175
        %v3194 = vadd.f32 %v3139, %v3175
        %v3195 = vadd.f32 %v3140, %v3175
        %v3196 = vadd.f32 %v3141, %v3175
        %v3197 = vadd.f32 %v3142, %v3175
        %v3198 = vadd.f32 %v3143, %v3175
        %v3199 = vadd.f32 %v3144, %v3175
        %v3200 = vadd.f32 %v3145, %v3175
        %v3201 = vadd.f32 %v3146, %v3175
        %v3202 = vadd.f32 %v3147, %v3175
        %v3203 = vadd.f32 %v3148, %v3175
        %v3204 = vadd.f32 %v3149, %v3175
        %v3205 = vadd.f32 %v3150, %v3175
        %v3206 = vadd.f32 %v3151, %v3175
        %v3207 = vadd.f32 %v3152, %v3175
        %v3208 = vadd.f32 %v3153, %v3175
        %v3209 = vadd.f32 %v3154, %v3175
        %v3210 = vadd.f32 %v3155, %v3175
        %v3211 = vadd.f32 %v3156, %v3175
        %v3212 = vadd.f32 %v3157, %v3175
        %v3213 = vadd.f32 %v3158, %v3175
        %v3214 = vadd.f32 %v3159, %v3175
        %v3215 = vadd.f32 %v3160, %v3175
        %v3216 = vadd.f32 %v3161, %v3175
        %v3217 = vadd.f32 %v3162, %v3175
        %v3218 = vadd.f32 %v3163, %v3175
        %v3219 = vadd.f32 %v3164, %v3175
        %v3220 = vadd.f32 %v3165, %v3175
        %v3221 = vadd.f32 %v3166, %v3175
        %v3222 = vadd.f32 %v3167, %v3175
        %v3223 = vadd.f32 %v3168, %v3175
        %v3224 = vadd.f32 %v3169, %v3175
        %v3225 = vmax.f32 %v3177, 0.0
        %v3226 = vmax.f32 %v3178, 0.0
        %v3227 = vmax.f32 %v3179, 0.0
        %v3228 = vmax.f32 %v3180, 0.0
        %v3229 = vmax.f32 %v3181, 0.0
        %v3230 = vmax.f32 %v3182, 0.0
        %v3231 = vmax.f32 %v3183, 0.0
        %v3232 = vmax.f32 %v3184, 0.0
        %v3233 = vmax.f32 %v3185, 0.0
        %v3234 = vmax.f32 %v3186, 0.0
        %v3235 = vmax.f32 %v3187, 0.0
        %v3236 = vmax.f32 %v3188, 0.0
        %v3237 = vmax.f32 %v3189, 0.0
        %v3238 = vmax.f32 %v3190, 0.0
        %v3239 = vmax.f32 %v3191, 0.0
        %v3240 = vmax.f32 %v3192, 0.0
        %v3241 = vmax.f32 %v3193, 0.0
        %v3242 = vmax.f32 %v3194, 0.0
        %v3243 = vmax.f32 %v3195, 0.0
        %v3244 = vmax.f32 %v3196, 0.0
        %v3245 = vmax.f32 %v3197, 0.0
        %v3246 = vmax.f32 %v3198, 0.0
        %v3247 = vmax.f32 %v3199, 0.0
        %v3248 = vmax.f32 %v3200, 0.0
        %v3249 = vmax.f32 %v3201, 0.0
        %v3250 = vmax.f32 %v3202, 0.0
        %v3251 = vmax.f32 %v3203, 0.0
        %v3252 = vmax.f32 %v3204, 0.0
        %v3253 = vmax.f32 %v3205, 0.0
        %v3254 = vmax.f32 %v3206, 0.0
        %v3255 = vmax.f32 %v3207, 0.0
        %v3256 = vmax.f32 %v3208, 0.0
        %v3257 = vmax.f32 %v3209, 0.0
        %v3258 = vmax.f32 %v3210, 0.0
        %v3259 = vmax.f32 %v3211, 0.0
        %v3260 = vmax.f32 %v3212, 0.0
        %v3261 = vmax.f32 %v3213, 0.0
        %v3262 = vmax.f32 %v3214, 0.0
        %v3263 = vmax.f32 %v3215, 0.0
        %v3264 = vmax.f32 %v3216, 0.0
        %v3265 = vmax.f32 %v3217, 0.0
        %v3266 = vmax.f32 %v3218, 0.0
        %v3267 = vmax.f32 %v3219, 0.0
        %v3268 = vmax.f32 %v3220, 0.0
        %v3269 = vmax.f32 %v3221, 0.0
        %v3270 = vmax.f32 %v3222, 0.0
        %v3271 = vmax.f32 %v3223, 0.0
        %v3272 = vmax.f32 %v3224, 0.0
        %vm3273 = vcmask 261120
        %3274 = vst.msk [vmem:[#allocation3] sm:$0xff] %vm3273, -inf
        %3275 = vst.msk [vmem:[#allocation3 + $0x8] sm:$0xff] %vm3273, -inf
        %3276 = vst.msk [vmem:[#allocation3 + $0x10] sm:$0xff] %vm3273, -inf
        %3277 = vst.msk [vmem:[#allocation3 + $0x18] sm:$0xff] %vm3273, -inf
        %3278 = vst.msk [vmem:[#allocation3 + $0x20] sm:$0xff] %vm3273, -inf
        %3279 = vst.msk [vmem:[#allocation3 + $0x28] sm:$0xff] %vm3273, -inf
        %3280 = vst.msk [vmem:[#allocation3 + $0x30] sm:$0xff] %vm3273, -inf
        %3281 = vst.msk [vmem:[#allocation3 + $0x38] sm:$0xff] %vm3273, -inf
        %3282 = vst.msk [vmem:[#allocation3 + $0x40] sm:$0xff] %vm3273, -inf
        %3283 = vst.msk [vmem:[#allocation3 + $0x48] sm:$0xff] %vm3273, -inf
        %3284 = vst.msk [vmem:[#allocation3 + $0x50] sm:$0xff] %vm3273, -inf
        %3285 = vst.msk [vmem:[#allocation3 + $0x58] sm:$0xff] %vm3273, -inf
        %3286 = vst.msk [vmem:[#allocation3 + $0x60] sm:$0xff] %vm3273, -inf
        %3287 = vst.msk [vmem:[#allocation3 + $0x68] sm:$0xff] %vm3273, -inf
        %3288 = vst.msk [vmem:[#allocation3 + $0x70] sm:$0xff] %vm3273, -inf
        %3289 = vst.msk [vmem:[#allocation3 + $0x78] sm:$0xff] %vm3273, -inf
        %3290 = vst.msk [vmem:[#allocation3 + $0x80] sm:$0xff] %vm3273, -inf
        %3291 = vst.msk [vmem:[#allocation3 + $0x88] sm:$0xff] %vm3273, -inf
        %3292 = vst.msk [vmem:[#allocation3 + $0x90] sm:$0xff] %vm3273, -inf
        %3293 = vst.msk [vmem:[#allocation3 + $0x98] sm:$0xff] %vm3273, -inf
        %3294 = vst.msk [vmem:[#allocation3 + $0xa0] sm:$0xff] %vm3273, -inf
        %3295 = vst.msk [vmem:[#allocation3 + $0xa8] sm:$0xff] %vm3273, -inf
        %3296 = vst.msk [vmem:[#allocation3 + $0xb0] sm:$0xff] %vm3273, -inf
        %3297 = vst.msk [vmem:[#allocation3 + $0xb8] sm:$0xff] %vm3273, -inf
        %3298 = vst.msk [vmem:[#allocation3 + $0xc0] sm:$0xff] %vm3273, -inf
        %3299 = vst.msk [vmem:[#allocation3 + $0xc8] sm:$0xff] %vm3273, -inf
        %3300 = vst.msk [vmem:[#allocation3 + $0xd0] sm:$0xff] %vm3273, -inf
        %3301 = vst.msk [vmem:[#allocation3 + $0xd8] sm:$0xff] %vm3273, -inf
        %3302 = vst.msk [vmem:[#allocation3 + $0xe0] sm:$0xff] %vm3273, -inf
        %3303 = vst.msk [vmem:[#allocation3 + $0xe8] sm:$0xff] %vm3273, -inf
        %3304 = vst.msk [vmem:[#allocation3 + $0xf0] sm:$0xff] %vm3273, -inf
        %3305 = vst.msk [vmem:[#allocation3 + $0xf8] sm:$0xff] %vm3273, -inf
        %3306 = vst.msk [vmem:[#allocation3 + $0x100] sm:$0xff] %vm3273, -inf
        %3307 = vst.msk [vmem:[#allocation3 + $0x108] sm:$0xff] %vm3273, -inf
        %3308 = vst.msk [vmem:[#allocation3 + $0x110] sm:$0xff] %vm3273, -inf
        %3309 = vst.msk [vmem:[#allocation3 + $0x118] sm:$0xff] %vm3273, -inf
        %3310 = vst.msk [vmem:[#allocation3 + $0x120] sm:$0xff] %vm3273, -inf
        %3311 = vst.msk [vmem:[#allocation3 + $0x128] sm:$0xff] %vm3273, -inf
        %3312 = vst.msk [vmem:[#allocation3 + $0x130] sm:$0xff] %vm3273, -inf
        %3313 = vst.msk [vmem:[#allocation3 + $0x138] sm:$0xff] %vm3273, -inf
        %3314 = vst.msk [vmem:[#allocation3 + $0x140] sm:$0xff] %vm3273, -inf
        %3315 = vst.msk [vmem:[#allocation3 + $0x148] sm:$0xff] %vm3273, -inf
        %3316 = vst.msk [vmem:[#allocation3 + $0x150] sm:$0xff] %vm3273, -inf
        %3317 = vst.msk [vmem:[#allocation3 + $0x158] sm:$0xff] %vm3273, -inf
        %3318 = vst.msk [vmem:[#allocation3 + $0x160] sm:$0xff] %vm3273, -inf
        %3319 = vst.msk [vmem:[#allocation3 + $0x168] sm:$0xff] %vm3273, -inf
        %3320 = vst.msk [vmem:[#allocation3 + $0x170] sm:$0xff] %vm3273, -inf
        %3321 = vst.msk [vmem:[#allocation3 + $0x178] sm:$0xff] %vm3273, -inf
        %3322 = vst.msk [vmem:[#allocation3 + $0x1] sm:$0xff] %vm3273, %v3225
        %3323 = vst.msk [vmem:[#allocation3 + $0x9] sm:$0xff] %vm3273, %v3226
        %3324 = vst.msk [vmem:[#allocation3 + $0x11] sm:$0xff] %vm3273, %v3227
        %3325 = vst.msk [vmem:[#allocation3 + $0x19] sm:$0xff] %vm3273, %v3228
        %3326 = vst.msk [vmem:[#allocation3 + $0x21] sm:$0xff] %vm3273, %v3229
        %3327 = vst.msk [vmem:[#allocation3 + $0x29] sm:$0xff] %vm3273, %v3230
        %3328 = vst.msk [vmem:[#allocation3 + $0x31] sm:$0xff] %vm3273, %v3231
        %3329 = vst.msk [vmem:[#allocation3 + $0x39] sm:$0xff] %vm3273, %v3232
        %3330 = vst.msk [vmem:[#allocation3 + $0x41] sm:$0xff] %vm3273, %v3233
        %3331 = vst.msk [vmem:[#allocation3 + $0x49] sm:$0xff] %vm3273, %v3234
        %3332 = vst.msk [vmem:[#allocation3 + $0x51] sm:$0xff] %vm3273, %v3235
        %3333 = vst.msk [vmem:[#allocation3 + $0x59] sm:$0xff] %vm3273, %v3236
        %3334 = vst.msk [vmem:[#allocation3 + $0x61] sm:$0xff] %vm3273, %v3237
        %3335 = vst.msk [vmem:[#allocation3 + $0x69] sm:$0xff] %vm3273, %v3238
        %3336 = vst.msk [vmem:[#allocation3 + $0x71] sm:$0xff] %vm3273, %v3239
        %3337 = vst.msk [vmem:[#allocation3 + $0x79] sm:$0xff] %vm3273, %v3240
        %3338 = vst.msk [vmem:[#allocation3 + $0x81] sm:$0xff] %vm3273, %v3241
        %3339 = vst.msk [vmem:[#allocation3 + $0x89] sm:$0xff] %vm3273, %v3242
        %3340 = vst.msk [vmem:[#allocation3 + $0x91] sm:$0xff] %vm3273, %v3243
        %3341 = vst.msk [vmem:[#allocation3 + $0x99] sm:$0xff] %vm3273, %v3244
        %3342 = vst.msk [vmem:[#allocation3 + $0xa1] sm:$0xff] %vm3273, %v3245
        %3343 = vst.msk [vmem:[#allocation3 + $0xa9] sm:$0xff] %vm3273, %v3246
        %3344 = vst.msk [vmem:[#allocation3 + $0xb1] sm:$0xff] %vm3273, %v3247
        %3345 = vst.msk [vmem:[#allocation3 + $0xb9] sm:$0xff] %vm3273, %v3248
        %3346 = vst.msk [vmem:[#allocation3 + $0xc1] sm:$0xff] %vm3273, %v3249
        %3347 = vst.msk [vmem:[#allocation3 + $0xc9] sm:$0xff] %vm3273, %v3250
        %3348 = vst.msk [vmem:[#allocation3 + $0xd1] sm:$0xff] %vm3273, %v3251
        %3349 = vst.msk [vmem:[#allocation3 + $0xd9] sm:$0xff] %vm3273, %v3252
        %3350 = vst.msk [vmem:[#allocation3 + $0xe1] sm:$0xff] %vm3273, %v3253
        %3351 = vst.msk [vmem:[#allocation3 + $0xe9] sm:$0xff] %vm3273, %v3254
        %3352 = vst.msk [vmem:[#allocation3 + $0xf1] sm:$0xff] %vm3273, %v3255
        %3353 = vst.msk [vmem:[#allocation3 + $0xf9] sm:$0xff] %vm3273, %v3256
        %3354 = vst.msk [vmem:[#allocation3 + $0x101] sm:$0xff] %vm3273, %v3257
        %3355 = vst.msk [vmem:[#allocation3 + $0x109] sm:$0xff] %vm3273, %v3258
        %3356 = vst.msk [vmem:[#allocation3 + $0x111] sm:$0xff] %vm3273, %v3259
        %3357 = vst.msk [vmem:[#allocation3 + $0x119] sm:$0xff] %vm3273, %v3260
        %3358 = vst.msk [vmem:[#allocation3 + $0x121] sm:$0xff] %vm3273, %v3261
        %3359 = vst.msk [vmem:[#allocation3 + $0x129] sm:$0xff] %vm3273, %v3262
        %3360 = vst.msk [vmem:[#allocation3 + $0x131] sm:$0xff] %vm3273, %v3263
        %3361 = vst.msk [vmem:[#allocation3 + $0x139] sm:$0xff] %vm3273, %v3264
        %3362 = vst.msk [vmem:[#allocation3 + $0x141] sm:$0xff] %vm3273, %v3265
        %3363 = vst.msk [vmem:[#allocation3 + $0x149] sm:$0xff] %vm3273, %v3266
        %3364 = vst.msk [vmem:[#allocation3 + $0x151] sm:$0xff] %vm3273, %v3267
        %3365 = vst.msk [vmem:[#allocation3 + $0x159] sm:$0xff] %vm3273, %v3268
        %3366 = vst.msk [vmem:[#allocation3 + $0x161] sm:$0xff] %vm3273, %v3269
        %3367 = vst.msk [vmem:[#allocation3 + $0x169] sm:$0xff] %vm3273, %v3270
        %3368 = vst.msk [vmem:[#allocation3 + $0x171] sm:$0xff] %vm3273, %v3271
        %vm3369 = vcmask 253952
        %3370 = vst.msk [vmem:[#allocation3 + $0x179] sm:$0x1] %vm3369, %v3272
        %v3371 = vld [vmem:[#allocation3] ss:$2 sm:$0xff]
        %s3372 = scalar_lea.vmem [#allocation3], 16
        %v3373 = vld [vmem:[%s3372] ss:$2 sm:$0xff]
        %s3374 = scalar_lea.vmem [#allocation3], 32
        %v3375 = vld [vmem:[%s3374] ss:$2 sm:$0xff]
        %s3376 = scalar_lea.vmem [#allocation3], 48
        %v3377 = vld [vmem:[%s3376] ss:$2 sm:$0xff]
        %s3378 = scalar_lea.vmem [#allocation3], 64
        %v3379 = vld [vmem:[%s3378] ss:$2 sm:$0xff]
        %s3380 = scalar_lea.vmem [#allocation3], 80
        %v3381 = vld [vmem:[%s3380] ss:$2 sm:$0xff]
        %s3382 = scalar_lea.vmem [#allocation3], 96
        %v3383 = vld [vmem:[%s3382] ss:$2 sm:$0xff]
        %s3384 = scalar_lea.vmem [#allocation3], 112
        %v3385 = vld [vmem:[%s3384] ss:$2 sm:$0xff]
        %s3386 = scalar_lea.vmem [#allocation3], 128
        %v3387 = vld [vmem:[%s3386] ss:$2 sm:$0xff]
        %s3388 = scalar_lea.vmem [#allocation3], 144
        %v3389 = vld [vmem:[%s3388] ss:$2 sm:$0xff]
        %s3390 = scalar_lea.vmem [#allocation3], 160
        %v3391 = vld [vmem:[%s3390] ss:$2 sm:$0xff]
        %s3392 = scalar_lea.vmem [#allocation3], 176
        %v3393 = vld [vmem:[%s3392] ss:$2 sm:$0xff]
        %s3394 = scalar_lea.vmem [#allocation3], 192
        %v3395 = vld [vmem:[%s3394] ss:$2 sm:$0xff]
        %s3396 = scalar_lea.vmem [#allocation3], 208
        %v3397 = vld [vmem:[%s3396] ss:$2 sm:$0xff]
        %s3398 = scalar_lea.vmem [#allocation3], 224
        %v3399 = vld [vmem:[%s3398] ss:$2 sm:$0xff]
        %s3400 = scalar_lea.vmem [#allocation3], 240
        %v3401 = vld [vmem:[%s3400] ss:$2 sm:$0xff]
        %s3402 = scalar_lea.vmem [#allocation3], 256
        %v3403 = vld [vmem:[%s3402] ss:$2 sm:$0xff]
        %s3404 = scalar_lea.vmem [#allocation3], 272
        %v3405 = vld [vmem:[%s3404] ss:$2 sm:$0xff]
        %s3406 = scalar_lea.vmem [#allocation3], 288
        %v3407 = vld [vmem:[%s3406] ss:$2 sm:$0xff]
        %s3408 = scalar_lea.vmem [#allocation3], 304
        %v3409 = vld [vmem:[%s3408] ss:$2 sm:$0xff]
        %s3410 = scalar_lea.vmem [#allocation3], 320
        %v3411 = vld [vmem:[%s3410] ss:$2 sm:$0xff]
        %s3412 = scalar_lea.vmem [#allocation3], 336
        %v3413 = vld [vmem:[%s3412] ss:$2 sm:$0xff]
        %s3414 = scalar_lea.vmem [#allocation3], 352
        %v3415 = vld [vmem:[%s3414] ss:$2 sm:$0xff]
        %s3416 = scalar_lea.vmem [#allocation3], 368
        %v3417 = vld [vmem:[%s3416] ss:$2 sm:$0x1f]
        %s3418 = scalar_lea.vmem [#allocation3], 1
        %v3419 = vld [vmem:[%s3418] ss:$2 sm:$0xff]
        %s3420 = scalar_lea.vmem [#allocation3], 17
        %v3421 = vld [vmem:[%s3420] ss:$2 sm:$0xff]
        %s3422 = scalar_lea.vmem [#allocation3], 33
        %v3423 = vld [vmem:[%s3422] ss:$2 sm:$0xff]
        %s3424 = scalar_lea.vmem [#allocation3], 49
        %v3425 = vld [vmem:[%s3424] ss:$2 sm:$0xff]
        %s3426 = scalar_lea.vmem [#allocation3], 65
        %v3427 = vld [vmem:[%s3426] ss:$2 sm:$0xff]
        %s3428 = scalar_lea.vmem [#allocation3], 81
        %v3429 = vld [vmem:[%s3428] ss:$2 sm:$0xff]
        %s3430 = scalar_lea.vmem [#allocation3], 97
        %v3431 = vld [vmem:[%s3430] ss:$2 sm:$0xff]
        %s3432 = scalar_lea.vmem [#allocation3], 113
        %v3433 = vld [vmem:[%s3432] ss:$2 sm:$0xff]
        %s3434 = scalar_lea.vmem [#allocation3], 129
        %v3435 = vld [vmem:[%s3434] ss:$2 sm:$0xff]
        %s3436 = scalar_lea.vmem [#allocation3], 145
        %v3437 = vld [vmem:[%s3436] ss:$2 sm:$0xff]
        %s3438 = scalar_lea.vmem [#allocation3], 161
        %v3439 = vld [vmem:[%s3438] ss:$2 sm:$0xff]
        %s3440 = scalar_lea.vmem [#allocation3], 177
        %v3441 = vld [vmem:[%s3440] ss:$2 sm:$0xff]
        %s3442 = scalar_lea.vmem [#allocation3], 193
        %v3443 = vld [vmem:[%s3442] ss:$2 sm:$0xff]
        %s3444 = scalar_lea.vmem [#allocation3], 209
        %v3445 = vld [vmem:[%s3444] ss:$2 sm:$0xff]
        %s3446 = scalar_lea.vmem [#allocation3], 225
        %v3447 = vld [vmem:[%s3446] ss:$2 sm:$0xff]
        %s3448 = scalar_lea.vmem [#allocation3], 241
        %v3449 = vld [vmem:[%s3448] ss:$2 sm:$0xff]
        %s3450 = scalar_lea.vmem [#allocation3], 257
        %v3451 = vld [vmem:[%s3450] ss:$2 sm:$0xff]
        %s3452 = scalar_lea.vmem [#allocation3], 273
        %v3453 = vld [vmem:[%s3452] ss:$2 sm:$0xff]
        %s3454 = scalar_lea.vmem [#allocation3], 289
        %v3455 = vld [vmem:[%s3454] ss:$2 sm:$0xff]
        %s3456 = scalar_lea.vmem [#allocation3], 305
        %v3457 = vld [vmem:[%s3456] ss:$2 sm:$0xff]
        %s3458 = scalar_lea.vmem [#allocation3], 321
        %v3459 = vld [vmem:[%s3458] ss:$2 sm:$0xff]
        %s3460 = scalar_lea.vmem [#allocation3], 337
        %v3461 = vld [vmem:[%s3460] ss:$2 sm:$0xff]
        %s3462 = scalar_lea.vmem [#allocation3], 353
        %v3463 = vld [vmem:[%s3462] ss:$2 sm:$0xff]
        %s3464 = scalar_lea.vmem [#allocation3], 369
        %v3465 = vld [vmem:[%s3464] ss:$2 sm:$0x1f]
        %v3466 = vmax.f32 %v3371, %v3419
        %v3467 = vmax.f32 %v3373, %v3421
        %v3468 = vmax.f32 %v3375, %v3423
        %v3469 = vmax.f32 %v3377, %v3425
        %v3470 = vmax.f32 %v3379, %v3427
        %v3471 = vmax.f32 %v3381, %v3429
        %v3472 = vmax.f32 %v3383, %v3431
        %v3473 = vmax.f32 %v3385, %v3433
        %v3474 = vmax.f32 %v3387, %v3435
        %v3475 = vmax.f32 %v3389, %v3437
        %v3476 = vmax.f32 %v3391, %v3439
        %v3477 = vmax.f32 %v3393, %v3441
        %v3478 = vmax.f32 %v3395, %v3443
        %v3479 = vmax.f32 %v3397, %v3445
        %v3480 = vmax.f32 %v3399, %v3447
        %v3481 = vmax.f32 %v3401, %v3449
        %v3482 = vmax.f32 %v3403, %v3451
        %v3483 = vmax.f32 %v3405, %v3453
        %v3484 = vmax.f32 %v3407, %v3455
        %v3485 = vmax.f32 %v3409, %v3457
        %v3486 = vmax.f32 %v3411, %v3459
        %v3487 = vmax.f32 %v3413, %v3461
        %v3488 = vmax.f32 %v3415, %v3463
        %v3489 = vmax.f32 %v3417, %v3465
        %3490 = vst.msk [vmem:[#allocation4] sm:$0xff] %vm3273, 0.0
        %3491 = vst.msk [vmem:[#allocation4 + $0x8] sm:$0xff] %vm3273, 0.0
        %3492 = vst.msk [vmem:[#allocation4 + $0x10] sm:$0xff] %vm3273, 0.0
        %3493 = vst.msk [vmem:[#allocation4 + $0x18] sm:$0xff] %vm3273, 0.0
        %3494 = vst.msk [vmem:[#allocation4 + $0x20] sm:$0xff] %vm3273, 0.0
        %3495 = vst.msk [vmem:[#allocation4 + $0x28] sm:$0xff] %vm3273, 0.0
        %3496 = vst.msk [vmem:[#allocation4 + $0x30] sm:$0xff] %vm3273, 0.0
        %3497 = vst.msk [vmem:[#allocation4 + $0x38] sm:$0xff] %vm3273, 0.0
        %3498 = vst.msk [vmem:[#allocation4 + $0x40] sm:$0xff] %vm3273, 0.0
        %3499 = vst.msk [vmem:[#allocation4 + $0x48] sm:$0xff] %vm3273, 0.0
        %3500 = vst.msk [vmem:[#allocation4 + $0x50] sm:$0xff] %vm3273, 0.0
        %3501 = vst.msk [vmem:[#allocation4 + $0x58] sm:$0xff] %vm3273, 0.0
        %3502 = vst.msk [vmem:[#allocation4 + $0x60] sm:$0xff] %vm3273, 0.0
        %3503 = vst.msk [vmem:[#allocation4 + $0x68] sm:$0xff] %vm3273, 0.0
        %3504 = vst.msk [vmem:[#allocation4 + $0x70] sm:$0xff] %vm3273, 0.0
        %3505 = vst.msk [vmem:[#allocation4 + $0x78] sm:$0xff] %vm3273, 0.0
        %3506 = vst.msk [vmem:[#allocation4 + $0x80] sm:$0xff] %vm3273, 0.0
        %3507 = vst.msk [vmem:[#allocation4 + $0x88] sm:$0xff] %vm3273, 0.0
        %3508 = vst.msk [vmem:[#allocation4 + $0x90] sm:$0xff] %vm3273, 0.0
        %3509 = vst.msk [vmem:[#allocation4 + $0x98] sm:$0xff] %vm3273, 0.0
        %3510 = vst.msk [vmem:[#allocation4 + $0xa0] sm:$0xff] %vm3273, 0.0
        %3511 = vst.msk [vmem:[#allocation4 + $0xa8] sm:$0xff] %vm3273, 0.0
        %3512 = vst.msk [vmem:[#allocation4 + $0xb0] sm:$0xff] %vm3273, 0.0
        %3513 = vst.msk [vmem:[#allocation4 + $0xb8] sm:$0xff] %vm3273, 0.0
        %3514 = vst.msk [vmem:[#allocation4 + $0xc0] sm:$0xff] %vm3273, 0.0
        %3515 = vst.msk [vmem:[#allocation4 + $0x4] sm:$0xff] %vm3273, %v3466
        %3516 = vst.msk [vmem:[#allocation4 + $0xc] sm:$0xff] %vm3273, %v3467
        %3517 = vst.msk [vmem:[#allocation4 + $0x14] sm:$0xff] %vm3273, %v3468
        %3518 = vst.msk [vmem:[#allocation4 + $0x1c] sm:$0xff] %vm3273, %v3469
        %3519 = vst.msk [vmem:[#allocation4 + $0x24] sm:$0xff] %vm3273, %v3470
        %3520 = vst.msk [vmem:[#allocation4 + $0x2c] sm:$0xff] %vm3273, %v3471
        %3521 = vst.msk [vmem:[#allocation4 + $0x34] sm:$0xff] %vm3273, %v3472
        %3522 = vst.msk [vmem:[#allocation4 + $0x3c] sm:$0xff] %vm3273, %v3473
        %3523 = vst.msk [vmem:[#allocation4 + $0x44] sm:$0xff] %vm3273, %v3474
        %3524 = vst.msk [vmem:[#allocation4 + $0x4c] sm:$0xff] %vm3273, %v3475
        %3525 = vst.msk [vmem:[#allocation4 + $0x54] sm:$0xff] %vm3273, %v3476
        %3526 = vst.msk [vmem:[#allocation4 + $0x5c] sm:$0xff] %vm3273, %v3477
        %3527 = vst.msk [vmem:[#allocation4 + $0x64] sm:$0xff] %vm3273, %v3478
        %3528 = vst.msk [vmem:[#allocation4 + $0x6c] sm:$0xff] %vm3273, %v3479
        %3529 = vst.msk [vmem:[#allocation4 + $0x74] sm:$0xff] %vm3273, %v3480
        %3530 = vst.msk [vmem:[#allocation4 + $0x7c] sm:$0xff] %vm3273, %v3481
        %3531 = vst.msk [vmem:[#allocation4 + $0x84] sm:$0xff] %vm3273, %v3482
        %3532 = vst.msk [vmem:[#allocation4 + $0x8c] sm:$0xff] %vm3273, %v3483
        %3533 = vst.msk [vmem:[#allocation4 + $0x94] sm:$0xff] %vm3273, %v3484
        %3534 = vst.msk [vmem:[#allocation4 + $0x9c] sm:$0xff] %vm3273, %v3485
        %3535 = vst.msk [vmem:[#allocation4 + $0xa4] sm:$0xff] %vm3273, %v3486
        %3536 = vst.msk [vmem:[#allocation4 + $0xac] sm:$0xff] %vm3273, %v3487
        %3537 = vst.msk [vmem:[#allocation4 + $0xb4] sm:$0xff] %vm3273, %v3488
        %vm3538 = vcmask 258048
        %3539 = vst.msk [vmem:[#allocation4 + $0xbc] sm:$0x1f] %vm3538, %v3489
        %v3540 = vld [vmem:[#allocation4] sm:$0xff]
        %v3541 = vld [vmem:[#allocation4 + $0x8] sm:$0xff]
        %v3542 = vld [vmem:[#allocation4 + $0x10] sm:$0xff]
        %v3543 = vld [vmem:[#allocation4 + $0x18] sm:$0xff]
        %v3544 = vld [vmem:[#allocation4 + $0x20] sm:$0xff]
        %v3545 = vld [vmem:[#allocation4 + $0x28] sm:$0xff]
        %v3546 = vld [vmem:[#allocation4 + $0x30] sm:$0xff]
        %v3547 = vld [vmem:[#allocation4 + $0x38] sm:$0xff]
        %v3548 = vld [vmem:[#allocation4 + $0x40] sm:$0xff]
        %v3549 = vld [vmem:[#allocation4 + $0x48] sm:$0xff]
        %v3550 = vld [vmem:[#allocation4 + $0x50] sm:$0xff]
        %v3551 = vld [vmem:[#allocation4 + $0x58] sm:$0xff]
        %v3552 = vld [vmem:[#allocation4 + $0x60] sm:$0xff]
        %v3553 = vld [vmem:[#allocation4 + $0x68] sm:$0xff]
        %v3554 = vld [vmem:[#allocation4 + $0x70] sm:$0xff]
        %v3555 = vld [vmem:[#allocation4 + $0x78] sm:$0xff]
        %v3556 = vld [vmem:[#allocation4 + $0x80] sm:$0xff]
        %v3557 = vld [vmem:[#allocation4 + $0x88] sm:$0xff]
        %v3558 = vld [vmem:[#allocation4 + $0x90] sm:$0xff]
        %v3559 = vld [vmem:[#allocation4 + $0x98] sm:$0xff]
        %v3560 = vld [vmem:[#allocation4 + $0xa0] sm:$0xff]
        %v3561 = vld [vmem:[#allocation4 + $0xa8] sm:$0xff]
        %v3562 = vld [vmem:[#allocation4 + $0xb0] sm:$0xff]
        %v3563 = vld [vmem:[#allocation4 + $0xb8] sm:$0x3f]
        %v3564 = vld [vmem:[#allocation4 + $0x1] sm:$0xff]
        %v3565 = vld [vmem:[#allocation4 + $0x9] sm:$0xff]
        %v3566 = vld [vmem:[#allocation4 + $0x11] sm:$0xff]
        %v3567 = vld [vmem:[#allocation4 + $0x19] sm:$0xff]
        %v3568 = vld [vmem:[#allocation4 + $0x21] sm:$0xff]
        %v3569 = vld [vmem:[#allocation4 + $0x29] sm:$0xff]
        %v3570 = vld [vmem:[#allocation4 + $0x31] sm:$0xff]
        %v3571 = vld [vmem:[#allocation4 + $0x39] sm:$0xff]
        %v3572 = vld [vmem:[#allocation4 + $0x41] sm:$0xff]
        %v3573 = vld [vmem:[#allocation4 + $0x49] sm:$0xff]
        %v3574 = vld [vmem:[#allocation4 + $0x51] sm:$0xff]
        %v3575 = vld [vmem:[#allocation4 + $0x59] sm:$0xff]
        %v3576 = vld [vmem:[#allocation4 + $0x61] sm:$0xff]
        %v3577 = vld [vmem:[#allocation4 + $0x69] sm:$0xff]
        %v3578 = vld [vmem:[#allocation4 + $0x71] sm:$0xff]
        %v3579 = vld [vmem:[#allocation4 + $0x79] sm:$0xff]
        %v3580 = vld [vmem:[#allocation4 + $0x81] sm:$0xff]
        %v3581 = vld [vmem:[#allocation4 + $0x89] sm:$0xff]
        %v3582 = vld [vmem:[#allocation4 + $0x91] sm:$0xff]
        %v3583 = vld [vmem:[#allocation4 + $0x99] sm:$0xff]
        %v3584 = vld [vmem:[#allocation4 + $0xa1] sm:$0xff]
        %v3585 = vld [vmem:[#allocation4 + $0xa9] sm:$0xff]
        %v3586 = vld [vmem:[#allocation4 + $0xb1] sm:$0xff]
        %v3587 = vld [vmem:[#allocation4 + $0xb9] sm:$0x3f]
        %v3588 = vld [vmem:[#allocation4 + $0x2] sm:$0xff]
        %v3589 = vld [vmem:[#allocation4 + $0xa] sm:$0xff]
        %v3590 = vld [vmem:[#allocation4 + $0x12] sm:$0xff]
        %v3591 = vld [vmem:[#allocation4 + $0x1a] sm:$0xff]
        %v3592 = vld [vmem:[#allocation4 + $0x22] sm:$0xff]
        %v3593 = vld [vmem:[#allocation4 + $0x2a] sm:$0xff]
        %v3594 = vld [vmem:[#allocation4 + $0x32] sm:$0xff]
        %v3595 = vld [vmem:[#allocation4 + $0x3a] sm:$0xff]
        %v3596 = vld [vmem:[#allocation4 + $0x42] sm:$0xff]
        %v3597 = vld [vmem:[#allocation4 + $0x4a] sm:$0xff]
        %v3598 = vld [vmem:[#allocation4 + $0x52] sm:$0xff]
        %v3599 = vld [vmem:[#allocation4 + $0x5a] sm:$0xff]
        %v3600 = vld [vmem:[#allocation4 + $0x62] sm:$0xff]
        %v3601 = vld [vmem:[#allocation4 + $0x6a] sm:$0xff]
        %v3602 = vld [vmem:[#allocation4 + $0x72] sm:$0xff]
        %v3603 = vld [vmem:[#allocation4 + $0x7a] sm:$0xff]
        %v3604 = vld [vmem:[#allocation4 + $0x82] sm:$0xff]
        %v3605 = vld [vmem:[#allocation4 + $0x8a] sm:$0xff]
        %v3606 = vld [vmem:[#allocation4 + $0x92] sm:$0xff]
        %v3607 = vld [vmem:[#allocation4 + $0x9a] sm:$0xff]
        %v3608 = vld [vmem:[#allocation4 + $0xa2] sm:$0xff]
        %v3609 = vld [vmem:[#allocation4 + $0xaa] sm:$0xff]
        %v3610 = vld [vmem:[#allocation4 + $0xb2] sm:$0xff]
        %v3611 = vld [vmem:[#allocation4 + $0xba] sm:$0x3f]
        %v3612 = vld [vmem:[#allocation4 + $0x3] sm:$0xff]
        %v3613 = vld [vmem:[#allocation4 + $0xb] sm:$0xff]
        %v3614 = vld [vmem:[#allocation4 + $0x13] sm:$0xff]
        %v3615 = vld [vmem:[#allocation4 + $0x1b] sm:$0xff]
        %v3616 = vld [vmem:[#allocation4 + $0x23] sm:$0xff]
        %v3617 = vld [vmem:[#allocation4 + $0x2b] sm:$0xff]
        %v3618 = vld [vmem:[#allocation4 + $0x33] sm:$0xff]
        %v3619 = vld [vmem:[#allocation4 + $0x3b] sm:$0xff]
        %v3620 = vld [vmem:[#allocation4 + $0x43] sm:$0xff]
        %v3621 = vld [vmem:[#allocation4 + $0x4b] sm:$0xff]
        %v3622 = vld [vmem:[#allocation4 + $0x53] sm:$0xff]
        %v3623 = vld [vmem:[#allocation4 + $0x5b] sm:$0xff]
        %v3624 = vld [vmem:[#allocation4 + $0x63] sm:$0xff]
        %v3625 = vld [vmem:[#allocation4 + $0x6b] sm:$0xff]
        %v3626 = vld [vmem:[#allocation4 + $0x73] sm:$0xff]
        %v3627 = vld [vmem:[#allocation4 + $0x7b] sm:$0xff]
        %v3628 = vld [vmem:[#allocation4 + $0x83] sm:$0xff]
        %v3629 = vld [vmem:[#allocation4 + $0x8b] sm:$0xff]
        %v3630 = vld [vmem:[#allocation4 + $0x93] sm:$0xff]
        %v3631 = vld [vmem:[#allocation4 + $0x9b] sm:$0xff]
        %v3632 = vld [vmem:[#allocation4 + $0xa3] sm:$0xff]
        %v3633 = vld [vmem:[#allocation4 + $0xab] sm:$0xff]
        %v3634 = vld [vmem:[#allocation4 + $0xb3] sm:$0xff]
        %v3635 = vld [vmem:[#allocation4 + $0xbb] sm:$0x3f]
        %v3636 = vld [vmem:[#allocation4 + $0x4] sm:$0xff]
        %v3637 = vld [vmem:[#allocation4 + $0xc] sm:$0xff]
        %v3638 = vld [vmem:[#allocation4 + $0x14] sm:$0xff]
        %v3639 = vld [vmem:[#allocation4 + $0x1c] sm:$0xff]
        %v3640 = vld [vmem:[#allocation4 + $0x24] sm:$0xff]
        %v3641 = vld [vmem:[#allocation4 + $0x2c] sm:$0xff]
        %v3642 = vld [vmem:[#allocation4 + $0x34] sm:$0xff]
        %v3643 = vld [vmem:[#allocation4 + $0x3c] sm:$0xff]
        %v3644 = vld [vmem:[#allocation4 + $0x44] sm:$0xff]
        %v3645 = vld [vmem:[#allocation4 + $0x4c] sm:$0xff]
        %v3646 = vld [vmem:[#allocation4 + $0x54] sm:$0xff]
        %v3647 = vld [vmem:[#allocation4 + $0x5c] sm:$0xff]
        %v3648 = vld [vmem:[#allocation4 + $0x64] sm:$0xff]
        %v3649 = vld [vmem:[#allocation4 + $0x6c] sm:$0xff]
        %v3650 = vld [vmem:[#allocation4 + $0x74] sm:$0xff]
        %v3651 = vld [vmem:[#allocation4 + $0x7c] sm:$0xff]
        %v3652 = vld [vmem:[#allocation4 + $0x84] sm:$0xff]
        %v3653 = vld [vmem:[#allocation4 + $0x8c] sm:$0xff]
        %v3654 = vld [vmem:[#allocation4 + $0x94] sm:$0xff]
        %v3655 = vld [vmem:[#allocation4 + $0x9c] sm:$0xff]
        %v3656 = vld [vmem:[#allocation4 + $0xa4] sm:$0xff]
        %v3657 = vld [vmem:[#allocation4 + $0xac] sm:$0xff]
        %v3658 = vld [vmem:[#allocation4 + $0xb4] sm:$0xff]
        %v3659 = vld [vmem:[#allocation4 + $0xbc] sm:$0x3f]
        %v3660 = vld [vmem:[#allocation4 + $0x5] sm:$0xff]
        %v3661 = vld [vmem:[#allocation4 + $0xd] sm:$0xff]
        %v3662 = vld [vmem:[#allocation4 + $0x15] sm:$0xff]
        %v3663 = vld [vmem:[#allocation4 + $0x1d] sm:$0xff]
        %v3664 = vld [vmem:[#allocation4 + $0x25] sm:$0xff]
        %v3665 = vld [vmem:[#allocation4 + $0x2d] sm:$0xff]
        %v3666 = vld [vmem:[#allocation4 + $0x35] sm:$0xff]
        %v3667 = vld [vmem:[#allocation4 + $0x3d] sm:$0xff]
        %v3668 = vld [vmem:[#allocation4 + $0x45] sm:$0xff]
        %v3669 = vld [vmem:[#allocation4 + $0x4d] sm:$0xff]
        %v3670 = vld [vmem:[#allocation4 + $0x55] sm:$0xff]
        %v3671 = vld [vmem:[#allocation4 + $0x5d] sm:$0xff]
        %v3672 = vld [vmem:[#allocation4 + $0x65] sm:$0xff]
        %v3673 = vld [vmem:[#allocation4 + $0x6d] sm:$0xff]
        %v3674 = vld [vmem:[#allocation4 + $0x75] sm:$0xff]
        %v3675 = vld [vmem:[#allocation4 + $0x7d] sm:$0xff]
        %v3676 = vld [vmem:[#allocation4 + $0x85] sm:$0xff]
        %v3677 = vld [vmem:[#allocation4 + $0x8d] sm:$0xff]
        %v3678 = vld [vmem:[#allocation4 + $0x95] sm:$0xff]
        %v3679 = vld [vmem:[#allocation4 + $0x9d] sm:$0xff]
        %v3680 = vld [vmem:[#allocation4 + $0xa5] sm:$0xff]
        %v3681 = vld [vmem:[#allocation4 + $0xad] sm:$0xff]
        %v3682 = vld [vmem:[#allocation4 + $0xb5] sm:$0xff]
        %v3683 = vld [vmem:[#allocation4 + $0xbd] sm:$0x3f]
        %v3684 = vld [vmem:[#allocation4 + $0x6] sm:$0xff]
        %v3685 = vld [vmem:[#allocation4 + $0xe] sm:$0xff]
        %v3686 = vld [vmem:[#allocation4 + $0x16] sm:$0xff]
        %v3687 = vld [vmem:[#allocation4 + $0x1e] sm:$0xff]
        %v3688 = vld [vmem:[#allocation4 + $0x26] sm:$0xff]
        %v3689 = vld [vmem:[#allocation4 + $0x2e] sm:$0xff]
        %v3690 = vld [vmem:[#allocation4 + $0x36] sm:$0xff]
        %v3691 = vld [vmem:[#allocation4 + $0x3e] sm:$0xff]
        %v3692 = vld [vmem:[#allocation4 + $0x46] sm:$0xff]
        %v3693 = vld [vmem:[#allocation4 + $0x4e] sm:$0xff]
        %v3694 = vld [vmem:[#allocation4 + $0x56] sm:$0xff]
        %v3695 = vld [vmem:[#allocation4 + $0x5e] sm:$0xff]
        %v3696 = vld [vmem:[#allocation4 + $0x66] sm:$0xff]
        %v3697 = vld [vmem:[#allocation4 + $0x6e] sm:$0xff]
        %v3698 = vld [vmem:[#allocation4 + $0x76] sm:$0xff]
        %v3699 = vld [vmem:[#allocation4 + $0x7e] sm:$0xff]
        %v3700 = vld [vmem:[#allocation4 + $0x86] sm:$0xff]
        %v3701 = vld [vmem:[#allocation4 + $0x8e] sm:$0xff]
        %v3702 = vld [vmem:[#allocation4 + $0x96] sm:$0xff]
        %v3703 = vld [vmem:[#allocation4 + $0x9e] sm:$0xff]
        %v3704 = vld [vmem:[#allocation4 + $0xa6] sm:$0xff]
        %v3705 = vld [vmem:[#allocation4 + $0xae] sm:$0xff]
        %v3706 = vld [vmem:[#allocation4 + $0xb6] sm:$0xff]
        %v3707 = vld [vmem:[#allocation4 + $0xbe] sm:$0x3f]
        %v3708 = vld [vmem:[#allocation4 + $0x7] sm:$0xff]
        %v3709 = vld [vmem:[#allocation4 + $0xf] sm:$0xff]
        %v3710 = vld [vmem:[#allocation4 + $0x17] sm:$0xff]
        %v3711 = vld [vmem:[#allocation4 + $0x1f] sm:$0xff]
        %v3712 = vld [vmem:[#allocation4 + $0x27] sm:$0xff]
        %v3713 = vld [vmem:[#allocation4 + $0x2f] sm:$0xff]
        %v3714 = vld [vmem:[#allocation4 + $0x37] sm:$0xff]
        %v3715 = vld [vmem:[#allocation4 + $0x3f] sm:$0xff]
        %v3716 = vld [vmem:[#allocation4 + $0x47] sm:$0xff]
        %v3717 = vld [vmem:[#allocation4 + $0x4f] sm:$0xff]
        %v3718 = vld [vmem:[#allocation4 + $0x57] sm:$0xff]
        %v3719 = vld [vmem:[#allocation4 + $0x5f] sm:$0xff]
        %v3720 = vld [vmem:[#allocation4 + $0x67] sm:$0xff]
        %v3721 = vld [vmem:[#allocation4 + $0x6f] sm:$0xff]
        %v3722 = vld [vmem:[#allocation4 + $0x77] sm:$0xff]
        %v3723 = vld [vmem:[#allocation4 + $0x7f] sm:$0xff]
        %v3724 = vld [vmem:[#allocation4 + $0x87] sm:$0xff]
        %v3725 = vld [vmem:[#allocation4 + $0x8f] sm:$0xff]
        %v3726 = vld [vmem:[#allocation4 + $0x97] sm:$0xff]
        %v3727 = vld [vmem:[#allocation4 + $0x9f] sm:$0xff]
        %v3728 = vld [vmem:[#allocation4 + $0xa7] sm:$0xff]
        %v3729 = vld [vmem:[#allocation4 + $0xaf] sm:$0xff]
        %v3730 = vld [vmem:[#allocation4 + $0xb7] sm:$0xff]
        %v3731 = vld [vmem:[#allocation4 + $0xbf] sm:$0x3f]
        %3756 = vrot.lane.b32.xlu0 %v3564, 32
        %v3757 = vpop.permute.xlu0 %3756
        %3758 = vrot.lane.b32.xlu0 %v3565, 32
        %v3759 = vpop.permute.xlu0 %3758
        %3760 = vrot.lane.b32.xlu0 %v3566, 32
        %v3761 = vpop.permute.xlu0 %3760
        %3762 = vrot.lane.b32.xlu0 %v3567, 32
        %v3763 = vpop.permute.xlu0 %3762
        %3764 = vrot.lane.b32.xlu0 %v3568, 32
        %v3765 = vpop.permute.xlu0 %3764
        %3766 = vrot.lane.b32.xlu0 %v3569, 32
        %v3767 = vpop.permute.xlu0 %3766
        %3768 = vrot.lane.b32.xlu0 %v3570, 32
        %v3769 = vpop.permute.xlu0 %3768
        %3770 = vrot.lane.b32.xlu0 %v3571, 32
        %v3771 = vpop.permute.xlu0 %3770
        %3772 = vrot.lane.b32.xlu0 %v3572, 32
        %v3773 = vpop.permute.xlu0 %3772
        %3774 = vrot.lane.b32.xlu0 %v3573, 32
        %v3775 = vpop.permute.xlu0 %3774
        %3776 = vrot.lane.b32.xlu0 %v3574, 32
        %v3777 = vpop.permute.xlu0 %3776
        %3778 = vrot.lane.b32.xlu0 %v3575, 32
        %v3779 = vpop.permute.xlu0 %3778
        %3780 = vrot.lane.b32.xlu0 %v3576, 32
        %v3781 = vpop.permute.xlu0 %3780
        %3782 = vrot.lane.b32.xlu0 %v3577, 32
        %v3783 = vpop.permute.xlu0 %3782
        %3784 = vrot.lane.b32.xlu0 %v3578, 32
        %v3785 = vpop.permute.xlu0 %3784
        %3786 = vrot.lane.b32.xlu0 %v3579, 32
        %v3787 = vpop.permute.xlu0 %3786
        %3788 = vrot.lane.b32.xlu0 %v3580, 32
        %v3789 = vpop.permute.xlu0 %3788
        %3790 = vrot.lane.b32.xlu0 %v3581, 32
        %v3791 = vpop.permute.xlu0 %3790
        %3792 = vrot.lane.b32.xlu0 %v3582, 32
        %v3793 = vpop.permute.xlu0 %3792
        %3794 = vrot.lane.b32.xlu0 %v3583, 32
        %v3795 = vpop.permute.xlu0 %3794
        %3796 = vrot.lane.b32.xlu0 %v3584, 32
        %v3797 = vpop.permute.xlu0 %3796
        %3798 = vrot.lane.b32.xlu0 %v3585, 32
        %v3799 = vpop.permute.xlu0 %3798
        %3800 = vrot.lane.b32.xlu0 %v3586, 32
        %v3801 = vpop.permute.xlu0 %3800
        %3802 = vrot.lane.b32.xlu0 %v3587, 32
        %v3803 = vpop.permute.xlu0 %3802
        %3852 = vrot.lane.b32.xlu0 %v3588, 64
        %v3853 = vpop.permute.xlu0 %3852
        %3854 = vrot.lane.b32.xlu0 %v3589, 64
        %v3855 = vpop.permute.xlu0 %3854
        %3856 = vrot.lane.b32.xlu0 %v3590, 64
        %v3857 = vpop.permute.xlu0 %3856
        %3858 = vrot.lane.b32.xlu0 %v3591, 64
        %v3859 = vpop.permute.xlu0 %3858
        %3860 = vrot.lane.b32.xlu0 %v3592, 64
        %v3861 = vpop.permute.xlu0 %3860
        %3862 = vrot.lane.b32.xlu0 %v3593, 64
        %v3863 = vpop.permute.xlu0 %3862
        %3864 = vrot.lane.b32.xlu0 %v3594, 64
        %v3865 = vpop.permute.xlu0 %3864
        %3866 = vrot.lane.b32.xlu0 %v3595, 64
        %v3867 = vpop.permute.xlu0 %3866
        %3868 = vrot.lane.b32.xlu0 %v3596, 64
        %v3869 = vpop.permute.xlu0 %3868
        %3870 = vrot.lane.b32.xlu0 %v3597, 64
        %v3871 = vpop.permute.xlu0 %3870
        %3872 = vrot.lane.b32.xlu0 %v3598, 64
        %v3873 = vpop.permute.xlu0 %3872
        %3874 = vrot.lane.b32.xlu0 %v3599, 64
        %v3875 = vpop.permute.xlu0 %3874
        %3876 = vrot.lane.b32.xlu0 %v3600, 64
        %v3877 = vpop.permute.xlu0 %3876
        %3878 = vrot.lane.b32.xlu0 %v3601, 64
        %v3879 = vpop.permute.xlu0 %3878
        %3880 = vrot.lane.b32.xlu0 %v3602, 64
        %v3881 = vpop.permute.xlu0 %3880
        %3882 = vrot.lane.b32.xlu0 %v3603, 64
        %v3883 = vpop.permute.xlu0 %3882
        %3884 = vrot.lane.b32.xlu0 %v3604, 64
        %v3885 = vpop.permute.xlu0 %3884
        %3886 = vrot.lane.b32.xlu0 %v3605, 64
        %v3887 = vpop.permute.xlu0 %3886
        %3888 = vrot.lane.b32.xlu0 %v3606, 64
        %v3889 = vpop.permute.xlu0 %3888
        %3890 = vrot.lane.b32.xlu0 %v3607, 64
        %v3891 = vpop.permute.xlu0 %3890
        %3892 = vrot.lane.b32.xlu0 %v3608, 64
        %v3893 = vpop.permute.xlu0 %3892
        %3894 = vrot.lane.b32.xlu0 %v3609, 64
        %v3895 = vpop.permute.xlu0 %3894
        %3896 = vrot.lane.b32.xlu0 %v3610, 64
        %v3897 = vpop.permute.xlu0 %3896
        %3898 = vrot.lane.b32.xlu0 %v3611, 64
        %v3899 = vpop.permute.xlu0 %3898
        %3948 = vrot.lane.b32.xlu0 %v3612, 96
        %v3949 = vpop.permute.xlu0 %3948
        %3950 = vrot.lane.b32.xlu0 %v3613, 96
        %v3951 = vpop.permute.xlu0 %3950
        %3952 = vrot.lane.b32.xlu0 %v3614, 96
        %v3953 = vpop.permute.xlu0 %3952
        %3954 = vrot.lane.b32.xlu0 %v3615, 96
        %v3955 = vpop.permute.xlu0 %3954
        %3956 = vrot.lane.b32.xlu0 %v3616, 96
        %v3957 = vpop.permute.xlu0 %3956
        %3958 = vrot.lane.b32.xlu0 %v3617, 96
        %v3959 = vpop.permute.xlu0 %3958
        %3960 = vrot.lane.b32.xlu0 %v3618, 96
        %v3961 = vpop.permute.xlu0 %3960
        %3962 = vrot.lane.b32.xlu0 %v3619, 96
        %v3963 = vpop.permute.xlu0 %3962
        %3964 = vrot.lane.b32.xlu0 %v3620, 96
        %v3965 = vpop.permute.xlu0 %3964
        %3966 = vrot.lane.b32.xlu0 %v3621, 96
        %v3967 = vpop.permute.xlu0 %3966
        %3968 = vrot.lane.b32.xlu0 %v3622, 96
        %v3969 = vpop.permute.xlu0 %3968
        %3970 = vrot.lane.b32.xlu0 %v3623, 96
        %v3971 = vpop.permute.xlu0 %3970
        %3972 = vrot.lane.b32.xlu0 %v3624, 96
        %v3973 = vpop.permute.xlu0 %3972
        %3974 = vrot.lane.b32.xlu0 %v3625, 96
        %v3975 = vpop.permute.xlu0 %3974
        %3976 = vrot.lane.b32.xlu0 %v3626, 96
        %v3977 = vpop.permute.xlu0 %3976
        %3978 = vrot.lane.b32.xlu0 %v3627, 96
        %v3979 = vpop.permute.xlu0 %3978
        %3980 = vrot.lane.b32.xlu0 %v3628, 96
        %v3981 = vpop.permute.xlu0 %3980
        %3982 = vrot.lane.b32.xlu0 %v3629, 96
        %v3983 = vpop.permute.xlu0 %3982
        %3984 = vrot.lane.b32.xlu0 %v3630, 96
        %v3985 = vpop.permute.xlu0 %3984
        %3986 = vrot.lane.b32.xlu0 %v3631, 96
        %v3987 = vpop.permute.xlu0 %3986
        %3988 = vrot.lane.b32.xlu0 %v3632, 96
        %v3989 = vpop.permute.xlu0 %3988
        %3990 = vrot.lane.b32.xlu0 %v3633, 96
        %v3991 = vpop.permute.xlu0 %3990
        %3992 = vrot.lane.b32.xlu0 %v3634, 96
        %v3993 = vpop.permute.xlu0 %3992
        %3994 = vrot.lane.b32.xlu0 %v3635, 96
        %v3995 = vpop.permute.xlu0 %3994
        %4044 = vrot.lane.b32.xlu0 %v3660, 32
        %v4045 = vpop.permute.xlu0 %4044
        %4046 = vrot.lane.b32.xlu0 %v3661, 32
        %v4047 = vpop.permute.xlu0 %4046
        %4048 = vrot.lane.b32.xlu0 %v3662, 32
        %v4049 = vpop.permute.xlu0 %4048
        %4050 = vrot.lane.b32.xlu0 %v3663, 32
        %v4051 = vpop.permute.xlu0 %4050
        %4052 = vrot.lane.b32.xlu0 %v3664, 32
        %v4053 = vpop.permute.xlu0 %4052
        %4054 = vrot.lane.b32.xlu0 %v3665, 32
        %v4055 = vpop.permute.xlu0 %4054
        %4056 = vrot.lane.b32.xlu0 %v3666, 32
        %v4057 = vpop.permute.xlu0 %4056
        %4058 = vrot.lane.b32.xlu0 %v3667, 32
        %v4059 = vpop.permute.xlu0 %4058
        %4060 = vrot.lane.b32.xlu0 %v3668, 32
        %v4061 = vpop.permute.xlu0 %4060
        %4062 = vrot.lane.b32.xlu0 %v3669, 32
        %v4063 = vpop.permute.xlu0 %4062
        %4064 = vrot.lane.b32.xlu0 %v3670, 32
        %v4065 = vpop.permute.xlu0 %4064
        %4066 = vrot.lane.b32.xlu0 %v3671, 32
        %v4067 = vpop.permute.xlu0 %4066
        %4068 = vrot.lane.b32.xlu0 %v3672, 32
        %v4069 = vpop.permute.xlu0 %4068
        %4070 = vrot.lane.b32.xlu0 %v3673, 32
        %v4071 = vpop.permute.xlu0 %4070
        %4072 = vrot.lane.b32.xlu0 %v3674, 32
        %v4073 = vpop.permute.xlu0 %4072
        %4074 = vrot.lane.b32.xlu0 %v3675, 32
        %v4075 = vpop.permute.xlu0 %4074
        %4076 = vrot.lane.b32.xlu0 %v3676, 32
        %v4077 = vpop.permute.xlu0 %4076
        %4078 = vrot.lane.b32.xlu0 %v3677, 32
        %v4079 = vpop.permute.xlu0 %4078
        %4080 = vrot.lane.b32.xlu0 %v3678, 32
        %v4081 = vpop.permute.xlu0 %4080
        %4082 = vrot.lane.b32.xlu0 %v3679, 32
        %v4083 = vpop.permute.xlu0 %4082
        %4084 = vrot.lane.b32.xlu0 %v3680, 32
        %v4085 = vpop.permute.xlu0 %4084
        %4086 = vrot.lane.b32.xlu0 %v3681, 32
        %v4087 = vpop.permute.xlu0 %4086
        %4088 = vrot.lane.b32.xlu0 %v3682, 32
        %v4089 = vpop.permute.xlu0 %4088
        %4090 = vrot.lane.b32.xlu0 %v3683, 32
        %v4091 = vpop.permute.xlu0 %4090
        %4140 = vrot.lane.b32.xlu0 %v3684, 64
        %v4141 = vpop.permute.xlu0 %4140
        %4142 = vrot.lane.b32.xlu0 %v3685, 64
        %v4143 = vpop.permute.xlu0 %4142
        %4144 = vrot.lane.b32.xlu0 %v3686, 64
        %v4145 = vpop.permute.xlu0 %4144
        %4146 = vrot.lane.b32.xlu0 %v3687, 64
        %v4147 = vpop.permute.xlu0 %4146
        %4148 = vrot.lane.b32.xlu0 %v3688, 64
        %v4149 = vpop.permute.xlu0 %4148
        %4150 = vrot.lane.b32.xlu0 %v3689, 64
        %v4151 = vpop.permute.xlu0 %4150
        %4152 = vrot.lane.b32.xlu0 %v3690, 64
        %v4153 = vpop.permute.xlu0 %4152
        %4154 = vrot.lane.b32.xlu0 %v3691, 64
        %v4155 = vpop.permute.xlu0 %4154
        %4156 = vrot.lane.b32.xlu0 %v3692, 64
        %v4157 = vpop.permute.xlu0 %4156
        %4158 = vrot.lane.b32.xlu0 %v3693, 64
        %v4159 = vpop.permute.xlu0 %4158
        %4160 = vrot.lane.b32.xlu0 %v3694, 64
        %v4161 = vpop.permute.xlu0 %4160
        %4162 = vrot.lane.b32.xlu0 %v3695, 64
        %v4163 = vpop.permute.xlu0 %4162
        %4164 = vrot.lane.b32.xlu0 %v3696, 64
        %v4165 = vpop.permute.xlu0 %4164
        %4166 = vrot.lane.b32.xlu0 %v3697, 64
        %v4167 = vpop.permute.xlu0 %4166
        %4168 = vrot.lane.b32.xlu0 %v3698, 64
        %v4169 = vpop.permute.xlu0 %4168
        %4170 = vrot.lane.b32.xlu0 %v3699, 64
        %v4171 = vpop.permute.xlu0 %4170
        %4172 = vrot.lane.b32.xlu0 %v3700, 64
        %v4173 = vpop.permute.xlu0 %4172
        %4174 = vrot.lane.b32.xlu0 %v3701, 64
        %v4175 = vpop.permute.xlu0 %4174
        %4176 = vrot.lane.b32.xlu0 %v3702, 64
        %v4177 = vpop.permute.xlu0 %4176
        %4178 = vrot.lane.b32.xlu0 %v3703, 64
        %v4179 = vpop.permute.xlu0 %4178
        %4180 = vrot.lane.b32.xlu0 %v3704, 64
        %v4181 = vpop.permute.xlu0 %4180
        %4182 = vrot.lane.b32.xlu0 %v3705, 64
        %v4183 = vpop.permute.xlu0 %4182
        %4184 = vrot.lane.b32.xlu0 %v3706, 64
        %v4185 = vpop.permute.xlu0 %4184
        %4186 = vrot.lane.b32.xlu0 %v3707, 64
        %v4187 = vpop.permute.xlu0 %4186
        %4236 = vrot.lane.b32.xlu0 %v3708, 96
        %v4237 = vpop.permute.xlu0 %4236
        %4238 = vrot.lane.b32.xlu0 %v3709, 96
        %v4239 = vpop.permute.xlu0 %4238
        %4240 = vrot.lane.b32.xlu0 %v3710, 96
        %v4241 = vpop.permute.xlu0 %4240
        %4242 = vrot.lane.b32.xlu0 %v3711, 96
        %v4243 = vpop.permute.xlu0 %4242
        %4244 = vrot.lane.b32.xlu0 %v3712, 96
        %v4245 = vpop.permute.xlu0 %4244
        %4246 = vrot.lane.b32.xlu0 %v3713, 96
        %v4247 = vpop.permute.xlu0 %4246
        %4248 = vrot.lane.b32.xlu0 %v3714, 96
        %v4249 = vpop.permute.xlu0 %4248
        %4250 = vrot.lane.b32.xlu0 %v3715, 96
        %v4251 = vpop.permute.xlu0 %4250
        %4252 = vrot.lane.b32.xlu0 %v3716, 96
        %v4253 = vpop.permute.xlu0 %4252
        %4254 = vrot.lane.b32.xlu0 %v3717, 96
        %v4255 = vpop.permute.xlu0 %4254
        %4256 = vrot.lane.b32.xlu0 %v3718, 96
        %v4257 = vpop.permute.xlu0 %4256
        %4258 = vrot.lane.b32.xlu0 %v3719, 96
        %v4259 = vpop.permute.xlu0 %4258
        %4260 = vrot.lane.b32.xlu0 %v3720, 96
        %v4261 = vpop.permute.xlu0 %4260
        %4262 = vrot.lane.b32.xlu0 %v3721, 96
        %v4263 = vpop.permute.xlu0 %4262
        %4264 = vrot.lane.b32.xlu0 %v3722, 96
        %v4265 = vpop.permute.xlu0 %4264
        %4266 = vrot.lane.b32.xlu0 %v3723, 96
        %v4267 = vpop.permute.xlu0 %4266
        %4268 = vrot.lane.b32.xlu0 %v3724, 96
        %v4269 = vpop.permute.xlu0 %4268
        %4270 = vrot.lane.b32.xlu0 %v3725, 96
        %v4271 = vpop.permute.xlu0 %4270
        %4272 = vrot.lane.b32.xlu0 %v3726, 96
        %v4273 = vpop.permute.xlu0 %4272
        %4274 = vrot.lane.b32.xlu0 %v3727, 96
        %v4275 = vpop.permute.xlu0 %4274
        %4276 = vrot.lane.b32.xlu0 %v3728, 96
        %v4277 = vpop.permute.xlu0 %4276
        %4278 = vrot.lane.b32.xlu0 %v3729, 96
        %v4279 = vpop.permute.xlu0 %4278
        %4280 = vrot.lane.b32.xlu0 %v3730, 96
        %v4281 = vpop.permute.xlu0 %4280
        %4282 = vrot.lane.b32.xlu0 %v3731, 96
        %v4283 = vpop.permute.xlu0 %4282
        %v4308 = vsel %vm3273, %v3540, %v3757
        %v4309 = vsel %vm3273, %v3541, %v3759
        %v4310 = vsel %vm3273, %v3542, %v3761
        %v4311 = vsel %vm3273, %v3543, %v3763
        %v4312 = vsel %vm3273, %v3544, %v3765
        %v4313 = vsel %vm3273, %v3545, %v3767
        %v4314 = vsel %vm3273, %v3546, %v3769
        %v4315 = vsel %vm3273, %v3547, %v3771
        %v4316 = vsel %vm3273, %v3548, %v3773
        %v4317 = vsel %vm3273, %v3549, %v3775
        %v4318 = vsel %vm3273, %v3550, %v3777
        %v4319 = vsel %vm3273, %v3551, %v3779
        %v4320 = vsel %vm3273, %v3552, %v3781
        %v4321 = vsel %vm3273, %v3553, %v3783
        %v4322 = vsel %vm3273, %v3554, %v3785
        %v4323 = vsel %vm3273, %v3555, %v3787
        %v4324 = vsel %vm3273, %v3556, %v3789
        %v4325 = vsel %vm3273, %v3557, %v3791
        %v4326 = vsel %vm3273, %v3558, %v3793
        %v4327 = vsel %vm3273, %v3559, %v3795
        %v4328 = vsel %vm3273, %v3560, %v3797
        %v4329 = vsel %vm3273, %v3561, %v3799
        %v4330 = vsel %vm3273, %v3562, %v3801
        %v4331 = vsel %vm3273, %v3563, %v3803
        %vm4332 = vcmask 523264
        %v4333 = vsel %vm4332, %v4308, %v3853
        %v4334 = vsel %vm4332, %v4309, %v3855
        %v4335 = vsel %vm4332, %v4310, %v3857
        %v4336 = vsel %vm4332, %v4311, %v3859
        %v4337 = vsel %vm4332, %v4312, %v3861
        %v4338 = vsel %vm4332, %v4313, %v3863
        %v4339 = vsel %vm4332, %v4314, %v3865
        %v4340 = vsel %vm4332, %v4315, %v3867
        %v4341 = vsel %vm4332, %v4316, %v3869
        %v4342 = vsel %vm4332, %v4317, %v3871
        %v4343 = vsel %vm4332, %v4318, %v3873
        %v4344 = vsel %vm4332, %v4319, %v3875
        %v4345 = vsel %vm4332, %v4320, %v3877
        %v4346 = vsel %vm4332, %v4321, %v3879
        %v4347 = vsel %vm4332, %v4322, %v3881
        %v4348 = vsel %vm4332, %v4323, %v3883
        %v4349 = vsel %vm4332, %v4324, %v3885
        %v4350 = vsel %vm4332, %v4325, %v3887
        %v4351 = vsel %vm4332, %v4326, %v3889
        %v4352 = vsel %vm4332, %v4327, %v3891
        %v4353 = vsel %vm4332, %v4328, %v3893
        %v4354 = vsel %vm4332, %v4329, %v3895
        %v4355 = vsel %vm4332, %v4330, %v3897
        %v4356 = vsel %vm4332, %v4331, %v3899
        %vm4357 = vcmask 785408
        %v4358 = vsel %vm4357, %v4333, %v3949
        %v4359 = vsel %vm4357, %v4334, %v3951
        %v4360 = vsel %vm4357, %v4335, %v3953
        %v4361 = vsel %vm4357, %v4336, %v3955
        %v4362 = vsel %vm4357, %v4337, %v3957
        %v4363 = vsel %vm4357, %v4338, %v3959
        %v4364 = vsel %vm4357, %v4339, %v3961
        %v4365 = vsel %vm4357, %v4340, %v3963
        %v4366 = vsel %vm4357, %v4341, %v3965
        %v4367 = vsel %vm4357, %v4342, %v3967
        %v4368 = vsel %vm4357, %v4343, %v3969
        %v4369 = vsel %vm4357, %v4344, %v3971
        %v4370 = vsel %vm4357, %v4345, %v3973
        %v4371 = vsel %vm4357, %v4346, %v3975
        %v4372 = vsel %vm4357, %v4347, %v3977
        %v4373 = vsel %vm4357, %v4348, %v3979
        %v4374 = vsel %vm4357, %v4349, %v3981
        %v4375 = vsel %vm4357, %v4350, %v3983
        %v4376 = vsel %vm4357, %v4351, %v3985
        %v4377 = vsel %vm4357, %v4352, %v3987
        %v4378 = vsel %vm4357, %v4353, %v3989
        %v4379 = vsel %vm4357, %v4354, %v3991
        %v4380 = vsel %vm4357, %v4355, %v3993
        %v4381 = vsel %vm4357, %v4356, %v3995
        %v4382 = vsel %vm3273, %v3636, %v4045
        %v4383 = vsel %vm3273, %v3637, %v4047
        %v4384 = vsel %vm3273, %v3638, %v4049
        %v4385 = vsel %vm3273, %v3639, %v4051
        %v4386 = vsel %vm3273, %v3640, %v4053
        %v4387 = vsel %vm3273, %v3641, %v4055
        %v4388 = vsel %vm3273, %v3642, %v4057
        %v4389 = vsel %vm3273, %v3643, %v4059
        %v4390 = vsel %vm3273, %v3644, %v4061
        %v4391 = vsel %vm3273, %v3645, %v4063
        %v4392 = vsel %vm3273, %v3646, %v4065
        %v4393 = vsel %vm3273, %v3647, %v4067
        %v4394 = vsel %vm3273, %v3648, %v4069
        %v4395 = vsel %vm3273, %v3649, %v4071
        %v4396 = vsel %vm3273, %v3650, %v4073
        %v4397 = vsel %vm3273, %v3651, %v4075
        %v4398 = vsel %vm3273, %v3652, %v4077
        %v4399 = vsel %vm3273, %v3653, %v4079
        %v4400 = vsel %vm3273, %v3654, %v4081
        %v4401 = vsel %vm3273, %v3655, %v4083
        %v4402 = vsel %vm3273, %v3656, %v4085
        %v4403 = vsel %vm3273, %v3657, %v4087
        %v4404 = vsel %vm3273, %v3658, %v4089
        %v4405 = vsel %vm3273, %v3659, %v4091
        %v4406 = vsel %vm4332, %v4382, %v4141
        %v4407 = vsel %vm4332, %v4383, %v4143
        %v4408 = vsel %vm4332, %v4384, %v4145
        %v4409 = vsel %vm4332, %v4385, %v4147
        %v4410 = vsel %vm4332, %v4386, %v4149
        %v4411 = vsel %vm4332, %v4387, %v4151
        %v4412 = vsel %vm4332, %v4388, %v4153
        %v4413 = vsel %vm4332, %v4389, %v4155
        %v4414 = vsel %vm4332, %v4390, %v4157
        %v4415 = vsel %vm4332, %v4391, %v4159
        %v4416 = vsel %vm4332, %v4392, %v4161
        %v4417 = vsel %vm4332, %v4393, %v4163
        %v4418 = vsel %vm4332, %v4394, %v4165
        %v4419 = vsel %vm4332, %v4395, %v4167
        %v4420 = vsel %vm4332, %v4396, %v4169
        %v4421 = vsel %vm4332, %v4397, %v4171
        %v4422 = vsel %vm4332, %v4398, %v4173
        %v4423 = vsel %vm4332, %v4399, %v4175
        %v4424 = vsel %vm4332, %v4400, %v4177
        %v4425 = vsel %vm4332, %v4401, %v4179
        %v4426 = vsel %vm4332, %v4402, %v4181
        %v4427 = vsel %vm4332, %v4403, %v4183
        %v4428 = vsel %vm4332, %v4404, %v4185
        %v4429 = vsel %vm4332, %v4405, %v4187
        %v4430 = vsel %vm4357, %v4406, %v4237
        %v4431 = vsel %vm4357, %v4407, %v4239
        %v4432 = vsel %vm4357, %v4408, %v4241
        %v4433 = vsel %vm4357, %v4409, %v4243
        %v4434 = vsel %vm4357, %v4410, %v4245
        %v4435 = vsel %vm4357, %v4411, %v4247
        %v4436 = vsel %vm4357, %v4412, %v4249
        %v4437 = vsel %vm4357, %v4413, %v4251
        %v4438 = vsel %vm4357, %v4414, %v4253
        %v4439 = vsel %vm4357, %v4415, %v4255
        %v4440 = vsel %vm4357, %v4416, %v4257
        %v4441 = vsel %vm4357, %v4417, %v4259
        %v4442 = vsel %vm4357, %v4418, %v4261
        %v4443 = vsel %vm4357, %v4419, %v4263
        %v4444 = vsel %vm4357, %v4420, %v4265
        %v4445 = vsel %vm4357, %v4421, %v4267
        %v4446 = vsel %vm4357, %v4422, %v4269
        %v4447 = vsel %vm4357, %v4423, %v4271
        %v4448 = vsel %vm4357, %v4424, %v4273
        %v4449 = vsel %vm4357, %v4425, %v4275
        %v4450 = vsel %vm4357, %v4426, %v4277
        %v4451 = vsel %vm4357, %v4427, %v4279
        %v4452 = vsel %vm4357, %v4428, %v4281
        %v4453 = vsel %vm4357, %v4429, %v4283
        %v4454 = vld [vmem:[%s4] sm:$0xff]
        %v4455 = vld [vmem:[%s4 + $0x8] sm:$0xff]
        %v4456 = vld [vmem:[%s4 + $0x10] sm:$0xff]
        %v4457 = vld [vmem:[%s4 + $0x18] sm:$0xff]
        %v4458 = vld [vmem:[%s4 + $0x20] sm:$0xff]
        %v4459 = vld [vmem:[%s4 + $0x28] sm:$0xff]
        %v4460 = vld [vmem:[%s4 + $0x30] sm:$0xff]
        %v4461 = vld [vmem:[%s4 + $0x38] sm:$0xff]
        %v4462 = vld [vmem:[%s4 + $0x40] sm:$0xff]
        %v4463 = vld [vmem:[%s4 + $0x48] sm:$0xff]
        %v4464 = vld [vmem:[%s4 + $0x50] sm:$0xff]
        %v4465 = vld [vmem:[%s4 + $0x58] sm:$0xff]
        %v4466 = vld [vmem:[%s4 + $0x60] sm:$0xff]
        %v4467 = vld [vmem:[%s4 + $0x68] sm:$0xff]
        %v4468 = vld [vmem:[%s4 + $0x70] sm:$0xff]
        %v4469 = vld [vmem:[%s4 + $0x78] sm:$0xff]
        %v4470 = vld [vmem:[%s4 + $0x80] sm:$0xff]
        %v4471 = vld [vmem:[%s4 + $0x88] sm:$0xff]
        %v4472 = vld [vmem:[%s4 + $0x90] sm:$0xff]
        %v4473 = vld [vmem:[%s4 + $0x98] sm:$0xff]
        %v4474 = vld [vmem:[%s4 + $0xa0] sm:$0xff]
        %v4475 = vld [vmem:[%s4 + $0xa8] sm:$0xff]
        %v4476 = vld [vmem:[%s4 + $0xb0] sm:$0xff]
        %v4477 = vld [vmem:[%s4 + $0xb8] sm:$0xff]
        %v4478 = vld [vmem:[%s4 + $0xc0] sm:$0xff]
        %v4479 = vld [vmem:[%s4 + $0xc8] sm:$0xff]
        %v4480 = vld [vmem:[%s4 + $0xd0] sm:$0xff]
        %v4481 = vld [vmem:[%s4 + $0xd8] sm:$0xff]
        %v4482 = vld [vmem:[%s4 + $0xe0] sm:$0xff]
        %v4483 = vld [vmem:[%s4 + $0xe8] sm:$0xff]
        %v4484 = vld [vmem:[%s4 + $0xf0] sm:$0xff]
        %v4485 = vld [vmem:[%s4 + $0xf8] sm:$0xff]
        %4486 = vmatprep.subr.mxu0 0.0
        %4487 = vmatpush1.msra.mxu0 %v4454
        %4488 = vmatprep.subr.mxu0 0.0
        %4489 = vmatpush1.msra.mxu0 %v4455
        %4490 = vmatprep.subr.mxu0 0.0
        %4491 = vmatpush1.msra.mxu0 %v4456
        %4492 = vmatprep.subr.mxu0 0.0
        %4493 = vmatpush1.msra.mxu0 %v4457
        %4494 = vmatprep.subr.mxu0 0.0
        %4495 = vmatpush1.msra.mxu0 %v4458
        %4496 = vmatprep.subr.mxu0 0.0
        %4497 = vmatpush1.msra.mxu0 %v4459
        %4498 = vmatprep.subr.mxu0 0.0
        %4499 = vmatpush1.msra.mxu0 %v4460
        %4500 = vmatprep.subr.mxu0 0.0
        %4501 = vmatpush1.msra.mxu0 %v4461
        %4502 = vmatprep.subr.mxu0 0.0
        %4503 = vmatpush1.msra.mxu0 %v4462
        %4504 = vmatprep.subr.mxu0 0.0
        %4505 = vmatpush1.msra.mxu0 %v4463
        %4506 = vmatprep.subr.mxu0 0.0
        %4507 = vmatpush1.msra.mxu0 %v4464
        %4508 = vmatprep.subr.mxu0 0.0
        %4509 = vmatpush1.msra.mxu0 %v4465
        %4510 = vmatprep.subr.mxu0 0.0
        %4511 = vmatpush1.msra.mxu0 %v4466
        %4512 = vmatprep.subr.mxu0 0.0
        %4513 = vmatpush1.msra.mxu0 %v4467
        %4514 = vmatprep.subr.mxu0 0.0
        %4515 = vmatpush1.msra.mxu0 %v4468
        %4516 = vmatprep.subr.mxu0 0.0
        %4517 = vmatpush1.msra.mxu0 %v4469
        %4518 = vmatprep.subr.mxu0 0.0
        %4519 = vmatpush1.msra.mxu0 %v4470
        %4520 = vmatprep.subr.mxu0 0.0
        %4521 = vmatpush1.msra.mxu0 %v4471
        %4522 = vmatprep.subr.mxu0 0.0
        %4523 = vmatpush1.msra.mxu0 %v4472
        %4524 = vmatprep.subr.mxu0 0.0
        %4525 = vmatpush1.msra.mxu0 %v4473
        %4526 = vmatprep.subr.mxu0 0.0
        %4527 = vmatpush1.msra.mxu0 %v4474
        %4528 = vmatprep.subr.mxu0 0.0
        %4529 = vmatpush1.msra.mxu0 %v4475
        %4530 = vmatprep.subr.mxu0 0.0
        %4531 = vmatpush1.msra.mxu0 %v4476
        %4532 = vmatprep.subr.mxu0 0.0
        %4533 = vmatpush1.msra.mxu0 %v4477
        %4534 = vmatprep.subr.mxu0 0.0
        %4535 = vmatpush1.msra.mxu0 %v4478
        %4536 = vmatprep.subr.mxu0 0.0
        %4537 = vmatpush1.msra.mxu0 %v4479
        %4538 = vmatprep.subr.mxu0 0.0
        %4539 = vmatpush1.msra.mxu0 %v4480
        %4540 = vmatprep.subr.mxu0 0.0
        %4541 = vmatpush1.msra.mxu0 %v4481
        %4542 = vmatprep.subr.mxu0 0.0
        %4543 = vmatpush1.msra.mxu0 %v4482
        %4544 = vmatprep.subr.mxu0 0.0
        %4545 = vmatpush1.msra.mxu0 %v4483
        %4546 = vmatprep.subr.mxu0 0.0
        %4547 = vmatpush1.msra.mxu0 %v4484
        %4548 = vmatprep.subr.mxu0 0.0
        %4549 = vmatpush1.msra.mxu0 %v4485
        %4550 = vmatprep.mubr.f32.mxu0 %v4430
        %4551 = vmatmul.mubr.f32.gmra.mrb[0].mxu0 %v4358
        %v4552 = vpop.f32.mrb[0].mxu0
        %v4553 = vadd.f32 0.0, %v4552
        %v4554 = vpop.f32.mrb[0].mxu0
        %4555 = vmatprep.mubr.f32.mxu0 %v4431
        %4556 = vmatmul.mubr.f32.gmra.mrb[0].mxu0 %v4359
        %v4557 = vpop.f32.mrb[0].mxu0
        %v4558 = vadd.f32 0.0, %v4557
        %v4559 = vpop.f32.mrb[0].mxu0
        %4560 = vmatprep.mubr.f32.mxu0 %v4432
        %4561 = vmatmul.mubr.f32.gmra.mrb[0].mxu0 %v4360
        %v4562 = vpop.f32.mrb[0].mxu0
        %v4563 = vadd.f32 0.0, %v4562
        %v4564 = vpop.f32.mrb[0].mxu0
        %4565 = vmatprep.mubr.f32.mxu0 %v4433
        %4566 = vmatmul.mubr.f32.gmra.mrb[0].mxu0 %v4361
        %v4567 = vpop.f32.mrb[0].mxu0
        %v4568 = vadd.f32 0.0, %v4567
        %v4569 = vpop.f32.mrb[0].mxu0
        %4570 = vmatprep.mubr.f32.mxu0 %v4434
        %4571 = vmatmul.mubr.f32.gmra.mrb[0].mxu0 %v4362
        %v4572 = vpop.f32.mrb[0].mxu0
        %v4573 = vadd.f32 0.0, %v4572
        %v4574 = vpop.f32.mrb[0].mxu0
        %4575 = vmatprep.mubr.f32.mxu0 %v4435
        %4576 = vmatmul.mubr.f32.gmra.mrb[0].mxu0 %v4363
        %v4577 = vpop.f32.mrb[0].mxu0
        %v4578 = vadd.f32 0.0, %v4577
        %v4579 = vpop.f32.mrb[0].mxu0
        %4580 = vmatprep.mubr.f32.mxu0 %v4436
        %4581 = vmatmul.mubr.f32.gmra.mrb[0].mxu0 %v4364
        %v4582 = vpop.f32.mrb[0].mxu0
        %v4583 = vadd.f32 0.0, %v4582
        %v4584 = vpop.f32.mrb[0].mxu0
        %4585 = vmatprep.mubr.f32.mxu0 %v4437
        %4586 = vmatmul.mubr.f32.gmra.mrb[0].mxu0 %v4365
        %v4587 = vpop.f32.mrb[0].mxu0
        %v4588 = vadd.f32 0.0, %v4587
        %v4589 = vpop.f32.mrb[0].mxu0
        %4590 = vmatprep.mubr.f32.mxu0 %v4438
        %4591 = vmatmul.mubr.f32.gmra.mrb[0].mxu0 %v4366
        %v4592 = vpop.f32.mrb[0].mxu0
        %v4593 = vadd.f32 0.0, %v4592
        %v4594 = vpop.f32.mrb[0].mxu0
        %4595 = vmatprep.mubr.f32.mxu0 %v4439
        %4596 = vmatmul.mubr.f32.gmra.mrb[0].mxu0 %v4367
        %v4597 = vpop.f32.mrb[0].mxu0
        %v4598 = vadd.f32 0.0, %v4597
        %v4599 = vpop.f32.mrb[0].mxu0
        %4600 = vmatprep.mubr.f32.mxu0 %v4440
        %4601 = vmatmul.mubr.f32.gmra.mrb[0].mxu0 %v4368
        %v4602 = vpop.f32.mrb[0].mxu0
        %v4603 = vadd.f32 0.0, %v4602
        %v4604 = vpop.f32.mrb[0].mxu0
        %4605 = vmatprep.mubr.f32.mxu0 %v4441
        %4606 = vmatmul.mubr.f32.gmra.mrb[0].mxu0 %v4369
        %v4607 = vpop.f32.mrb[0].mxu0
        %v4608 = vadd.f32 0.0, %v4607
        %v4609 = vpop.f32.mrb[0].mxu0
        %4610 = vmatprep.mubr.f32.mxu0 %v4442
        %4611 = vmatmul.mubr.f32.gmra.mrb[0].mxu0 %v4370
        %v4612 = vpop.f32.mrb[0].mxu0
        %v4613 = vadd.f32 0.0, %v4612
        %v4614 = vpop.f32.mrb[0].mxu0
        %4615 = vmatprep.mubr.f32.mxu0 %v4443
        %4616 = vmatmul.mubr.f32.gmra.mrb[0].mxu0 %v4371
        %v4617 = vpop.f32.mrb[0].mxu0
        %v4618 = vadd.f32 0.0, %v4617
        %v4619 = vpop.f32.mrb[0].mxu0
        %4620 = vmatprep.mubr.f32.mxu0 %v4444
        %4621 = vmatmul.mubr.f32.gmra.mrb[0].mxu0 %v4372
        %v4622 = vpop.f32.mrb[0].mxu0
        %v4623 = vadd.f32 0.0, %v4622
        %v4624 = vpop.f32.mrb[0].mxu0
        %4625 = vmatprep.mubr.f32.mxu0 %v4445
        %4626 = vmatmul.mubr.f32.gmra.mrb[0].mxu0 %v4373
        %v4627 = vpop.f32.mrb[0].mxu0
        %v4628 = vadd.f32 0.0, %v4627
        %v4629 = vpop.f32.mrb[0].mxu0
        %4630 = vmatprep.mubr.f32.mxu0 %v4446
        %4631 = vmatmul.mubr.f32.gmra.mrb[0].mxu0 %v4374
        %v4632 = vpop.f32.mrb[0].mxu0
        %v4633 = vadd.f32 0.0, %v4632
        %v4634 = vpop.f32.mrb[0].mxu0
        %4635 = vmatprep.mubr.f32.mxu0 %v4447
        %4636 = vmatmul.mubr.f32.gmra.mrb[0].mxu0 %v4375
        %v4637 = vpop.f32.mrb[0].mxu0
        %v4638 = vadd.f32 0.0, %v4637
        %v4639 = vpop.f32.mrb[0].mxu0
        %4640 = vmatprep.mubr.f32.mxu0 %v4448
        %4641 = vmatmul.mubr.f32.gmra.mrb[0].mxu0 %v4376
        %v4642 = vpop.f32.mrb[0].mxu0
        %v4643 = vadd.f32 0.0, %v4642
        %v4644 = vpop.f32.mrb[0].mxu0
        %4645 = vmatprep.mubr.f32.mxu0 %v4449
        %4646 = vmatmul.mubr.f32.gmra.mrb[0].mxu0 %v4377
        %v4647 = vpop.f32.mrb[0].mxu0
        %v4648 = vadd.f32 0.0, %v4647
        %v4649 = vpop.f32.mrb[0].mxu0
        %4650 = vmatprep.mubr.f32.mxu0 %v4450
        %4651 = vmatmul.mubr.f32.gmra.mrb[0].mxu0 %v4378
        %v4652 = vpop.f32.mrb[0].mxu0
        %v4653 = vadd.f32 0.0, %v4652
        %v4654 = vpop.f32.mrb[0].mxu0
        %4655 = vmatprep.mubr.f32.mxu0 %v4451
        %4656 = vmatmul.mubr.f32.gmra.mrb[0].mxu0 %v4379
        %v4657 = vpop.f32.mrb[0].mxu0
        %v4658 = vadd.f32 0.0, %v4657
        %v4659 = vpop.f32.mrb[0].mxu0
        %4660 = vmatprep.mubr.f32.mxu0 %v4452
        %4661 = vmatmul.mubr.f32.gmra.mrb[0].mxu0 %v4380
        %v4662 = vpop.f32.mrb[0].mxu0
        %v4663 = vadd.f32 0.0, %v4662
        %v4664 = vpop.f32.mrb[0].mxu0
        %4665 = vmatprep.mubr.f32.mxu0 %v4453
        %4666 = vmatmul.mubr.f32.gmra.mrb[0].mxu0 %v4381
        %v4667 = vpop.f32.mrb[0].mxu0
        %v4668 = vadd.f32 0.0, %v4667
        %v4669 = vpop.f32.mrb[0].mxu0
        %4670 = vdwg.mxu0
        %v4671 = vld [vmem:[%s5] sm:$0x1]
        %v4673 = vlaneseq
        %v4674 = vshrl.u32 %v4673, 7
        %v4675 = vsub.s32 0, %v4674
        %v4676 = vrot.slane %v4671, %v4675
        %v4678 = vmul.f32 %v4553, %v4676
        %v4679 = vmul.f32 %v4558, %v4676
        %v4680 = vmul.f32 %v4563, %v4676
        %v4681 = vmul.f32 %v4568, %v4676
        %v4682 = vmul.f32 %v4573, %v4676
        %v4683 = vmul.f32 %v4578, %v4676
        %v4684 = vmul.f32 %v4583, %v4676
        %v4685 = vmul.f32 %v4588, %v4676
        %v4686 = vmul.f32 %v4593, %v4676
        %v4687 = vmul.f32 %v4598, %v4676
        %v4688 = vmul.f32 %v4603, %v4676
        %v4689 = vmul.f32 %v4608, %v4676
        %v4690 = vmul.f32 %v4613, %v4676
        %v4691 = vmul.f32 %v4618, %v4676
        %v4692 = vmul.f32 %v4623, %v4676
        %v4693 = vmul.f32 %v4628, %v4676
        %v4694 = vmul.f32 %v4633, %v4676
        %v4695 = vmul.f32 %v4638, %v4676
        %v4696 = vmul.f32 %v4643, %v4676
        %v4697 = vmul.f32 %v4648, %v4676
        %v4698 = vmul.f32 %v4653, %v4676
        %v4699 = vmul.f32 %v4658, %v4676
        %v4700 = vmul.f32 %v4663, %v4676
        %v4701 = vmul.f32 %v4668, %v4676
        %v4702 = vld [vmem:[%s6] sm:$0x1]
        %v4704 = vlaneseq
        %v4705 = vshrl.u32 %v4704, 7
        %v4706 = vsub.s32 0, %v4705
        %v4707 = vrot.slane %v4702, %v4706
        %v4709 = vadd.f32 %v4678, %v4707
        %v4710 = vadd.f32 %v4679, %v4707
        %v4711 = vadd.f32 %v4680, %v4707
        %v4712 = vadd.f32 %v4681, %v4707
        %v4713 = vadd.f32 %v4682, %v4707
        %v4714 = vadd.f32 %v4683, %v4707
        %v4715 = vadd.f32 %v4684, %v4707
        %v4716 = vadd.f32 %v4685, %v4707
        %v4717 = vadd.f32 %v4686, %v4707
        %v4718 = vadd.f32 %v4687, %v4707
        %v4719 = vadd.f32 %v4688, %v4707
        %v4720 = vadd.f32 %v4689, %v4707
        %v4721 = vadd.f32 %v4690, %v4707
        %v4722 = vadd.f32 %v4691, %v4707
        %v4723 = vadd.f32 %v4692, %v4707
        %v4724 = vadd.f32 %v4693, %v4707
        %v4725 = vadd.f32 %v4694, %v4707
        %v4726 = vadd.f32 %v4695, %v4707
        %v4727 = vadd.f32 %v4696, %v4707
        %v4728 = vadd.f32 %v4697, %v4707
        %v4729 = vadd.f32 %v4698, %v4707
        %v4730 = vadd.f32 %v4699, %v4707
        %v4731 = vadd.f32 %v4700, %v4707
        %v4732 = vadd.f32 %v4701, %v4707
        %v4733 = vmax.f32 %v4709, 0.0
        %v4734 = vmax.f32 %v4710, 0.0
        %v4735 = vmax.f32 %v4711, 0.0
        %v4736 = vmax.f32 %v4712, 0.0
        %v4737 = vmax.f32 %v4713, 0.0
        %v4738 = vmax.f32 %v4714, 0.0
        %v4739 = vmax.f32 %v4715, 0.0
        %v4740 = vmax.f32 %v4716, 0.0
        %v4741 = vmax.f32 %v4717, 0.0
        %v4742 = vmax.f32 %v4718, 0.0
        %v4743 = vmax.f32 %v4719, 0.0
        %v4744 = vmax.f32 %v4720, 0.0
        %v4745 = vmax.f32 %v4721, 0.0
        %v4746 = vmax.f32 %v4722, 0.0
        %v4747 = vmax.f32 %v4723, 0.0
        %v4748 = vmax.f32 %v4724, 0.0
        %v4749 = vmax.f32 %v4725, 0.0
        %v4750 = vmax.f32 %v4726, 0.0
        %v4751 = vmax.f32 %v4727, 0.0
        %v4752 = vmax.f32 %v4728, 0.0
        %v4753 = vmax.f32 %v4729, 0.0
        %v4754 = vmax.f32 %v4730, 0.0
        %v4755 = vmax.f32 %v4731, 0.0
        %v4756 = vmax.f32 %v4732, 0.0
        %4757 = vst.msk [vmem:[#allocation5] sm:$0xff] %vm4332, -inf
        %4758 = vst.msk [vmem:[#allocation5 + $0x8] sm:$0xff] %vm4332, -inf
        %4759 = vst.msk [vmem:[#allocation5 + $0x10] sm:$0xff] %vm4332, -inf
        %4760 = vst.msk [vmem:[#allocation5 + $0x18] sm:$0xff] %vm4332, -inf
        %4761 = vst.msk [vmem:[#allocation5 + $0x20] sm:$0xff] %vm4332, -inf
        %4762 = vst.msk [vmem:[#allocation5 + $0x28] sm:$0xff] %vm4332, -inf
        %4763 = vst.msk [vmem:[#allocation5 + $0x30] sm:$0xff] %vm4332, -inf
        %4764 = vst.msk [vmem:[#allocation5 + $0x38] sm:$0xff] %vm4332, -inf
        %4765 = vst.msk [vmem:[#allocation5 + $0x40] sm:$0xff] %vm4332, -inf
        %4766 = vst.msk [vmem:[#allocation5 + $0x48] sm:$0xff] %vm4332, -inf
        %4767 = vst.msk [vmem:[#allocation5 + $0x50] sm:$0xff] %vm4332, -inf
        %4768 = vst.msk [vmem:[#allocation5 + $0x58] sm:$0xff] %vm4332, -inf
        %4769 = vst.msk [vmem:[#allocation5 + $0x60] sm:$0xff] %vm4332, -inf
        %4770 = vst.msk [vmem:[#allocation5 + $0x68] sm:$0xff] %vm4332, -inf
        %4771 = vst.msk [vmem:[#allocation5 + $0x70] sm:$0xff] %vm4332, -inf
        %4772 = vst.msk [vmem:[#allocation5 + $0x78] sm:$0xff] %vm4332, -inf
        %4773 = vst.msk [vmem:[#allocation5 + $0x80] sm:$0xff] %vm4332, -inf
        %4774 = vst.msk [vmem:[#allocation5 + $0x88] sm:$0xff] %vm4332, -inf
        %4775 = vst.msk [vmem:[#allocation5 + $0x90] sm:$0xff] %vm4332, -inf
        %4776 = vst.msk [vmem:[#allocation5 + $0x98] sm:$0xff] %vm4332, -inf
        %4777 = vst.msk [vmem:[#allocation5 + $0xa0] sm:$0xff] %vm4332, -inf
        %4778 = vst.msk [vmem:[#allocation5 + $0xa8] sm:$0xff] %vm4332, -inf
        %4779 = vst.msk [vmem:[#allocation5 + $0xb0] sm:$0xff] %vm4332, -inf
        %4780 = vst.msk [vmem:[#allocation5 + $0xb8] sm:$0xff] %vm4332, -inf
        %4781 = vst.msk [vmem:[#allocation5 + $0x1] sm:$0xff] %vm4332, %v4733
        %4782 = vst.msk [vmem:[#allocation5 + $0x9] sm:$0xff] %vm4332, %v4734
        %4783 = vst.msk [vmem:[#allocation5 + $0x11] sm:$0xff] %vm4332, %v4735
        %4784 = vst.msk [vmem:[#allocation5 + $0x19] sm:$0xff] %vm4332, %v4736
        %4785 = vst.msk [vmem:[#allocation5 + $0x21] sm:$0xff] %vm4332, %v4737
        %4786 = vst.msk [vmem:[#allocation5 + $0x29] sm:$0xff] %vm4332, %v4738
        %4787 = vst.msk [vmem:[#allocation5 + $0x31] sm:$0xff] %vm4332, %v4739
        %4788 = vst.msk [vmem:[#allocation5 + $0x39] sm:$0xff] %vm4332, %v4740
        %4789 = vst.msk [vmem:[#allocation5 + $0x41] sm:$0xff] %vm4332, %v4741
        %4790 = vst.msk [vmem:[#allocation5 + $0x49] sm:$0xff] %vm4332, %v4742
        %4791 = vst.msk [vmem:[#allocation5 + $0x51] sm:$0xff] %vm4332, %v4743
        %4792 = vst.msk [vmem:[#allocation5 + $0x59] sm:$0xff] %vm4332, %v4744
        %4793 = vst.msk [vmem:[#allocation5 + $0x61] sm:$0xff] %vm4332, %v4745
        %4794 = vst.msk [vmem:[#allocation5 + $0x69] sm:$0xff] %vm4332, %v4746
        %4795 = vst.msk [vmem:[#allocation5 + $0x71] sm:$0xff] %vm4332, %v4747
        %4796 = vst.msk [vmem:[#allocation5 + $0x79] sm:$0xff] %vm4332, %v4748
        %4797 = vst.msk [vmem:[#allocation5 + $0x81] sm:$0xff] %vm4332, %v4749
        %4798 = vst.msk [vmem:[#allocation5 + $0x89] sm:$0xff] %vm4332, %v4750
        %4799 = vst.msk [vmem:[#allocation5 + $0x91] sm:$0xff] %vm4332, %v4751
        %4800 = vst.msk [vmem:[#allocation5 + $0x99] sm:$0xff] %vm4332, %v4752
        %4801 = vst.msk [vmem:[#allocation5 + $0xa1] sm:$0xff] %vm4332, %v4753
        %4802 = vst.msk [vmem:[#allocation5 + $0xa9] sm:$0xff] %vm4332, %v4754
        %4803 = vst.msk [vmem:[#allocation5 + $0xb1] sm:$0xff] %vm4332, %v4755
        %vm4804 = vcmask 521216
        %4805 = vst.msk [vmem:[#allocation5 + $0xb9] sm:$0x3f] %vm4804, %v4756
        %v4806 = vld [vmem:[#allocation5] ss:$3 sm:$0xff]
        %s4807 = scalar_lea.vmem [#allocation5], 24
        %v4808 = vld [vmem:[%s4807] ss:$3 sm:$0xff]
        %s4809 = scalar_lea.vmem [#allocation5], 48
        %v4810 = vld [vmem:[%s4809] ss:$3 sm:$0xff]
        %s4811 = scalar_lea.vmem [#allocation5], 72
        %v4812 = vld [vmem:[%s4811] ss:$3 sm:$0xff]
        %s4813 = scalar_lea.vmem [#allocation5], 96
        %v4814 = vld [vmem:[%s4813] ss:$3 sm:$0xff]
        %s4815 = scalar_lea.vmem [#allocation5], 120
        %v4816 = vld [vmem:[%s4815] ss:$3 sm:$0xff]
        %s4817 = scalar_lea.vmem [#allocation5], 144
        %v4818 = vld [vmem:[%s4817] ss:$3 sm:$0xff]
        %s4819 = scalar_lea.vmem [#allocation5], 168
        %v4820 = vld [vmem:[%s4819] ss:$3 sm:$0xff]
        %s4821 = scalar_lea.vmem [#allocation5], 1
        %v4822 = vld [vmem:[%s4821] ss:$3 sm:$0xff]
        %s4823 = scalar_lea.vmem [#allocation5], 25
        %v4824 = vld [vmem:[%s4823] ss:$3 sm:$0xff]
        %s4825 = scalar_lea.vmem [#allocation5], 49
        %v4826 = vld [vmem:[%s4825] ss:$3 sm:$0xff]
        %s4827 = scalar_lea.vmem [#allocation5], 73
        %v4828 = vld [vmem:[%s4827] ss:$3 sm:$0xff]
        %s4829 = scalar_lea.vmem [#allocation5], 97
        %v4830 = vld [vmem:[%s4829] ss:$3 sm:$0xff]
        %s4831 = scalar_lea.vmem [#allocation5], 121
        %v4832 = vld [vmem:[%s4831] ss:$3 sm:$0xff]
        %s4833 = scalar_lea.vmem [#allocation5], 145
        %v4834 = vld [vmem:[%s4833] ss:$3 sm:$0xff]
        %s4835 = scalar_lea.vmem [#allocation5], 169
        %v4836 = vld [vmem:[%s4835] ss:$3 sm:$0xff]
        %v4837 = vmax.f32 %v4806, %v4822
        %v4838 = vmax.f32 %v4808, %v4824
        %v4839 = vmax.f32 %v4810, %v4826
        %v4840 = vmax.f32 %v4812, %v4828
        %v4841 = vmax.f32 %v4814, %v4830
        %v4842 = vmax.f32 %v4816, %v4832
        %v4843 = vmax.f32 %v4818, %v4834
        %v4844 = vmax.f32 %v4820, %v4836
        %s4845 = scalar_lea.vmem [#allocation5], 2
        %v4846 = vld [vmem:[%s4845] ss:$3 sm:$0xff]
        %s4847 = scalar_lea.vmem [#allocation5], 26
        %v4848 = vld [vmem:[%s4847] ss:$3 sm:$0xff]
        %s4849 = scalar_lea.vmem [#allocation5], 50
        %v4850 = vld [vmem:[%s4849] ss:$3 sm:$0xff]
        %s4851 = scalar_lea.vmem [#allocation5], 74
        %v4852 = vld [vmem:[%s4851] ss:$3 sm:$0xff]
        %s4853 = scalar_lea.vmem [#allocation5], 98
        %v4854 = vld [vmem:[%s4853] ss:$3 sm:$0xff]
        %s4855 = scalar_lea.vmem [#allocation5], 122
        %v4856 = vld [vmem:[%s4855] ss:$3 sm:$0xff]
        %s4857 = scalar_lea.vmem [#allocation5], 146
        %v4858 = vld [vmem:[%s4857] ss:$3 sm:$0xff]
        %s4859 = scalar_lea.vmem [#allocation5], 170
        %v4860 = vld [vmem:[%s4859] ss:$3 sm:$0xff]
        %v4861 = vmax.f32 %v4837, %v4846
        %v4862 = vmax.f32 %v4838, %v4848
        %v4863 = vmax.f32 %v4839, %v4850
        %v4864 = vmax.f32 %v4840, %v4852
        %v4865 = vmax.f32 %v4841, %v4854
        %v4866 = vmax.f32 %v4842, %v4856
        %v4867 = vmax.f32 %v4843, %v4858
        %v4868 = vmax.f32 %v4844, %v4860
        %4869 = vst.msk [vmem:[#allocation6] sm:$0xff] %vm4332, 0.0
        %4870 = vst.msk [vmem:[#allocation6 + $0x8] sm:$0xff] %vm4332, 0.0
        %4871 = vst.msk [vmem:[#allocation6 + $0x10] sm:$0xff] %vm4332, 0.0
        %4872 = vst.msk [vmem:[#allocation6 + $0x18] sm:$0xff] %vm4332, 0.0
        %4873 = vst.msk [vmem:[#allocation6 + $0x20] sm:$0xff] %vm4332, 0.0
        %4874 = vst.msk [vmem:[#allocation6 + $0x28] sm:$0xff] %vm4332, 0.0
        %4875 = vst.msk [vmem:[#allocation6 + $0x30] sm:$0xff] %vm4332, 0.0
        %4876 = vst.msk [vmem:[#allocation6 + $0x38] sm:$0xff] %vm4332, 0.0
        %4877 = vst.msk [vmem:[#allocation6 + $0x40] sm:$0xff] %vm4332, 0.0
        %4878 = vst.msk [vmem:[#allocation6 + $0x4] sm:$0xff] %vm4332, %v4861
        %4879 = vst.msk [vmem:[#allocation6 + $0xc] sm:$0xff] %vm4332, %v4862
        %4880 = vst.msk [vmem:[#allocation6 + $0x14] sm:$0xff] %vm4332, %v4863
        %4881 = vst.msk [vmem:[#allocation6 + $0x1c] sm:$0xff] %vm4332, %v4864
        %4882 = vst.msk [vmem:[#allocation6 + $0x24] sm:$0xff] %vm4332, %v4865
        %4883 = vst.msk [vmem:[#allocation6 + $0x2c] sm:$0xff] %vm4332, %v4866
        %4884 = vst.msk [vmem:[#allocation6 + $0x34] sm:$0xff] %vm4332, %v4867
        %4885 = vst.msk [vmem:[#allocation6 + $0x3c] sm:$0xff] %vm4332, %v4868
        %v4886 = vld [vmem:[#allocation6] sm:$0xff]
        %v4887 = vld [vmem:[#allocation6 + $0x8] sm:$0xff]
        %v4888 = vld [vmem:[#allocation6 + $0x10] sm:$0xff]
        %v4889 = vld [vmem:[#allocation6 + $0x18] sm:$0xff]
        %v4890 = vld [vmem:[#allocation6 + $0x20] sm:$0xff]
        %v4891 = vld [vmem:[#allocation6 + $0x28] sm:$0xff]
        %v4892 = vld [vmem:[#allocation6 + $0x30] sm:$0xff]
        %v4893 = vld [vmem:[#allocation6 + $0x38] sm:$0xff]
        %v4894 = vld [vmem:[#allocation6 + $0x40] sm:$0x1]
        %v4895 = vld [vmem:[#allocation6 + $0x1] sm:$0xff]
        %v4896 = vld [vmem:[#allocation6 + $0x9] sm:$0xff]
        %v4897 = vld [vmem:[#allocation6 + $0x11] sm:$0xff]
        %v4898 = vld [vmem:[#allocation6 + $0x19] sm:$0xff]
        %v4899 = vld [vmem:[#allocation6 + $0x21] sm:$0xff]
        %v4900 = vld [vmem:[#allocation6 + $0x29] sm:$0xff]
        %v4901 = vld [vmem:[#allocation6 + $0x31] sm:$0xff]
        %v4902 = vld [vmem:[#allocation6 + $0x39] sm:$0xff]
        %v4903 = vld [vmem:[#allocation6 + $0x41] sm:$0x1]
        %v4904 = vld [vmem:[#allocation6 + $0x2] sm:$0xff]
        %v4905 = vld [vmem:[#allocation6 + $0xa] sm:$0xff]
        %v4906 = vld [vmem:[#allocation6 + $0x12] sm:$0xff]
        %v4907 = vld [vmem:[#allocation6 + $0x1a] sm:$0xff]
        %v4908 = vld [vmem:[#allocation6 + $0x22] sm:$0xff]
        %v4909 = vld [vmem:[#allocation6 + $0x2a] sm:$0xff]
        %v4910 = vld [vmem:[#allocation6 + $0x32] sm:$0xff]
        %v4911 = vld [vmem:[#allocation6 + $0x3a] sm:$0xff]
        %v4912 = vld [vmem:[#allocation6 + $0x42] sm:$0x1]
        %v4913 = vld [vmem:[#allocation6 + $0x3] sm:$0xff]
        %v4914 = vld [vmem:[#allocation6 + $0xb] sm:$0xff]
        %v4915 = vld [vmem:[#allocation6 + $0x13] sm:$0xff]
        %v4916 = vld [vmem:[#allocation6 + $0x1b] sm:$0xff]
        %v4917 = vld [vmem:[#allocation6 + $0x23] sm:$0xff]
        %v4918 = vld [vmem:[#allocation6 + $0x2b] sm:$0xff]
        %v4919 = vld [vmem:[#allocation6 + $0x33] sm:$0xff]
        %v4920 = vld [vmem:[#allocation6 + $0x3b] sm:$0xff]
        %v4921 = vld [vmem:[#allocation6 + $0x43] sm:$0x1]
        %v4922 = vld [vmem:[#allocation6 + $0x4] sm:$0xff]
        %v4923 = vld [vmem:[#allocation6 + $0xc] sm:$0xff]
        %v4924 = vld [vmem:[#allocation6 + $0x14] sm:$0xff]
        %v4925 = vld [vmem:[#allocation6 + $0x1c] sm:$0xff]
        %v4926 = vld [vmem:[#allocation6 + $0x24] sm:$0xff]
        %v4927 = vld [vmem:[#allocation6 + $0x2c] sm:$0xff]
        %v4928 = vld [vmem:[#allocation6 + $0x34] sm:$0xff]
        %v4929 = vld [vmem:[#allocation6 + $0x3c] sm:$0xff]
        %v4930 = vld [vmem:[#allocation6 + $0x44] sm:$0x1]
        %v4931 = vld [vmem:[#allocation6 + $0x5] sm:$0xff]
        %v4932 = vld [vmem:[#allocation6 + $0xd] sm:$0xff]
        %v4933 = vld [vmem:[#allocation6 + $0x15] sm:$0xff]
        %v4934 = vld [vmem:[#allocation6 + $0x1d] sm:$0xff]
        %v4935 = vld [vmem:[#allocation6 + $0x25] sm:$0xff]
        %v4936 = vld [vmem:[#allocation6 + $0x2d] sm:$0xff]
        %v4937 = vld [vmem:[#allocation6 + $0x35] sm:$0xff]
        %v4938 = vld [vmem:[#allocation6 + $0x3d] sm:$0xff]
        %v4939 = vld [vmem:[#allocation6 + $0x45] sm:$0x1]
        %v4940 = vld [vmem:[#allocation6 + $0x6] sm:$0xff]
        %v4941 = vld [vmem:[#allocation6 + $0xe] sm:$0xff]
        %v4942 = vld [vmem:[#allocation6 + $0x16] sm:$0xff]
        %v4943 = vld [vmem:[#allocation6 + $0x1e] sm:$0xff]
        %v4944 = vld [vmem:[#allocation6 + $0x26] sm:$0xff]
        %v4945 = vld [vmem:[#allocation6 + $0x2e] sm:$0xff]
        %v4946 = vld [vmem:[#allocation6 + $0x36] sm:$0xff]
        %v4947 = vld [vmem:[#allocation6 + $0x3e] sm:$0xff]
        %v4948 = vld [vmem:[#allocation6 + $0x46] sm:$0x1]
        %v4949 = vld [vmem:[#allocation6 + $0x7] sm:$0xff]
        %v4950 = vld [vmem:[#allocation6 + $0xf] sm:$0xff]
        %v4951 = vld [vmem:[#allocation6 + $0x17] sm:$0xff]
        %v4952 = vld [vmem:[#allocation6 + $0x1f] sm:$0xff]
        %v4953 = vld [vmem:[#allocation6 + $0x27] sm:$0xff]
        %v4954 = vld [vmem:[#allocation6 + $0x2f] sm:$0xff]
        %v4955 = vld [vmem:[#allocation6 + $0x37] sm:$0xff]
        %v4956 = vld [vmem:[#allocation6 + $0x3f] sm:$0xff]
        %v4957 = vld [vmem:[#allocation6 + $0x47] sm:$0x1]
        %4967 = vrot.lane.b32.xlu0 %v4895, 64
        %v4968 = vpop.permute.xlu0 %4967
        %4969 = vrot.lane.b32.xlu0 %v4896, 64
        %v4970 = vpop.permute.xlu0 %4969
        %4971 = vrot.lane.b32.xlu0 %v4897, 64
        %v4972 = vpop.permute.xlu0 %4971
        %4973 = vrot.lane.b32.xlu0 %v4898, 64
        %v4974 = vpop.permute.xlu0 %4973
        %4975 = vrot.lane.b32.xlu0 %v4899, 64
        %v4976 = vpop.permute.xlu0 %4975
        %4977 = vrot.lane.b32.xlu0 %v4900, 64
        %v4978 = vpop.permute.xlu0 %4977
        %4979 = vrot.lane.b32.xlu0 %v4901, 64
        %v4980 = vpop.permute.xlu0 %4979
        %4981 = vrot.lane.b32.xlu0 %v4902, 64
        %v4982 = vpop.permute.xlu0 %4981
        %4983 = vrot.lane.b32.xlu0 %v4903, 64
        %v4984 = vpop.permute.xlu0 %4983
        %5003 = vrot.lane.b32.xlu0 %v4913, 64
        %v5004 = vpop.permute.xlu0 %5003
        %5005 = vrot.lane.b32.xlu0 %v4914, 64
        %v5006 = vpop.permute.xlu0 %5005
        %5007 = vrot.lane.b32.xlu0 %v4915, 64
        %v5008 = vpop.permute.xlu0 %5007
        %5009 = vrot.lane.b32.xlu0 %v4916, 64
        %v5010 = vpop.permute.xlu0 %5009
        %5011 = vrot.lane.b32.xlu0 %v4917, 64
        %v5012 = vpop.permute.xlu0 %5011
        %5013 = vrot.lane.b32.xlu0 %v4918, 64
        %v5014 = vpop.permute.xlu0 %5013
        %5015 = vrot.lane.b32.xlu0 %v4919, 64
        %v5016 = vpop.permute.xlu0 %5015
        %5017 = vrot.lane.b32.xlu0 %v4920, 64
        %v5018 = vpop.permute.xlu0 %5017
        %5019 = vrot.lane.b32.xlu0 %v4921, 64
        %v5020 = vpop.permute.xlu0 %5019
        %5039 = vrot.lane.b32.xlu0 %v4931, 64
        %v5040 = vpop.permute.xlu0 %5039
        %5041 = vrot.lane.b32.xlu0 %v4932, 64
        %v5042 = vpop.permute.xlu0 %5041
        %5043 = vrot.lane.b32.xlu0 %v4933, 64
        %v5044 = vpop.permute.xlu0 %5043
        %5045 = vrot.lane.b32.xlu0 %v4934, 64
        %v5046 = vpop.permute.xlu0 %5045
        %5047 = vrot.lane.b32.xlu0 %v4935, 64
        %v5048 = vpop.permute.xlu0 %5047
        %5049 = vrot.lane.b32.xlu0 %v4936, 64
        %v5050 = vpop.permute.xlu0 %5049
        %5051 = vrot.lane.b32.xlu0 %v4937, 64
        %v5052 = vpop.permute.xlu0 %5051
        %5053 = vrot.lane.b32.xlu0 %v4938, 64
        %v5054 = vpop.permute.xlu0 %5053
        %5055 = vrot.lane.b32.xlu0 %v4939, 64
        %v5056 = vpop.permute.xlu0 %5055
        %5075 = vrot.lane.b32.xlu0 %v4949, 64
        %v5076 = vpop.permute.xlu0 %5075
        %5077 = vrot.lane.b32.xlu0 %v4950, 64
        %v5078 = vpop.permute.xlu0 %5077
        %5079 = vrot.lane.b32.xlu0 %v4951, 64
        %v5080 = vpop.permute.xlu0 %5079
        %5081 = vrot.lane.b32.xlu0 %v4952, 64
        %v5082 = vpop.permute.xlu0 %5081
        %5083 = vrot.lane.b32.xlu0 %v4953, 64
        %v5084 = vpop.permute.xlu0 %5083
        %5085 = vrot.lane.b32.xlu0 %v4954, 64
        %v5086 = vpop.permute.xlu0 %5085
        %5087 = vrot.lane.b32.xlu0 %v4955, 64
        %v5088 = vpop.permute.xlu0 %5087
        %5089 = vrot.lane.b32.xlu0 %v4956, 64
        %v5090 = vpop.permute.xlu0 %5089
        %5091 = vrot.lane.b32.xlu0 %v4957, 64
        %v5092 = vpop.permute.xlu0 %5091
        %v5102 = vsel %vm4332, %v4886, %v4968
        %v5103 = vsel %vm4332, %v4887, %v4970
        %v5104 = vsel %vm4332, %v4888, %v4972
        %v5105 = vsel %vm4332, %v4889, %v4974
        %v5106 = vsel %vm4332, %v4890, %v4976
        %v5107 = vsel %vm4332, %v4891, %v4978
        %v5108 = vsel %vm4332, %v4892, %v4980
        %v5109 = vsel %vm4332, %v4893, %v4982
        %v5110 = vsel %vm4332, %v4894, %v4984
        %v5111 = vsel %vm4332, %v4904, %v5004
        %v5112 = vsel %vm4332, %v4905, %v5006
        %v5113 = vsel %vm4332, %v4906, %v5008
        %v5114 = vsel %vm4332, %v4907, %v5010
        %v5115 = vsel %vm4332, %v4908, %v5012
        %v5116 = vsel %vm4332, %v4909, %v5014
        %v5117 = vsel %vm4332, %v4910, %v5016
        %v5118 = vsel %vm4332, %v4911, %v5018
        %v5119 = vsel %vm4332, %v4912, %v5020
        %v5120 = vsel %vm4332, %v4922, %v5040
        %v5121 = vsel %vm4332, %v4923, %v5042
        %v5122 = vsel %vm4332, %v4924, %v5044
        %v5123 = vsel %vm4332, %v4925, %v5046
        %v5124 = vsel %vm4332, %v4926, %v5048
        %v5125 = vsel %vm4332, %v4927, %v5050
        %v5126 = vsel %vm4332, %v4928, %v5052
        %v5127 = vsel %vm4332, %v4929, %v5054
        %v5128 = vsel %vm4332, %v4930, %v5056
        %v5129 = vsel %vm4332, %v4940, %v5076
        %v5130 = vsel %vm4332, %v4941, %v5078
        %v5131 = vsel %vm4332, %v4942, %v5080
        %v5132 = vsel %vm4332, %v4943, %v5082
        %v5133 = vsel %vm4332, %v4944, %v5084
        %v5134 = vsel %vm4332, %v4945, %v5086
        %v5135 = vsel %vm4332, %v4946, %v5088
        %v5136 = vsel %vm4332, %v4947, %v5090
        %v5137 = vsel %vm4332, %v4948, %v5092
        %v5138 = vld [vmem:[%s7] sm:$0xff]
        %v5139 = vld [vmem:[%s7 + $0x8] sm:$0xff]
        %v5140 = vld [vmem:[%s7 + $0x10] sm:$0xff]
        %v5141 = vld [vmem:[%s7 + $0x18] sm:$0xff]
        %v5142 = vld [vmem:[%s7 + $0x20] sm:$0xff]
        %v5143 = vld [vmem:[%s7 + $0x28] sm:$0xff]
        %v5144 = vld [vmem:[%s7 + $0x30] sm:$0xff]
        %v5145 = vld [vmem:[%s7 + $0x38] sm:$0xff]
        %v5146 = vld [vmem:[%s7 + $0x40] sm:$0xff]
        %v5147 = vld [vmem:[%s7 + $0x48] sm:$0xff]
        %v5148 = vld [vmem:[%s7 + $0x50] sm:$0xff]
        %v5149 = vld [vmem:[%s7 + $0x58] sm:$0xff]
        %v5150 = vld [vmem:[%s7 + $0x60] sm:$0xff]
        %v5151 = vld [vmem:[%s7 + $0x68] sm:$0xff]
        %v5152 = vld [vmem:[%s7 + $0x70] sm:$0xff]
        %v5153 = vld [vmem:[%s7 + $0x78] sm:$0xff]
        %v5154 = vld [vmem:[%s7 + $0x80] sm:$0xff]
        %v5155 = vld [vmem:[%s7 + $0x88] sm:$0xff]
        %v5156 = vld [vmem:[%s7 + $0x90] sm:$0xff]
        %v5157 = vld [vmem:[%s7 + $0x98] sm:$0xff]
        %v5158 = vld [vmem:[%s7 + $0xa0] sm:$0xff]
        %v5159 = vld [vmem:[%s7 + $0xa8] sm:$0xff]
        %v5160 = vld [vmem:[%s7 + $0xb0] sm:$0xff]
        %v5161 = vld [vmem:[%s7 + $0xb8] sm:$0xff]
        %v5162 = vld [vmem:[%s7 + $0xc0] sm:$0xff]
        %v5163 = vld [vmem:[%s7 + $0xc8] sm:$0xff]
        %v5164 = vld [vmem:[%s7 + $0xd0] sm:$0xff]
        %v5165 = vld [vmem:[%s7 + $0xd8] sm:$0xff]
        %v5166 = vld [vmem:[%s7 + $0xe0] sm:$0xff]
        %v5167 = vld [vmem:[%s7 + $0xe8] sm:$0xff]
        %v5168 = vld [vmem:[%s7 + $0xf0] sm:$0xff]
        %v5169 = vld [vmem:[%s7 + $0xf8] sm:$0xff]
        %v5170 = vld [vmem:[%s7 + $0x100] sm:$0xff]
        %v5171 = vld [vmem:[%s7 + $0x108] sm:$0xff]
        %v5172 = vld [vmem:[%s7 + $0x110] sm:$0xff]
        %v5173 = vld [vmem:[%s7 + $0x118] sm:$0xff]
        %v5174 = vld [vmem:[%s7 + $0x120] sm:$0xff]
        %v5175 = vld [vmem:[%s7 + $0x128] sm:$0xff]
        %v5176 = vld [vmem:[%s7 + $0x130] sm:$0xff]
        %v5177 = vld [vmem:[%s7 + $0x138] sm:$0xff]
        %v5178 = vld [vmem:[%s7 + $0x140] sm:$0xff]
        %v5179 = vld [vmem:[%s7 + $0x148] sm:$0xff]
        %v5180 = vld [vmem:[%s7 + $0x150] sm:$0xff]
        %v5181 = vld [vmem:[%s7 + $0x158] sm:$0xff]
        %v5182 = vld [vmem:[%s7 + $0x160] sm:$0xff]
        %v5183 = vld [vmem:[%s7 + $0x168] sm:$0xff]
        %v5184 = vld [vmem:[%s7 + $0x170] sm:$0xff]
        %v5185 = vld [vmem:[%s7 + $0x178] sm:$0xff]
        %v5186 = vld [vmem:[%s7 + $0x180] sm:$0xff]
        %v5187 = vld [vmem:[%s7 + $0x188] sm:$0xff]
        %v5188 = vld [vmem:[%s7 + $0x190] sm:$0xff]
        %v5189 = vld [vmem:[%s7 + $0x198] sm:$0xff]
        %v5190 = vld [vmem:[%s7 + $0x1a0] sm:$0xff]
        %v5191 = vld [vmem:[%s7 + $0x1a8] sm:$0xff]
        %v5192 = vld [vmem:[%s7 + $0x1b0] sm:$0xff]
        %v5193 = vld [vmem:[%s7 + $0x1b8] sm:$0xff]
        %v5194 = vld [vmem:[%s7 + $0x1c0] sm:$0xff]
        %v5195 = vld [vmem:[%s7 + $0x1c8] sm:$0xff]
        %v5196 = vld [vmem:[%s7 + $0x1d0] sm:$0xff]
        %v5197 = vld [vmem:[%s7 + $0x1d8] sm:$0xff]
        %v5198 = vld [vmem:[%s7 + $0x1e0] sm:$0xff]
        %v5199 = vld [vmem:[%s7 + $0x1e8] sm:$0xff]
        %v5200 = vld [vmem:[%s7 + $0x1f0] sm:$0xff]
        %v5201 = vld [vmem:[%s7 + $0x1f8] sm:$0xff]
        %5202 = vmatprep.subr.mxu0 0.0
        %5203 = vmatpush1.msra.mxu0 %v5138
        %5204 = vmatprep.subr.mxu0 0.0
        %5205 = vmatpush1.msra.mxu0 %v5139
        %5206 = vmatprep.subr.mxu0 0.0
        %5207 = vmatpush1.msra.mxu0 %v5140
        %5208 = vmatprep.subr.mxu0 0.0
        %5209 = vmatpush1.msra.mxu0 %v5141
        %5210 = vmatprep.subr.mxu0 0.0
        %5211 = vmatpush1.msra.mxu0 %v5142
        %5212 = vmatprep.subr.mxu0 0.0
        %5213 = vmatpush1.msra.mxu0 %v5143
        %5214 = vmatprep.subr.mxu0 0.0
        %5215 = vmatpush1.msra.mxu0 %v5144
        %5216 = vmatprep.subr.mxu0 0.0
        %5217 = vmatpush1.msra.mxu0 %v5145
        %5218 = vmatprep.subr.mxu0 0.0
        %5219 = vmatpush1.msra.mxu0 %v5146
        %5220 = vmatprep.subr.mxu0 0.0
        %5221 = vmatpush1.msra.mxu0 %v5147
        %5222 = vmatprep.subr.mxu0 0.0
        %5223 = vmatpush1.msra.mxu0 %v5148
        %5224 = vmatprep.subr.mxu0 0.0
        %5225 = vmatpush1.msra.mxu0 %v5149
        %5226 = vmatprep.subr.mxu0 0.0
        %5227 = vmatpush1.msra.mxu0 %v5150
        %5228 = vmatprep.subr.mxu0 0.0
        %5229 = vmatpush1.msra.mxu0 %v5151
        %5230 = vmatprep.subr.mxu0 0.0
        %5231 = vmatpush1.msra.mxu0 %v5152
        %5232 = vmatprep.subr.mxu0 0.0
        %5233 = vmatpush1.msra.mxu0 %v5153
        %5234 = vmatprep.subr.mxu0 0.0
        %5235 = vmatpush1.msra.mxu0 %v5154
        %5236 = vmatprep.subr.mxu0 0.0
        %5237 = vmatpush1.msra.mxu0 %v5155
        %5238 = vmatprep.subr.mxu0 0.0
        %5239 = vmatpush1.msra.mxu0 %v5156
        %5240 = vmatprep.subr.mxu0 0.0
        %5241 = vmatpush1.msra.mxu0 %v5157
        %5242 = vmatprep.subr.mxu0 0.0
        %5243 = vmatpush1.msra.mxu0 %v5158
        %5244 = vmatprep.subr.mxu0 0.0
        %5245 = vmatpush1.msra.mxu0 %v5159
        %5246 = vmatprep.subr.mxu0 0.0
        %5247 = vmatpush1.msra.mxu0 %v5160
        %5248 = vmatprep.subr.mxu0 0.0
        %5249 = vmatpush1.msra.mxu0 %v5161
        %5250 = vmatprep.subr.mxu0 0.0
        %5251 = vmatpush1.msra.mxu0 %v5162
        %5252 = vmatprep.subr.mxu0 0.0
        %5253 = vmatpush1.msra.mxu0 %v5163
        %5254 = vmatprep.subr.mxu0 0.0
        %5255 = vmatpush1.msra.mxu0 %v5164
        %5256 = vmatprep.subr.mxu0 0.0
        %5257 = vmatpush1.msra.mxu0 %v5165
        %5258 = vmatprep.subr.mxu0 0.0
        %5259 = vmatpush1.msra.mxu0 %v5166
        %5260 = vmatprep.subr.mxu0 0.0
        %5261 = vmatpush1.msra.mxu0 %v5167
        %5262 = vmatprep.subr.mxu0 0.0
        %5263 = vmatpush1.msra.mxu0 %v5168
        %5264 = vmatprep.subr.mxu0 0.0
        %5265 = vmatpush1.msra.mxu0 %v5169
        %5266 = vmatprep.mubr.f32.mxu0 %v5111
        %5267 = vmatmul.mubr.f32.gmra.mrb[0].mxu0 %v5102
        %v5268 = vpop.f32.mrb[0].mxu0
        %v5269 = vadd.f32 0.0, %v5268
        %v5270 = vpop.f32.mrb[0].mxu0
        %5271 = vmatprep.mubr.f32.mxu0 %v5112
        %5272 = vmatmul.mubr.f32.gmra.mrb[0].mxu0 %v5103
        %v5273 = vpop.f32.mrb[0].mxu0
        %v5274 = vadd.f32 0.0, %v5273
        %v5275 = vpop.f32.mrb[0].mxu0
        %5276 = vmatprep.mubr.f32.mxu0 %v5113
        %5277 = vmatmul.mubr.f32.gmra.mrb[0].mxu0 %v5104
        %v5278 = vpop.f32.mrb[0].mxu0
        %v5279 = vadd.f32 0.0, %v5278
        %v5280 = vpop.f32.mrb[0].mxu0
        %5281 = vmatprep.mubr.f32.mxu0 %v5114
        %5282 = vmatmul.mubr.f32.gmra.mrb[0].mxu0 %v5105
        %v5283 = vpop.f32.mrb[0].mxu0
        %v5284 = vadd.f32 0.0, %v5283
        %v5285 = vpop.f32.mrb[0].mxu0
        %5286 = vmatprep.mubr.f32.mxu0 %v5115
        %5287 = vmatmul.mubr.f32.gmra.mrb[0].mxu0 %v5106
        %v5288 = vpop.f32.mrb[0].mxu0
        %v5289 = vadd.f32 0.0, %v5288
        %v5290 = vpop.f32.mrb[0].mxu0
        %5291 = vmatprep.mubr.f32.mxu0 %v5116
        %5292 = vmatmul.mubr.f32.gmra.mrb[0].mxu0 %v5107
        %v5293 = vpop.f32.mrb[0].mxu0
        %v5294 = vadd.f32 0.0, %v5293
        %v5295 = vpop.f32.mrb[0].mxu0
        %5296 = vmatprep.mubr.f32.mxu0 %v5117
        %5297 = vmatmul.mubr.f32.gmra.mrb[0].mxu0 %v5108
        %v5298 = vpop.f32.mrb[0].mxu0
        %v5299 = vadd.f32 0.0, %v5298
        %v5300 = vpop.f32.mrb[0].mxu0
        %5301 = vmatprep.mubr.f32.mxu0 %v5118
        %5302 = vmatmul.mubr.f32.gmra.mrb[0].mxu0 %v5109
        %v5303 = vpop.f32.mrb[0].mxu0
        %v5304 = vadd.f32 0.0, %v5303
        %v5305 = vpop.f32.mrb[0].mxu0
        %5306 = vmatprep.mubr.f32.mxu0 %v5119
        %5307 = vmatmul.mubr.f32.gmra.mrb[0].mxu0 %v5110
        %v5308 = vpop.f32.mrb[0].mxu0
        %v5309 = vadd.f32 0.0, %v5308
        %v5310 = vpop.f32.mrb[0].mxu0
        %5311 = vdwg.mxu0
        %5312 = vmatprep.subr.mxu0 0.0
        %5313 = vmatpush1.msra.mxu0 %v5170
        %5314 = vmatprep.subr.mxu0 0.0
        %5315 = vmatpush1.msra.mxu0 %v5171
        %5316 = vmatprep.subr.mxu0 0.0
        %5317 = vmatpush1.msra.mxu0 %v5172
        %5318 = vmatprep.subr.mxu0 0.0
        %5319 = vmatpush1.msra.mxu0 %v5173
        %5320 = vmatprep.subr.mxu0 0.0
        %5321 = vmatpush1.msra.mxu0 %v5174
        %5322 = vmatprep.subr.mxu0 0.0
        %5323 = vmatpush1.msra.mxu0 %v5175
        %5324 = vmatprep.subr.mxu0 0.0
        %5325 = vmatpush1.msra.mxu0 %v5176
        %5326 = vmatprep.subr.mxu0 0.0
        %5327 = vmatpush1.msra.mxu0 %v5177
        %5328 = vmatprep.subr.mxu0 0.0
        %5329 = vmatpush1.msra.mxu0 %v5178
        %5330 = vmatprep.subr.mxu0 0.0
        %5331 = vmatpush1.msra.mxu0 %v5179
        %5332 = vmatprep.subr.mxu0 0.0
        %5333 = vmatpush1.msra.mxu0 %v5180
        %5334 = vmatprep.subr.mxu0 0.0
        %5335 = vmatpush1.msra.mxu0 %v5181
        %5336 = vmatprep.subr.mxu0 0.0
        %5337 = vmatpush1.msra.mxu0 %v5182
        %5338 = vmatprep.subr.mxu0 0.0
        %5339 = vmatpush1.msra.mxu0 %v5183
        %5340 = vmatprep.subr.mxu0 0.0
        %5341 = vmatpush1.msra.mxu0 %v5184
        %5342 = vmatprep.subr.mxu0 0.0
        %5343 = vmatpush1.msra.mxu0 %v5185
        %5344 = vmatprep.subr.mxu0 0.0
        %5345 = vmatpush1.msra.mxu0 %v5186
        %5346 = vmatprep.subr.mxu0 0.0
        %5347 = vmatpush1.msra.mxu0 %v5187
        %5348 = vmatprep.subr.mxu0 0.0
        %5349 = vmatpush1.msra.mxu0 %v5188
        %5350 = vmatprep.subr.mxu0 0.0
        %5351 = vmatpush1.msra.mxu0 %v5189
        %5352 = vmatprep.subr.mxu0 0.0
        %5353 = vmatpush1.msra.mxu0 %v5190
        %5354 = vmatprep.subr.mxu0 0.0
        %5355 = vmatpush1.msra.mxu0 %v5191
        %5356 = vmatprep.subr.mxu0 0.0
        %5357 = vmatpush1.msra.mxu0 %v5192
        %5358 = vmatprep.subr.mxu0 0.0
        %5359 = vmatpush1.msra.mxu0 %v5193
        %5360 = vmatprep.subr.mxu0 0.0
        %5361 = vmatpush1.msra.mxu0 %v5194
        %5362 = vmatprep.subr.mxu0 0.0
        %5363 = vmatpush1.msra.mxu0 %v5195
        %5364 = vmatprep.subr.mxu0 0.0
        %5365 = vmatpush1.msra.mxu0 %v5196
        %5366 = vmatprep.subr.mxu0 0.0
        %5367 = vmatpush1.msra.mxu0 %v5197
        %5368 = vmatprep.subr.mxu0 0.0
        %5369 = vmatpush1.msra.mxu0 %v5198
        %5370 = vmatprep.subr.mxu0 0.0
        %5371 = vmatpush1.msra.mxu0 %v5199
        %5372 = vmatprep.subr.mxu0 0.0
        %5373 = vmatpush1.msra.mxu0 %v5200
        %5374 = vmatprep.subr.mxu0 0.0
        %5375 = vmatpush1.msra.mxu0 %v5201
        %5376 = vmatprep.mubr.f32.mxu0 %v5129
        %5377 = vmatmul.mubr.f32.gmra.mrb[0].mxu0 %v5120
        %v5378 = vpop.f32.mrb[0].mxu0
        %v5379 = vadd.f32 %v5269, %v5378
        %v5380 = vpop.f32.mrb[0].mxu0
        %5381 = vmatprep.mubr.f32.mxu0 %v5130
        %5382 = vmatmul.mubr.f32.gmra.mrb[0].mxu0 %v5121
        %v5383 = vpop.f32.mrb[0].mxu0
        %v5384 = vadd.f32 %v5274, %v5383
        %v5385 = vpop.f32.mrb[0].mxu0
        %5386 = vmatprep.mubr.f32.mxu0 %v5131
        %5387 = vmatmul.mubr.f32.gmra.mrb[0].mxu0 %v5122
        %v5388 = vpop.f32.mrb[0].mxu0
        %v5389 = vadd.f32 %v5279, %v5388
        %v5390 = vpop.f32.mrb[0].mxu0
        %5391 = vmatprep.mubr.f32.mxu0 %v5132
        %5392 = vmatmul.mubr.f32.gmra.mrb[0].mxu0 %v5123
        %v5393 = vpop.f32.mrb[0].mxu0
        %v5394 = vadd.f32 %v5284, %v5393
        %v5395 = vpop.f32.mrb[0].mxu0
        %5396 = vmatprep.mubr.f32.mxu0 %v5133
        %5397 = vmatmul.mubr.f32.gmra.mrb[0].mxu0 %v5124
        %v5398 = vpop.f32.mrb[0].mxu0
        %v5399 = vadd.f32 %v5289, %v5398
        %v5400 = vpop.f32.mrb[0].mxu0
        %5401 = vmatprep.mubr.f32.mxu0 %v5134
        %5402 = vmatmul.mubr.f32.gmra.mrb[0].mxu0 %v5125
        %v5403 = vpop.f32.mrb[0].mxu0
        %v5404 = vadd.f32 %v5294, %v5403
        %v5405 = vpop.f32.mrb[0].mxu0
        %5406 = vmatprep.mubr.f32.mxu0 %v5135
        %5407 = vmatmul.mubr.f32.gmra.mrb[0].mxu0 %v5126
        %v5408 = vpop.f32.mrb[0].mxu0
        %v5409 = vadd.f32 %v5299, %v5408
        %v5410 = vpop.f32.mrb[0].mxu0
        %5411 = vmatprep.mubr.f32.mxu0 %v5136
        %5412 = vmatmul.mubr.f32.gmra.mrb[0].mxu0 %v5127
        %v5413 = vpop.f32.mrb[0].mxu0
        %v5414 = vadd.f32 %v5304, %v5413
        %v5415 = vpop.f32.mrb[0].mxu0
        %5416 = vmatprep.mubr.f32.mxu0 %v5137
        %5417 = vmatmul.mubr.f32.gmra.mrb[0].mxu0 %v5128
        %v5418 = vpop.f32.mrb[0].mxu0
        %v5419 = vadd.f32 %v5309, %v5418
        %v5420 = vpop.f32.mrb[0].mxu0
        %5421 = vdwg.mxu0
        %v5422 = vld [vmem:[%s8] sm:$0x1]
        %v5424 = vlaneseq
        %v5425 = vshrl.u32 %v5424, 7
        %v5426 = vsub.s32 0, %v5425
        %v5427 = vrot.slane %v5422, %v5426
        %v5429 = vmul.f32 %v5379, %v5427
        %v5430 = vmul.f32 %v5384, %v5427
        %v5431 = vmul.f32 %v5389, %v5427
        %v5432 = vmul.f32 %v5394, %v5427
        %v5433 = vmul.f32 %v5399, %v5427
        %v5434 = vmul.f32 %v5404, %v5427
        %v5435 = vmul.f32 %v5409, %v5427
        %v5436 = vmul.f32 %v5414, %v5427
        %v5437 = vmul.f32 %v5419, %v5427
        %v5438 = vld [vmem:[%s9] sm:$0x1]
        %v5440 = vlaneseq
        %v5441 = vshrl.u32 %v5440, 7
        %v5442 = vsub.s32 0, %v5441
        %v5443 = vrot.slane %v5438, %v5442
        %v5445 = vadd.f32 %v5429, %v5443
        %v5446 = vadd.f32 %v5430, %v5443
        %v5447 = vadd.f32 %v5431, %v5443
        %v5448 = vadd.f32 %v5432, %v5443
        %v5449 = vadd.f32 %v5433, %v5443
        %v5450 = vadd.f32 %v5434, %v5443
        %v5451 = vadd.f32 %v5435, %v5443
        %v5452 = vadd.f32 %v5436, %v5443
        %v5453 = vadd.f32 %v5437, %v5443
        %v5454 = vmax.f32 %v5445, 0.0
        %v5455 = vmax.f32 %v5446, 0.0
        %v5456 = vmax.f32 %v5447, 0.0
        %v5457 = vmax.f32 %v5448, 0.0
        %v5458 = vmax.f32 %v5449, 0.0
        %v5459 = vmax.f32 %v5450, 0.0
        %v5460 = vmax.f32 %v5451, 0.0
        %v5461 = vmax.f32 %v5452, 0.0
        %v5462 = vmax.f32 %v5453, 0.0
        %5463 = vst [vmem:[#allocation7] sm:$0xff] -inf
        %5464 = vst [vmem:[#allocation7 + $0x8] sm:$0xff] -inf
        %5465 = vst [vmem:[#allocation7 + $0x10] sm:$0xff] -inf
        %5466 = vst [vmem:[#allocation7 + $0x18] sm:$0xff] -inf
        %5467 = vst [vmem:[#allocation7 + $0x20] sm:$0xff] -inf
        %5468 = vst [vmem:[#allocation7 + $0x28] sm:$0xff] -inf
        %5469 = vst [vmem:[#allocation7 + $0x30] sm:$0xff] -inf
        %5470 = vst [vmem:[#allocation7 + $0x38] sm:$0xff] -inf
        %5471 = vst [vmem:[#allocation7 + $0x40] sm:$0xff] -inf
        %5472 = vst [vmem:[#allocation7 + $0x1] sm:$0xff] %v5454
        %5473 = vst [vmem:[#allocation7 + $0x9] sm:$0xff] %v5455
        %5474 = vst [vmem:[#allocation7 + $0x11] sm:$0xff] %v5456
        %5475 = vst [vmem:[#allocation7 + $0x19] sm:$0xff] %v5457
        %5476 = vst [vmem:[#allocation7 + $0x21] sm:$0xff] %v5458
        %5477 = vst [vmem:[#allocation7 + $0x29] sm:$0xff] %v5459
        %5478 = vst [vmem:[#allocation7 + $0x31] sm:$0xff] %v5460
        %5479 = vst [vmem:[#allocation7 + $0x39] sm:$0xff] %v5461
        %5480 = vst [vmem:[#allocation7 + $0x41] sm:$0x1] %v5462
        %v5481 = vld [vmem:[#allocation7] ss:$3 sm:$0xff]
        %s5482 = scalar_lea.vmem [#allocation7], 24
        %v5483 = vld [vmem:[%s5482] ss:$3 sm:$0xff]
        %s5484 = scalar_lea.vmem [#allocation7], 48
        %v5485 = vld [vmem:[%s5484] ss:$3 sm:$0x3f]
        %s5486 = scalar_lea.vmem [#allocation7], 1
        %v5487 = vld [vmem:[%s5486] ss:$3 sm:$0xff]
        %s5488 = scalar_lea.vmem [#allocation7], 25
        %v5489 = vld [vmem:[%s5488] ss:$3 sm:$0xff]
        %s5490 = scalar_lea.vmem [#allocation7], 49
        %v5491 = vld [vmem:[%s5490] ss:$3 sm:$0x3f]
        %v5492 = vmax.f32 %v5481, %v5487
        %v5493 = vmax.f32 %v5483, %v5489
        %v5494 = vmax.f32 %v5485, %v5491
        %s5495 = scalar_lea.vmem [#allocation7], 2
        %v5496 = vld [vmem:[%s5495] ss:$3 sm:$0xff]
        %s5497 = scalar_lea.vmem [#allocation7], 26
        %v5498 = vld [vmem:[%s5497] ss:$3 sm:$0xff]
        %s5499 = scalar_lea.vmem [#allocation7], 50
        %v5500 = vld [vmem:[%s5499] ss:$3 sm:$0x3f]
        %v5501 = vmax.f32 %v5492, %v5496
        %v5502 = vmax.f32 %v5493, %v5498
        %v5503 = vmax.f32 %v5494, %v5500
        %5504 = vst [vmem:[%s450] sm:$0xff] %v5501
        %5505 = vst [vmem:[%s450 + $0x8] sm:$0xff] %v5502
        %5506 = vst [vmem:[%s450 + $0x10] sm:$0x3f] %v5503
        %v5507 = vld [vmem:[%s10] sm:$0xff]
        %v5508 = vld [vmem:[%s10 + $0x8] sm:$0xff]
        %v5509 = vld [vmem:[%s10 + $0x10] sm:$0xff]
        %v5510 = vld [vmem:[%s10 + $0x18] sm:$0xff]
        %v5511 = vld [vmem:[%s10 + $0x20] sm:$0xff]
        %v5512 = vld [vmem:[%s10 + $0x28] sm:$0xff]
        %v5513 = vld [vmem:[%s10 + $0x30] sm:$0xff]
        %v5514 = vld [vmem:[%s10 + $0x38] sm:$0xff]
        %v5515 = vld [vmem:[%s10 + $0x40] sm:$0xff]
        %v5516 = vld [vmem:[%s10 + $0x48] sm:$0xff]
        %v5517 = vld [vmem:[%s10 + $0x50] sm:$0xff]
        %v5518 = vld [vmem:[%s10 + $0x58] sm:$0xff]
        %v5519 = vld [vmem:[%s10 + $0x60] sm:$0xff]
        %v5520 = vld [vmem:[%s10 + $0x68] sm:$0xff]
        %v5521 = vld [vmem:[%s10 + $0x70] sm:$0xff]
        %v5522 = vld [vmem:[%s10 + $0x78] sm:$0xff]
        %5523 = vmatprep.subr.mxu0 0.0
        %5524 = vmatpush1.msra.mxu0 %v5507
        %5525 = vmatprep.subr.mxu0 0.0
        %5526 = vmatpush1.msra.mxu0 %v5508
        %5527 = vmatprep.subr.mxu0 0.0
        %5528 = vmatpush1.msra.mxu0 %v5509
        %5529 = vmatprep.subr.mxu0 0.0
        %5530 = vmatpush1.msra.mxu0 %v5510
        %5531 = vmatprep.subr.mxu0 0.0
        %5532 = vmatpush1.msra.mxu0 %v5511
        %5533 = vmatprep.subr.mxu0 0.0
        %5534 = vmatpush1.msra.mxu0 %v5512
        %5535 = vmatprep.subr.mxu0 0.0
        %5536 = vmatpush1.msra.mxu0 %v5513
        %5537 = vmatprep.subr.mxu0 0.0
        %5538 = vmatpush1.msra.mxu0 %v5514
        %5539 = vmatprep.subr.mxu0 0.0
        %5540 = vmatpush1.msra.mxu0 %v5515
        %5541 = vmatprep.subr.mxu0 0.0
        %5542 = vmatpush1.msra.mxu0 %v5516
        %5543 = vmatprep.subr.mxu0 0.0
        %5544 = vmatpush1.msra.mxu0 %v5517
        %5545 = vmatprep.subr.mxu0 0.0
        %5546 = vmatpush1.msra.mxu0 %v5518
        %5547 = vmatprep.subr.mxu0 0.0
        %5548 = vmatpush1.msra.mxu0 %v5519
        %5549 = vmatprep.subr.mxu0 0.0
        %5550 = vmatpush1.msra.mxu0 %v5520
        %5551 = vmatprep.subr.mxu0 0.0
        %5552 = vmatpush1.msra.mxu0 %v5521
        %5553 = vmatprep.subr.mxu0 0.0
        %5554 = vmatpush1.msra.mxu0 %v5522
        %5555 = vmatprep.subr.mxu0 0.0
        %5556 = vmatpush1.msra.mxu0 0.0
        %5557 = vmatprep.subr.mxu0 0.0
        %5558 = vmatpush1.msra.mxu0 0.0
        %5559 = vmatprep.subr.mxu0 0.0
        %5560 = vmatpush1.msra.mxu0 0.0
        %5561 = vmatprep.subr.mxu0 0.0
        %5562 = vmatpush1.msra.mxu0 0.0
        %5563 = vmatprep.subr.mxu0 0.0
        %5564 = vmatpush1.msra.mxu0 0.0
        %5565 = vmatprep.subr.mxu0 0.0
        %5566 = vmatpush1.msra.mxu0 0.0
        %5567 = vmatprep.subr.mxu0 0.0
        %5568 = vmatpush1.msra.mxu0 0.0
        %5569 = vmatprep.subr.mxu0 0.0
        %5570 = vmatpush1.msra.mxu0 0.0
        %5571 = vmatprep.subr.mxu0 0.0
        %5572 = vmatpush1.msra.mxu0 0.0
        %5573 = vmatprep.subr.mxu0 0.0
        %5574 = vmatpush1.msra.mxu0 0.0
        %5575 = vmatprep.subr.mxu0 0.0
        %5576 = vmatpush1.msra.mxu0 0.0
        %5577 = vmatprep.subr.mxu0 0.0
        %5578 = vmatpush1.msra.mxu0 0.0
        %5579 = vmatprep.subr.mxu0 0.0
        %5580 = vmatpush1.msra.mxu0 0.0
        %5581 = vmatprep.subr.mxu0 0.0
        %5582 = vmatpush1.msra.mxu0 0.0
        %5583 = vmatprep.subr.mxu0 0.0
        %5584 = vmatpush1.msra.mxu0 0.0
        %5585 = vmatprep.subr.mxu0 0.0
        %5586 = vmatpush1.msra.mxu0 0.0
        %5587 = vmatprep.mubr.f32.mxu0 0.0
        %5588 = vmatmul.mubr.f32.gmra.mrb[0].mxu0 %v5501
        %v5589 = vpop.f32.mrb[0].mxu0
        %v5590 = vadd.f32 0.0, %v5589
        %v5591 = vpop.f32.mrb[0].mxu0
        %5592 = vmatprep.mubr.f32.mxu0 0.0
        %5593 = vmatmul.mubr.f32.gmra.mrb[0].mxu0 %v5502
        %v5594 = vpop.f32.mrb[0].mxu0
        %v5595 = vadd.f32 0.0, %v5594
        %v5596 = vpop.f32.mrb[0].mxu0
        %5597 = vmatprep.mubr.f32.mxu0 0.0
        %5598 = vmatmul.mubr.f32.gmra.mrb[0].mxu0 %v5503
        %v5599 = vpop.f32.mrb[0].mxu0
        %v5600 = vadd.f32 0.0, %v5599
        %v5601 = vpop.f32.mrb[0].mxu0
        %5602 = vdwg.mxu0
        %v5603 = vld [vmem:[%s11] sm:$0x1]
        %v5604 = vadd.f32 %v5603, %v5590
        %v5607 = vunpack.c.l.s4 1966171168
        %v5608 = vunpack.c.0.s8 %v5607
        %v5609 = vlaneseq
        %v5610 = vshrl.u32 %v5609, 7
        %v5611 = vsub.s32 %v5608, %v5610
        %v5612 = vrot.slane %v5590, %v5611
        %v5613 = vcombine.high %v5612, %v5612
        %v5615 = vunpack.c.l.s4 1966171168
        %v5616 = vunpack.c.0.s8 %v5615
        %v5617 = vlaneseq
        %v5618 = vshrl.u32 %v5617, 7
        %v5619 = vsub.s32 %v5616, %v5618
        %v5620 = vrot.slane %v5612, %v5619
        %v5622 = vunpack.c.l.s4 1966171168
        %v5623 = vunpack.c.0.s8 %v5622
        %v5624 = vlaneseq
        %v5625 = vshrl.u32 %v5624, 7
        %v5626 = vsub.s32 %v5623, %v5625
        %v5627 = vrot.slane %v5613, %v5626
        %5628 = vrot.lane.b32.xlu0 %v5627, 123
        %v5629 = vpop.permute.xlu0 %5628
        %v5631 = vadd.f32 %v5604, %v5629
        %v5632 = vcombine.high %v5620, %v5620
        %5633 = vrot.lane.b32.xlu0 %v5632, 118
        %v5634 = vpop.permute.xlu0 %5633
        %v5636 = vadd.f32 %v5631, %v5634
        %v5637 = vcombine.high %v5627, %v5627
        %5638 = vrot.lane.b32.xlu0 %v5637, 113
        %v5639 = vpop.permute.xlu0 %5638
        %v5641 = vadd.f32 %v5636, %v5639
        %v5642 = vcombine.high %v5590, %v5590
        %v5644 = vunpack.c.l.s4 1966171168
        %v5645 = vunpack.c.0.s8 %v5644
        %v5646 = vlaneseq
        %v5647 = vshrl.u32 %v5646, 7
        %v5648 = vsub.s32 %v5645, %v5647
        %v5649 = vrot.slane %v5642, %v5648
        %v5651 = vunpack.c.l.s4 1966171168
        %v5652 = vunpack.c.0.s8 %v5651
        %v5653 = vlaneseq
        %v5654 = vshrl.u32 %v5653, 7
        %v5655 = vsub.s32 %v5652, %v5654
        %v5656 = vrot.slane %v5649, %v5655
        %5657 = vrot.lane.b32.xlu0 %v5656, 108
        %v5658 = vpop.permute.xlu0 %5657
        %v5660 = vadd.f32 %v5641, %v5658
        %v5661 = vcombine.high %v5649, %v5649
        %v5663 = vunpack.c.l.s4 1966171168
        %v5664 = vunpack.c.0.s8 %v5663
        %v5665 = vlaneseq
        %v5666 = vshrl.u32 %v5665, 7
        %v5667 = vsub.s32 %v5664, %v5666
        %v5668 = vrot.slane %v5661, %v5667
        %5669 = vrot.lane.b32.xlu0 %v5668, 103
        %v5670 = vpop.permute.xlu0 %5669
        %v5672 = vadd.f32 %v5660, %v5670
        %v5673 = vcombine.high %v5656, %v5656
        %5674 = vrot.lane.b32.xlu0 %v5673, 98
        %v5675 = vpop.permute.xlu0 %5674
        %v5677 = vadd.f32 %v5672, %v5675
        %v5678 = vcombine.high %v5668, %v5668
        %5679 = vrot.lane.b32.xlu0 %v5678, 93
        %v5680 = vpop.permute.xlu0 %5679
        %v5682 = vadd.f32 %v5677, %v5680
        %v5685 = vunpack.c.l.s4 1966171168
        %v5686 = vunpack.c.0.s8 %v5685
        %v5687 = vlaneseq
        %v5688 = vshrl.u32 %v5687, 7
        %v5689 = vsub.s32 %v5686, %v5688
        %v5690 = vrot.slane %v5595, %v5689
        %v5692 = vunpack.c.l.s4 1966171168
        %v5693 = vunpack.c.0.s8 %v5692
        %v5694 = vlaneseq
        %v5695 = vshrl.u32 %v5694, 7
        %v5696 = vsub.s32 %v5693, %v5695
        %v5697 = vrot.slane %v5690, %v5696
        %5698 = vrot.lane.b32.xlu0 %v5697, 88
        %v5699 = vpop.permute.xlu0 %5698
        %v5701 = vadd.f32 %v5682, %v5699
        %v5702 = vcombine.high %v5690, %v5690
        %v5704 = vunpack.c.l.s4 1966171168
        %v5705 = vunpack.c.0.s8 %v5704
        %v5706 = vlaneseq
        %v5707 = vshrl.u32 %v5706, 7
        %v5708 = vsub.s32 %v5705, %v5707
        %v5709 = vrot.slane %v5702, %v5708
        %5710 = vrot.lane.b32.xlu0 %v5709, 83
        %v5711 = vpop.permute.xlu0 %5710
        %v5713 = vadd.f32 %v5701, %v5711
        %v5714 = vcombine.high %v5697, %v5697
        %5715 = vrot.lane.b32.xlu0 %v5714, 78
        %v5716 = vpop.permute.xlu0 %5715
        %v5718 = vadd.f32 %v5713, %v5716
        %v5719 = vcombine.high %v5709, %v5709
        %5720 = vrot.lane.b32.xlu0 %v5719, 73
        %v5721 = vpop.permute.xlu0 %5720
        %v5723 = vadd.f32 %v5718, %v5721
        %v5724 = vcombine.high %v5595, %v5595
        %v5726 = vunpack.c.l.s4 1966171168
        %v5727 = vunpack.c.0.s8 %v5726
        %v5728 = vlaneseq
        %v5729 = vshrl.u32 %v5728, 7
        %v5730 = vsub.s32 %v5727, %v5729
        %v5731 = vrot.slane %v5724, %v5730
        %v5733 = vunpack.c.l.s4 1966171168
        %v5734 = vunpack.c.0.s8 %v5733
        %v5735 = vlaneseq
        %v5736 = vshrl.u32 %v5735, 7
        %v5737 = vsub.s32 %v5734, %v5736
        %v5738 = vrot.slane %v5731, %v5737
        %5739 = vrot.lane.b32.xlu0 %v5738, 68
        %v5740 = vpop.permute.xlu0 %5739
        %v5742 = vadd.f32 %v5723, %v5740
        %v5743 = vcombine.high %v5731, %v5731
        %v5745 = vunpack.c.l.s4 1966171168
        %v5746 = vunpack.c.0.s8 %v5745
        %v5747 = vlaneseq
        %v5748 = vshrl.u32 %v5747, 7
        %v5749 = vsub.s32 %v5746, %v5748
        %v5750 = vrot.slane %v5743, %v5749
        %5751 = vrot.lane.b32.xlu0 %v5750, 63
        %v5752 = vpop.permute.xlu0 %5751
        %v5754 = vadd.f32 %v5742, %v5752
        %v5755 = vcombine.high %v5738, %v5738
        %5756 = vrot.lane.b32.xlu0 %v5755, 58
        %v5757 = vpop.permute.xlu0 %5756
        %v5759 = vadd.f32 %v5754, %v5757
        %v5760 = vcombine.high %v5750, %v5750
        %5761 = vrot.lane.b32.xlu0 %v5760, 53
        %v5762 = vpop.permute.xlu0 %5761
        %v5764 = vadd.f32 %v5759, %v5762
        %v5767 = vunpack.c.l.s4 1966171168
        %v5768 = vunpack.c.0.s8 %v5767
        %v5769 = vlaneseq
        %v5770 = vshrl.u32 %v5769, 7
        %v5771 = vsub.s32 %v5768, %v5770
        %v5772 = vrot.slane %v5600, %v5771
        %v5774 = vunpack.c.l.s4 1966171168
        %v5775 = vunpack.c.0.s8 %v5774
        %v5776 = vlaneseq
        %v5777 = vshrl.u32 %v5776, 7
        %v5778 = vsub.s32 %v5775, %v5777
        %v5779 = vrot.slane %v5772, %v5778
        %5780 = vrot.lane.b32.xlu0 %v5779, 48
        %v5781 = vpop.permute.xlu0 %5780
        %v5783 = vadd.f32 %v5764, %v5781
        %v5784 = vcombine.high %v5772, %v5772
        %v5786 = vunpack.c.l.s4 1966171168
        %v5787 = vunpack.c.0.s8 %v5786
        %v5788 = vlaneseq
        %v5789 = vshrl.u32 %v5788, 7
        %v5790 = vsub.s32 %v5787, %v5789
        %v5791 = vrot.slane %v5784, %v5790
        %5792 = vrot.lane.b32.xlu0 %v5791, 43
        %v5793 = vpop.permute.xlu0 %5792
        %v5795 = vadd.f32 %v5783, %v5793
        %v5796 = vcombine.high %v5779, %v5779
        %5797 = vrot.lane.b32.xlu0 %v5796, 38
        %v5798 = vpop.permute.xlu0 %5797
        %v5800 = vadd.f32 %v5795, %v5798
        %v5801 = vcombine.high %v5791, %v5791
        %5802 = vrot.lane.b32.xlu0 %v5801, 33
        %v5803 = vpop.permute.xlu0 %5802
        %v5805 = vadd.f32 %v5800, %v5803
        %v5806 = vcombine.high %v5600, %v5600
        %v5808 = vunpack.c.l.s4 1966171168
        %v5809 = vunpack.c.0.s8 %v5808
        %v5810 = vlaneseq
        %v5811 = vshrl.u32 %v5810, 7
        %v5812 = vsub.s32 %v5809, %v5811
        %v5813 = vrot.slane %v5806, %v5812
        %v5815 = vunpack.c.l.s4 1966171168
        %v5816 = vunpack.c.0.s8 %v5815
        %v5817 = vlaneseq
        %v5818 = vshrl.u32 %v5817, 7
        %v5819 = vsub.s32 %v5816, %v5818
        %v5820 = vrot.slane %v5813, %v5819
        %5821 = vrot.lane.b32.xlu0 %v5820, 28
        %v5822 = vpop.permute.xlu0 %5821
        %v5824 = vadd.f32 %v5805, %v5822
        %v5825 = vcombine.high %v5813, %v5813
        %v5827 = vunpack.c.l.s4 1966171168
        %v5828 = vunpack.c.0.s8 %v5827
        %v5829 = vlaneseq
        %v5830 = vshrl.u32 %v5829, 7
        %v5831 = vsub.s32 %v5828, %v5830
        %v5832 = vrot.slane %v5825, %v5831
        %5833 = vrot.lane.b32.xlu0 %v5832, 23
        %v5834 = vpop.permute.xlu0 %5833
        %v5836 = vadd.f32 %v5824, %v5834
        %vm5837 = vcmask 32768
        %5838 = vst.msk [vmem:[%s440] sm:$0x1] %vm5837, %v5836
        %p5839 = scmp.lt.s32.totalorder %s28, 1
        %s5840 = scalar_select %p5839, %s28, 1
        %s5841 = smul.addr %s5840, 3
        %s5842 = smul.addr %s5841, 8
        %s5843 = scalar_lea.vmem %s12, %s5842
        %s5844 = sand.u32 %s319, 1
        %s5845 = scalar_lea.sflag [#allocation9], %s5844
        %s5846 = sand.u32 %s319, 1
        %s5847 = scalar_lea.vmem [#allocation8], %s5846
        // Predicated region
        $region69: #{_lambda_.1} parent=67 // pred_check
          %p5848 = pneg %p303
        $region70: #{_lambda_.1} parent=67 // pred_check_branch
          %5850 = sbr.rel (%p5848) target = $region72
        $region71: #{_lambda_.1} parent=67 // pred_region
          _
        $region72: #{_lambda_.1} parent=67 // pred_fallthru
          _
        // Predicated region
        $region73: #{_lambda_.1} parent=67 // pred_check
          %p5851 = pneg %p329
        $region74: #{_lambda_.1} parent=67 // pred_check_branch
          %5853 = sbr.rel (%p5851) target = $region76
        $region75: #{_lambda_.1} parent=67 // pred_region
          %s5855 = ssub.s32 16, 16
          %5856 = vsyncadd %s5845, %s5855
          %s5857 = smul.addr %s28, 16
          %s5858 = scalar_lea.hbm %s13, %s5857
          %s5860 = sshll.u32 %s5847, 4
          %s5861 = int_to_ptr.vmem [resolvable:$true] %s5860
          %5863 = dma.vmem_to_hbm [thread:$0]  %s5861, 16, %s5858, %s5845
        $region76: #{_lambda_.1} parent=67 // pred_fallthru
          _
      $region68: #{_lambda_.1} parent=5 // pred_fallthru
        _
      %p5864 = scmp.le.s32.totalorder 2, %s23
      // Predicated region
      $region77: #{_lambda_.1} parent=5 // pred_check
        %p5865 = pneg %p5864
      $region78: #{_lambda_.1} parent=5 // pred_check_branch
        %5867 = sbr.rel (%p5865) target = $region80
      $region79: #{_lambda_.1} parent=5 // pred_region
        %s5868 = ssub.s32 %s23, 2
        // Predicated region
        $region81: #{_lambda_.1} parent=79 // pred_check
          %p5869 = pneg %p309
        $region82: #{_lambda_.1} parent=79 // pred_check_branch
          %5871 = sbr.rel (%p5869) target = $region84
        $region83: #{_lambda_.1} parent=79 // pred_region
          %p5872 = scmp.lt.s32.totalorder %s29, 1
          %s5873 = scalar_select %p5872, %s29, 1
          %s5874 = smul.addr %s5873, 3
          %s5875 = smul.addr %s5874, 8
          %s5876 = scalar_lea.vmem %s12, %s5875
        $region84: #{_lambda_.1} parent=79 // pred_fallthru
          _
        // Predicated region
        $region85: #{_lambda_.1} parent=79 // pred_check
          %p5877 = pneg %p335
        $region86: #{_lambda_.1} parent=79 // pred_check_branch
          %5879 = sbr.rel (%p5877) target = $region88
        $region87: #{_lambda_.1} parent=79 // pred_region
          %s5880 = sand.u32 %s320, 1
          %s5881 = scalar_lea.sflag [#allocation9], %s5880
          %s5882 = sand.u32 %s320, 1
          %s5883 = scalar_lea.vmem [#allocation8], %s5882
          %5884 = dma.done %s5881, 16
        $region88: #{_lambda_.1} parent=79 // pred_fallthru
          _
      $region80: #{_lambda_.1} parent=5 // pred_fallthru
        _
    $region6: #{_lambda_.1} parent=1 // loop_footer
      %s27 = sadd.s32 1, %s23
    $region7: #{_lambda_.1} parent=1 // loop_footer_branch
      %22 = sbr.rel target = $region3
    $region8: #{_lambda_.1} parent=1 // loop_exit
      _
    %5885 = vsyncpa [#allocation9], 1
    %s5886 = scalar_lea.sflag [#allocation9], 1
    %5887 = vsyncpa %s5886, 1

</llo_original>
